<compile_context>
chip_gen: v6e
topology: v6e:2x2x1
jax: 0.10.0
libtpu: 0.0.40
codegen_flags: <defaults>
</compile_context>

<pallas_src>
import jax
import jax.numpy as jnp
from jax import lax
from jax.experimental import pallas as pl
from jax.experimental.pallas import tpu as pltpu

N_HEADS = 4
LN_EPS = 1e-5
MASK_FILL = -1e9


def _layer_norm(x, gamma, beta):
    # single-pass: var = E[x^2] - E[x]^2 (biased, matches nn.LayerNorm)
    mean = jnp.mean(x, axis=-1, keepdims=True)
    mean_sq = jnp.mean(x * x, axis=-1, keepdims=True)
    var = mean_sq - mean * mean
    return (x - mean) * lax.rsqrt(var + LN_EPS) * gamma + beta


def decoder_block_kernel(tgt_ref, enc_ref, bias_ref,
                         ln1_g_ref, ln1_b_ref,
                         wq_ref, bq_ref, wkT_ref, bkT_ref, wv_ref, bv_ref,
                         wo_ref, bo_ref,
                         ln2_g_ref, ln2_b_ref,
                         w1_ref, b1_ref, w2_ref, b2_ref,
                         out_ref,
                         k_scratch, v_scratch):
    # grid = (B, T // tq): axis 0 ("parallel") over batch, axis 1 ("arbitrary")
    # over query tiles so the per-batch K/V projections stay cached in VMEM.
    t_idx = pl.program_id(1)
    n_heads = wq_ref.shape[0]

    # ---- K / V projections: only once per batch (new batch <=> t_idx == 0) ----
    # K stored per-head, pre-transposed (dk, S); V stored per-head (S, dk).
    @pl.when(t_idx == 0)
    def _():
        enc = enc_ref[0]                                        # (S, D) bf16
        for h in range(n_heads):                                # static unroll
            kT = lax.dot_general(wkT_ref[h], enc, (((1,), (1,)), ((), ())),
                                 preferred_element_type=jnp.float32) + bkT_ref[h]
            k_scratch[h] = kT.astype(jnp.bfloat16)              # (dk, S)
            v = (jnp.dot(enc, wv_ref[h], preferred_element_type=jnp.float32)
                 + bv_ref[h])
            v_scratch[h] = v.astype(jnp.bfloat16)               # (S, dk)

    x = tgt_ref[0]                                              # (tq, D) f32
    bias = bias_ref[0].astype(jnp.float32)                      # (tq|1, S) additive

    # ---- residual2: x + MultiHeadCrossAttention(LN1(x), enc, enc, mask) ----
    xn = _layer_norm(x, ln1_g_ref[0], ln1_b_ref[0]).astype(jnp.bfloat16)
    attn = jnp.zeros_like(x)                                    # (tq, D) f32 accum
    for h in range(n_heads):                                    # static unroll
        # 1/sqrt(dk) is folded into wq/bq in the wrapper.
        qh = (jnp.dot(xn, wq_ref[h], preferred_element_type=jnp.float32)
              + bq_ref[h]).astype(jnp.bfloat16)                 # (tq, dk)
        s = jnp.dot(qh, k_scratch[h],
                    preferred_element_type=jnp.float32) + bias  # (tq, S)
        s = s - jnp.max(s, axis=-1, keepdims=True)
        p = jnp.exp(s)
        inv = pl.reciprocal(jnp.sum(p, axis=-1, keepdims=True), approx=True)
        ctx = (jnp.dot(p.astype(jnp.bfloat16), v_scratch[h],
                       preferred_element_type=jnp.float32) * inv)  # (tq, dk)
        # per-head Wo accumulation replaces the lane-axis concat
        attn = attn + jnp.dot(ctx.astype(jnp.bfloat16), wo_ref[h],
                              preferred_element_type=jnp.float32)
    x = x + attn + bo_ref[0]                                    # residual (dropout=id)

    # ---- residual3: x + FF(LN2(x)),  FF = Linear -> ReLU -> Linear ----
    xn2 = _layer_norm(x, ln2_g_ref[0], ln2_b_ref[0]).astype(jnp.bfloat16)
    hdn = jnp.dot(xn2, w1_ref[...], preferred_element_type=jnp.float32) + b1_ref[0]
    hdn = jnp.maximum(hdn, 0.0)
    ff = jnp.dot(hdn.astype(jnp.bfloat16), w2_ref[...],
                 preferred_element_type=jnp.float32) + b2_ref[0]
    out_ref[0] = (x + ff).astype(out_ref.dtype)


def _choose_query_tile(T, max_tile=256):
    # 128-256 fills the MXU M dim on v5e; raise max_tile to 512 on v6e (128 MiB
    # VMEM) when T allows.
    if T <= max_tile:
        return T
    for cand in (512, 256, 128, 64, 32, 16, 8):
        if cand <= max_tile and T % cand == 0:
            return cand
    return T


def _vmem_limit_bytes(tq, S, D, F, bias_rows):
    f32, bf16 = 4, 2
    dbl = 2  # default double-buffering on streamed blocks
    streamed = dbl * (tq * D * f32          # tgt tile
                      + tq * D * f32        # out tile
                      + S * D * bf16        # encoder block
                      + bias_rows * S * bf16)
    weights = (4 * D * f32                  # ln1/ln2 gamma + beta
               + 4 * D * D * bf16           # wq, wk^T, wv, wo
               + 4 * D * f32                # bq, bk, bv, bo
               + 2 * D * F * bf16           # w1, w2
               + (F + D) * f32)             # b1, b2
    weights *= dbl                          # worst case: weights not single-buffered
    scratch = 2 * S * D * bf16              # K^T / V VMEM caches
    temps = f32 * (3 * tq * S + tq * F + 8 * tq * D)  # scores, ffn hidden, LN temps
    est = streamed + weights + scratch + temps + (4 << 20)
    return int(min(max(2 * est, 32 << 20), 96 << 20))


_BUFFERED_OK = None


def _single_buffered_weights_supported():
    """One-time cached probe: does this build accept pipeline_mode=pl.Buffered(1)?

    The probe compiles a trivial kernel; the real decoder kernel is never wrapped
    in try/except, so genuine lowering errors are not swallowed.
    """
    global _BUFFERED_OK
    if _BUFFERED_OK is not None:
        return _BUFFERED_OK
    if not hasattr(pl, "Buffered"):
        _BUFFERED_OK = False
        return _BUFFERED_OK

    def _probe(x_ref, o_ref):
        o_ref[...] = x_ref[...] + 1.0

    try:
        x = jnp.zeros((8, 128), jnp.float32)
        res = pl.pallas_call(
            _probe,
            out_shape=jax.ShapeDtypeStruct((8, 128), jnp.float32),
            grid=(1,),
            in_specs=[pl.BlockSpec((8, 128), lambda i: (0, 0),
                                   pipeline_mode=pl.Buffered(1))],
            out_specs=pl.BlockSpec((8, 128), lambda i: (0, 0)),
        )(x)
        jax.block_until_ready(res)
        _BUFFERED_OK = True
    except Exception:
        _BUFFERED_OK = False
    return _BUFFERED_OK


def custom_decoder_block(tgt, encoder_out, src_tgt_mask, params,
                         tgt_mask=None, tq=None):
    """Forward of CustomDecoderBlock. tgt_mask is unused (as in the PyTorch module)."""
    del tgt_mask
    B, T, D = tgt.shape
    S = encoder_out.shape[1]
    F = params["w1"].shape[-1]
    assert D % N_HEADS == 0
    dk = D // N_HEADS
    if tq is None:
        tq = _choose_query_tile(T)
    assert T % tq == 0

    # additive attention bias: 0 where attend, -1e9 where masked (bf16 stream).
    # (B, 1, S) key-padding masks keep their shape -> T/tq-fold less mask DMA.
    assert src_tgt_mask.ndim == 3
    bias = jnp.where(src_tgt_mask > 0, 0.0, MASK_FILL).astype(jnp.bfloat16)
    key_padding = bias.shape[1] == 1
    bias_rows = 1 if key_padding else tq

    enc_bf16 = encoder_out.astype(jnp.bfloat16)

    # ---- head-major weight prep (all layout work paid once, outside the kernel) ----
    p = params
    scale = float(dk) ** -0.5

    def heads_in(w):    # (D, D) -> (H, D, dk): w_h = w[:, h*dk:(h+1)*dk]
        return w.reshape(D, N_HEADS, dk).transpose(1, 0, 2)

    wq = heads_in(p["wq"] * scale).astype(jnp.bfloat16)                 # (H, D, dk)
    bq = (p["bq"] * scale).reshape(N_HEADS, 1, dk).astype(jnp.float32)  # (H, 1, dk)
    wkT = p["wk"].reshape(D, N_HEADS, dk).transpose(1, 2, 0).astype(jnp.bfloat16)  # (H, dk, D)
    bkT = p["bk"].reshape(N_HEADS, dk)[:, :, None].astype(jnp.float32)  # (H, dk, 1)
    wv = heads_in(p["wv"]).astype(jnp.bfloat16)                         # (H, D, dk)
    bv = p["bv"].reshape(N_HEADS, 1, dk).astype(jnp.float32)            # (H, 1, dk)
    wo = p["wo"].reshape(N_HEADS, dk, D).astype(jnp.bfloat16)           # (H, dk, D)
    bo = p["bo"].astype(jnp.float32)
    w1 = p["w1"].astype(jnp.bfloat16)
    b1 = p["b1"].astype(jnp.float32)
    w2 = p["w2"].astype(jnp.bfloat16)
    b2 = p["b2"].astype(jnp.float32)
    ln1_g = p["ln1_g"].astype(jnp.float32)
    ln1_b = p["ln1_b"].astype(jnp.float32)
    ln2_g = p["ln2_g"].astype(jnp.float32)
    ln2_b = p["ln2_b"].astype(jnp.float32)

    weights = (ln1_g, ln1_b, wq, bq, wkT, bkT, wv, bv, wo, bo,
               ln2_g, ln2_b, w1, b1, w2, b2)

    single_buffer = _single_buffered_weights_supported()

    def wspec(arr):
        shape = arr.shape
        zeros = (0,) * len(shape)
        if single_buffer:   # constant across the grid -> no double buffering
            return pl.BlockSpec(shape, lambda b, t: zeros,
                                pipeline_mode=pl.Buffered(1))
        return pl.BlockSpec(shape, lambda b, t: zeros)

    if key_padding:
        bias_spec = pl.BlockSpec((1, 1, S), lambda b, t: (b, 0, 0))
    else:
        bias_spec = pl.BlockSpec((1, tq, S), lambda b, t: (b, t, 0))

    in_specs = [
        pl.BlockSpec((1, tq, D), lambda b, t: (b, t, 0)),   # tgt tile
        pl.BlockSpec((1, S, D), lambda b, t: (b, 0, 0)),    # encoder_out (bf16)
        bias_spec,                                          # additive mask bias
    ] + [wspec(w) for w in weights]

    grid = (B, T // tq)

    return pl.pallas_call(
        decoder_block_kernel,
        out_shape=jax.ShapeDtypeStruct((B, T, D), tgt.dtype),
        grid=grid,
        in_specs=in_specs,
        out_specs=pl.BlockSpec((1, tq, D), lambda b, t: (b, t, 0)),
        scratch_shapes=[pltpu.VMEM((N_HEADS, dk, S), jnp.bfloat16),   # cached K^T
                        pltpu.VMEM((N_HEADS, S, dk), jnp.bfloat16)],  # cached V
        input_output_aliases={0: 0},     # output reuses the tgt buffer
        compiler_params=pltpu.CompilerParams(
            # t axis must stay "arbitrary": k/v scratch is filled at t_idx == 0.
            dimension_semantics=("parallel", "arbitrary"),
            vmem_limit_bytes=_vmem_limit_bytes(tq, S, D, F, bias_rows)),
    )(tgt, enc_bf16, bias, *weights)


def reference(tgt, enc, mask, p):
    """Pure-JAX f32 reference mirroring the PyTorch forward."""
    D = tgt.shape[-1]
    dk = D // N_HEADS
    xn = _layer_norm(tgt, p["ln1_g"][0], p["ln1_b"][0])
    q = xn @ p["wq"] + p["bq"][0]
    k = enc @ p["wk"] + p["bk"][0]
    v = enc @ p["wv"] + p["bv"][0]

    def split(a):  # (B, L, D) -> (B, H, L, dk)
        B, L, _ = a.shape
        return a.reshape(B, L, N_HEADS, dk).transpose(0, 2, 1, 3)

    qh, kh, vh = split(q), split(k), split(v)
    s = jnp.einsum("bhtd,bhsd->bhts", qh, kh) / jnp.sqrt(jnp.float32(dk))
    s = jnp.where(mask[:, None, :, :] > 0, s, MASK_FILL)
    a = jax.nn.softmax(s, axis=-1)
    ctx = jnp.einsum("bhts,bhsd->bhtd", a, vh)
    ctx = ctx.transpose(0, 2, 1, 3).reshape(tgt.shape)
    x = tgt + (ctx @ p["wo"] + p["bo"][0])

    xn2 = _layer_norm(x, p["ln2_g"][0], p["ln2_b"][0])
    ff = jnp.maximum(xn2 @ p["w1"] + p["b1"][0], 0.0) @ p["w2"] + p["b2"][0]
    return x + ff


def init_params(key, d_model, d_ff):
    ks = jax.random.split(key, 8)
    s = 0.02
    return {
        "ln1_g": jnp.ones((1, d_model), jnp.float32),
        "ln1_b": jnp.zeros((1, d_model), jnp.float32),
        "wq": s * jax.random.normal(ks[0], (d_model, d_model), jnp.float32),
        "bq": jnp.zeros((1, d_model), jnp.float32),
        "wk": s * jax.random.normal(ks[1], (d_model, d_model), jnp.float32),
        "bk": jnp.zeros((1, d_model), jnp.float32),
        "wv": s * jax.random.normal(ks[2], (d_model, d_model), jnp.float32),
        "bv": jnp.zeros((1, d_model), jnp.float32),
        "wo": s * jax.random.normal(ks[3], (d_model, d_model), jnp.float32),
        "bo": jnp.zeros((1, d_model), jnp.float32),
        "ln2_g": jnp.ones((1, d_model), jnp.float32),
        "ln2_b": jnp.zeros((1, d_model), jnp.float32),
        "w1": s * jax.random.normal(ks[4], (d_model, d_ff), jnp.float32),
        "b1": jnp.zeros((1, d_ff), jnp.float32),
        "w2": s * jax.random.normal(ks[5], (d_ff, d_model), jnp.float32),
        "b2": jnp.zeros((1, d_model), jnp.float32),
    }


if __name__ == "__main__":
    B, T, S, D, F = 2, 8, 8, 32, 64
    key = jax.random.PRNGKey(0)
    k_tgt, k_enc, k_par = jax.random.split(key, 3)

    tgt = jax.random.normal(k_tgt, (B, T, D), jnp.float32)
    enc = jax.random.normal(k_enc, (B, S, D), jnp.float32)
    params = init_params(k_par, D, F)

    # key-padding src_tgt_mask: 1 = attend, 0 = masked (pad last 2 encoder
    # positions of batch 1). Passed as (B, 1, S) -> cheap (1,1,S) bias stream.
    mask_pad = jnp.ones((B, 1, S), jnp.float32)
    mask_pad = mask_pad.at[1, :, S - 2:].set(0.0)

    ref = reference(tgt, enc, mask_pad, params)

    # path 1: (B, 1, S) key-padding mask
    out1 = jax.block_until_ready(custom_decoder_block(tgt, enc, mask_pad, params))
    assert out1.shape == (B, T, D)
    # bf16 matmul operands inside the kernel (accumulation, LN and softmax stay
    # f32) -> slightly looser tolerance vs the pure-f32 reference.
    assert jnp.allclose(out1, ref, atol=5e-3, rtol=5e-3), "mismatch (padding mask)"

    # path 2: full (B, T, S) mask (same values, exercises the general bias stream)
    mask_full = jnp.broadcast_to(mask_pad, (B, T, S))
    out2 = jax.block_until_ready(custom_decoder_block(tgt, enc, mask_full, params))
    assert jnp.allclose(out2, ref, atol=5e-3, rtol=5e-3), "mismatch (full mask)"

    print("KERNEL_OK")
</pallas_src>

<mosaic_0001>
module attributes {stable_mosaic.version = 11 : i64} {
  func.func @_probe(%arg0: i32, %arg1: memref<8x128xf32, #tpu.memory_space<vmem>>, %arg2: memref<8x128xf32, #tpu.memory_space<vmem>>) attributes {dimension_semantics = [#tpu.dimension_semantics<arbitrary>], iteration_bounds = array<i64: 1>, scalar_prefetch = 0 : i64, scratch_operands = 0 : i64, tpu.core_type = #tpu.core_type<tc>, window_params = [{pipeline_mode = #tpu.pipeline_mode<synchronous>, transform_indices = @transform_0, window_bounds = array<i64: 8, 128>}, {pipeline_mode = #tpu.pipeline_mode<synchronous>, transform_indices = @transform_1, window_bounds = array<i64: 8, 128>}]} {
    %c0 = arith.constant 0 : index
    %c0_0 = arith.constant 0 : index
    %0 = vector.load %arg1[%c0, %c0_0] : memref<8x128xf32, #tpu.memory_space<vmem>>, vector<8x128xf32>
    %cst = arith.constant 1.000000e+00 : f32
    %1 = vector.broadcast %cst : f32 to vector<8x128xf32>
    %2 = arith.addf %0, %1 : vector<8x128xf32>
    %c0_1 = arith.constant 0 : index
    %c0_2 = arith.constant 0 : index
    %3 = vector.load %arg2[%c0_1, %c0_2] : memref<8x128xf32, #tpu.memory_space<vmem>>, vector<8x128xf32>
    tpu.vector_store %arg2[%c0_1, %c0_2], %2 {strides = array<i32>} : memref<8x128xf32, #tpu.memory_space<vmem>>, vector<8x128xf32>,
    return
  }
  func.func @transform_0(%arg0: i32) -> (i32, i32) {
    %c0_i32 = arith.constant 0 : i32
    %c0_i32_0 = arith.constant 0 : i32
    %c0_i32_1 = arith.constant 0 : i32
    return %c0_i32, %c0_i32_0 : i32, i32
  }
  func.func @transform_1(%arg0: i32) -> (i32, i32) {
    %c0_i32 = arith.constant 0 : i32
    %c0_i32_0 = arith.constant 0 : i32
    %c0_i32_1 = arith.constant 0 : i32
    return %c0_i32, %c0_i32_0 : i32, i32
  }
}

module attributes {stable_mosaic.version = 11 : i64} {
  func.func @decoder_block_kernel(%arg0: i32, %arg1: i32, %arg2: memref<1x8x32xf32, #tpu.memory_space<vmem>>, %arg3: memref<1x8x32xbf16, #tpu.memory_space<vmem>>, %arg4: memref<1x1x8xbf16, #tpu.memory_space<vmem>>, %arg5: memref<1x32xf32, #tpu.memory_space<vmem>>, %arg6: memref<1x32xf32, #tpu.memory_space<vmem>>, %arg7: memref<4x32x8xbf16, #tpu.memory_space<vmem>>, %arg8: memref<4x1x8xf32, #tpu.memory_space<vmem>>, %arg9: memref<4x8x32xbf16, #tpu.memory_space<vmem>>, %arg10: memref<4x8x1xf32, #tpu.memory_space<vmem>>, %arg11: memref<4x32x8xbf16, #tpu.memory_space<vmem>>, %arg12: memref<4x1x8xf32, #tpu.memory_space<vmem>>, %arg13: memref<4x8x32xbf16, #tpu.memory_space<vmem>>, %arg14: memref<1x32xf32, #tpu.memory_space<vmem>>, %arg15: memref<1x32xf32, #tpu.memory_space<vmem>>, %arg16: memref<1x32xf32, #tpu.memory_space<vmem>>, %arg17: memref<32x64xbf16, #tpu.memory_space<vmem>>, %arg18: memref<1x64xf32, #tpu.memory_space<vmem>>, %arg19: memref<64x32xbf16, #tpu.memory_space<vmem>>, %arg20: memref<1x32xf32, #tpu.memory_space<vmem>>, %arg21: memref<1x8x32xf32, #tpu.memory_space<vmem>>, %arg22: memref<4x8x8xbf16, #tpu.memory_space<vmem>>, %arg23: memref<4x8x8xbf16, #tpu.memory_space<vmem>>) attributes {dimension_semantics = [#tpu.dimension_semantics<parallel>, #tpu.dimension_semantics<arbitrary>], iteration_bounds = array<i64: 2, 1>, scalar_prefetch = 0 : i64, scratch_operands = 2 : i64, tpu.core_type = #tpu.core_type<tc>, window_params = [{transform_indices = @transform_0, window_bounds = array<i64: 1, 8, 32>}, {transform_indices = @transform_1, window_bounds = array<i64: 1, 8, 32>}, {transform_indices = @transform_2, window_bounds = array<i64: 1, 1, 8>}, {pipeline_mode = #tpu.pipeline_mode<synchronous>, transform_indices = @transform_3, window_bounds = array<i64: 1, 32>}, {pipeline_mode = #tpu.pipeline_mode<synchronous>, transform_indices = @transform_4, window_bounds = array<i64: 1, 32>}, {pipeline_mode = #tpu.pipeline_mode<synchronous>, transform_indices = @transform_5, window_bounds = array<i64: 4, 32, 8>}, {pipeline_mode = #tpu.pipeline_mode<synchronous>, transform_indices = @transform_6, window_bounds = array<i64: 4, 1, 8>}, {pipeline_mode = #tpu.pipeline_mode<synchronous>, transform_indices = @transform_7, window_bounds = array<i64: 4, 8, 32>}, {pipeline_mode = #tpu.pipeline_mode<synchronous>, transform_indices = @transform_8, window_bounds = array<i64: 4, 8, 1>}, {pipeline_mode = #tpu.pipeline_mode<synchronous>, transform_indices = @transform_9, window_bounds = array<i64: 4, 32, 8>}, {pipeline_mode = #tpu.pipeline_mode<synchronous>, transform_indices = @transform_10, window_bounds = array<i64: 4, 1, 8>}, {pipeline_mode = #tpu.pipeline_mode<synchronous>, transform_indices = @transform_11, window_bounds = array<i64: 4, 8, 32>}, {pipeline_mode = #tpu.pipeline_mode<synchronous>, transform_indices = @transform_12, window_bounds = array<i64: 1, 32>}, {pipeline_mode = #tpu.pipeline_mode<synchronous>, transform_indices = @transform_13, window_bounds = array<i64: 1, 32>}, {pipeline_mode = #tpu.pipeline_mode<synchronous>, transform_indices = @transform_14, window_bounds = array<i64: 1, 32>}, {pipeline_mode = #tpu.pipeline_mode<synchronous>, transform_indices = @transform_15, window_bounds = array<i64: 32, 64>}, {pipeline_mode = #tpu.pipeline_mode<synchronous>, transform_indices = @transform_16, window_bounds = array<i64: 1, 64>}, {pipeline_mode = #tpu.pipeline_mode<synchronous>, transform_indices = @transform_17, window_bounds = array<i64: 64, 32>}, {pipeline_mode = #tpu.pipeline_mode<synchronous>, transform_indices = @transform_18, window_bounds = array<i64: 1, 32>}, {transform_indices = @transform_19, window_bounds = array<i64: 1, 8, 32>}]} {
    %c0_i32 = arith.constant 0 : i32
    %0 = arith.cmpi eq, %arg1, %c0_i32 : i32
    %1 = arith.extui %0 : i1 to i32
    %c0_i32_0 = arith.constant 0 : i32
    %2 = arith.cmpi ne, %1, %c0_i32_0 : i32
    scf.if %2 {
      %c0_121 = arith.constant 0 : index
      %c0_122 = arith.constant 0 : index
      %c0_123 = arith.constant 0 : index
      %222 = vector.load %arg3[%c0_121, %c0_122, %c0_123] : memref<1x8x32xbf16, #tpu.memory_space<vmem>>, vector<1x8x32xbf16>
      %223 = vector.shape_cast %222 : vector<1x8x32xbf16> to vector<8x32xbf16>
      %c0_124 = arith.constant 0 : index
      %c0_125 = arith.constant 0 : index
      %c0_126 = arith.constant 0 : index
      %224 = vector.load %arg9[%c0_124, %c0_125, %c0_126] : memref<4x8x32xbf16, #tpu.memory_space<vmem>>, vector<1x8x32xbf16>
      %225 = vector.shape_cast %224 : vector<1x8x32xbf16> to vector<8x32xbf16>
      %cst_127 = arith.constant dense<0.000000e+00> : vector<8x8xf32>
      %226 = tpu.matmul %225, %223, %cst_127 {dimension_numbers = #tpu.dot_dimension_numbers<[1], [1], [0], [0], [0, 0, 1, 0], [], []>} : vector<8x32xbf16>, vector<8x32xbf16>, vector<8x8xf32> -> vector<8x8xf32>
      %c0_128 = arith.constant 0 : index
      %c0_129 = arith.constant 0 : index
      %c0_130 = arith.constant 0 : index
      %227 = vector.load %arg10[%c0_128, %c0_129, %c0_130] : memref<4x8x1xf32, #tpu.memory_space<vmem>>, vector<1x8x1xf32>
      %228 = vector.shape_cast %227 : vector<1x8x1xf32> to vector<8x1xf32>
      %229 = vector.broadcast %228 : vector<8x1xf32> to vector<8x8xf32>
      %230 = arith.addf %226, %229 : vector<8x8xf32>
      %231 = arith.truncf %230 : vector<8x8xf32> to vector<8x8xbf16>
      %c0_131 = arith.constant 0 : index
      %c0_132 = arith.constant 0 : index
      %c0_133 = arith.constant 0 : index
      %232 = vector.load %arg22[%c0_131, %c0_132, %c0_133] : memref<4x8x8xbf16, #tpu.memory_space<vmem>>, vector<1x8x8xbf16>
      %233 = vector.shape_cast %232 : vector<1x8x8xbf16> to vector<8x8xbf16>
      %234 = vector.shape_cast %231 : vector<8x8xbf16> to vector<1x8x8xbf16>
      tpu.vector_store %arg22[%c0_131, %c0_132, %c0_133], %234 {strides = array<i32>} : memref<4x8x8xbf16, #tpu.memory_space<vmem>>, vector<1x8x8xbf16>,
      %c0_134 = arith.constant 0 : index
      %c0_135 = arith.constant 0 : index
      %c0_136 = arith.constant 0 : index
      %235 = vector.load %arg11[%c0_134, %c0_135, %c0_136] : memref<4x32x8xbf16, #tpu.memory_space<vmem>>, vector<1x32x8xbf16>
      %236 = vector.shape_cast %235 : vector<1x32x8xbf16> to vector<32x8xbf16>
      %cst_137 = arith.constant dense<0.000000e+00> : vector<8x8xf32>
      %237 = tpu.matmul %223, %236, %cst_137 {dimension_numbers = #tpu.dot_dimension_numbers<[1], [0], [0], [1], [0, 0, 1, 1], [], []>} : vector<8x32xbf16>, vector<32x8xbf16>, vector<8x8xf32> -> vector<8x8xf32>
      %c0_138 = arith.constant 0 : index
      %c0_139 = arith.constant 0 : index
      %c0_140 = arith.constant 0 : index
      %238 = vector.load %arg12[%c0_138, %c0_139, %c0_140] : memref<4x1x8xf32, #tpu.memory_space<vmem>>, vector<1x1x8xf32>
      %239 = vector.shape_cast %238 : vector<1x1x8xf32> to vector<1x8xf32>
      %240 = vector.broadcast %239 : vector<1x8xf32> to vector<8x8xf32>
      %241 = arith.addf %237, %240 : vector<8x8xf32>
      %242 = arith.truncf %241 : vector<8x8xf32> to vector<8x8xbf16>
      %c0_141 = arith.constant 0 : index
      %c0_142 = arith.constant 0 : index
      %c0_143 = arith.constant 0 : index
      %243 = vector.load %arg23[%c0_141, %c0_142, %c0_143] : memref<4x8x8xbf16, #tpu.memory_space<vmem>>, vector<1x8x8xbf16>
      %244 = vector.shape_cast %243 : vector<1x8x8xbf16> to vector<8x8xbf16>
      %245 = vector.shape_cast %242 : vector<8x8xbf16> to vector<1x8x8xbf16>
      tpu.vector_store %arg23[%c0_141, %c0_142, %c0_143], %245 {strides = array<i32>} : memref<4x8x8xbf16, #tpu.memory_space<vmem>>, vector<1x8x8xbf16>,
      %c1_144 = arith.constant 1 : index
      %c0_145 = arith.constant 0 : index
      %c0_146 = arith.constant 0 : index
      %246 = vector.load %arg9[%c1_144, %c0_145, %c0_146] : memref<4x8x32xbf16, #tpu.memory_space<vmem>>, vector<1x8x32xbf16>
      %247 = vector.shape_cast %246 : vector<1x8x32xbf16> to vector<8x32xbf16>
      %cst_147 = arith.constant dense<0.000000e+00> : vector<8x8xf32>
      %248 = tpu.matmul %247, %223, %cst_147 {dimension_numbers = #tpu.dot_dimension_numbers<[1], [1], [0], [0], [0, 0, 1, 0], [], []>} : vector<8x32xbf16>, vector<8x32xbf16>, vector<8x8xf32> -> vector<8x8xf32>
      %c1_148 = arith.constant 1 : index
      %c0_149 = arith.constant 0 : index
      %c0_150 = arith.constant 0 : index
      %249 = vector.load %arg10[%c1_148, %c0_149, %c0_150] : memref<4x8x1xf32, #tpu.memory_space<vmem>>, vector<1x8x1xf32>
      %250 = vector.shape_cast %249 : vector<1x8x1xf32> to vector<8x1xf32>
      %251 = vector.broadcast %250 : vector<8x1xf32> to vector<8x8xf32>
      %252 = arith.addf %248, %251 : vector<8x8xf32>
      %253 = arith.truncf %252 : vector<8x8xf32> to vector<8x8xbf16>
      %c1_151 = arith.constant 1 : index
      %c0_152 = arith.constant 0 : index
      %c0_153 = arith.constant 0 : index
      %254 = vector.load %arg22[%c1_151, %c0_152, %c0_153] : memref<4x8x8xbf16, #tpu.memory_space<vmem>>, vector<1x8x8xbf16>
      %255 = vector.shape_cast %254 : vector<1x8x8xbf16> to vector<8x8xbf16>
      %256 = vector.shape_cast %253 : vector<8x8xbf16> to vector<1x8x8xbf16>
      tpu.vector_store %arg22[%c1_151, %c0_152, %c0_153], %256 {strides = array<i32>} : memref<4x8x8xbf16, #tpu.memory_space<vmem>>, vector<1x8x8xbf16>,
      %c1_154 = arith.constant 1 : index
      %c0_155 = arith.constant 0 : index
      %c0_156 = arith.constant 0 : index
      %257 = vector.load %arg11[%c1_154, %c0_155, %c0_156] : memref<4x32x8xbf16, #tpu.memory_space<vmem>>, vector<1x32x8xbf16>
      %258 = vector.shape_cast %257 : vector<1x32x8xbf16> to vector<32x8xbf16>
      %cst_157 = arith.constant dense<0.000000e+00> : vector<8x8xf32>
      %259 = tpu.matmul %223, %258, %cst_157 {dimension_numbers = #tpu.dot_dimension_numbers<[1], [0], [0], [1], [0, 0, 1, 1], [], []>} : vector<8x32xbf16>, vector<32x8xbf16>, vector<8x8xf32> -> vector<8x8xf32>
      %c1_158 = arith.constant 1 : index
      %c0_159 = arith.constant 0 : index
      %c0_160 = arith.constant 0 : index
      %260 = vector.load %arg12[%c1_158, %c0_159, %c0_160] : memref<4x1x8xf32, #tpu.memory_space<vmem>>, vector<1x1x8xf32>
      %261 = vector.shape_cast %260 : vector<1x1x8xf32> to vector<1x8xf32>
      %262 = vector.broadcast %261 : vector<1x8xf32> to vector<8x8xf32>
      %263 = arith.addf %259, %262 : vector<8x8xf32>
      %264 = arith.truncf %263 : vector<8x8xf32> to vector<8x8xbf16>
      %c1_161 = arith.constant 1 : index
      %c0_162 = arith.constant 0 : index
      %c0_163 = arith.constant 0 : index
      %265 = vector.load %arg23[%c1_161, %c0_162, %c0_163] : memref<4x8x8xbf16, #tpu.memory_space<vmem>>, vector<1x8x8xbf16>
      %266 = vector.shape_cast %265 : vector<1x8x8xbf16> to vector<8x8xbf16>
      %267 = vector.shape_cast %264 : vector<8x8xbf16> to vector<1x8x8xbf16>
      tpu.vector_store %arg23[%c1_161, %c0_162, %c0_163], %267 {strides = array<i32>} : memref<4x8x8xbf16, #tpu.memory_space<vmem>>, vector<1x8x8xbf16>,
      %c2_164 = arith.constant 2 : index
      %c0_165 = arith.constant 0 : index
      %c0_166 = arith.constant 0 : index
      %268 = vector.load %arg9[%c2_164, %c0_165, %c0_166] : memref<4x8x32xbf16, #tpu.memory_space<vmem>>, vector<1x8x32xbf16>
      %269 = vector.shape_cast %268 : vector<1x8x32xbf16> to vector<8x32xbf16>
      %cst_167 = arith.constant dense<0.000000e+00> : vector<8x8xf32>
      %270 = tpu.matmul %269, %223, %cst_167 {dimension_numbers = #tpu.dot_dimension_numbers<[1], [1], [0], [0], [0, 0, 1, 0], [], []>} : vector<8x32xbf16>, vector<8x32xbf16>, vector<8x8xf32> -> vector<8x8xf32>
      %c2_168 = arith.constant 2 : index
      %c0_169 = arith.constant 0 : index
      %c0_170 = arith.constant 0 : index
      %271 = vector.load %arg10[%c2_168, %c0_169, %c0_170] : memref<4x8x1xf32, #tpu.memory_space<vmem>>, vector<1x8x1xf32>
      %272 = vector.shape_cast %271 : vector<1x8x1xf32> to vector<8x1xf32>
      %273 = vector.broadcast %272 : vector<8x1xf32> to vector<8x8xf32>
      %274 = arith.addf %270, %273 : vector<8x8xf32>
      %275 = arith.truncf %274 : vector<8x8xf32> to vector<8x8xbf16>
      %c2_171 = arith.constant 2 : index
      %c0_172 = arith.constant 0 : index
      %c0_173 = arith.constant 0 : index
      %276 = vector.load %arg22[%c2_171, %c0_172, %c0_173] : memref<4x8x8xbf16, #tpu.memory_space<vmem>>, vector<1x8x8xbf16>
      %277 = vector.shape_cast %276 : vector<1x8x8xbf16> to vector<8x8xbf16>
      %278 = vector.shape_cast %275 : vector<8x8xbf16> to vector<1x8x8xbf16>
      tpu.vector_store %arg22[%c2_171, %c0_172, %c0_173], %278 {strides = array<i32>} : memref<4x8x8xbf16, #tpu.memory_space<vmem>>, vector<1x8x8xbf16>,
      %c2_174 = arith.constant 2 : index
      %c0_175 = arith.constant 0 : index
      %c0_176 = arith.constant 0 : index
      %279 = vector.load %arg11[%c2_174, %c0_175, %c0_176] : memref<4x32x8xbf16, #tpu.memory_space<vmem>>, vector<1x32x8xbf16>
      %280 = vector.shape_cast %279 : vector<1x32x8xbf16> to vector<32x8xbf16>
      %cst_177 = arith.constant dense<0.000000e+00> : vector<8x8xf32>
      %281 = tpu.matmul %223, %280, %cst_177 {dimension_numbers = #tpu.dot_dimension_numbers<[1], [0], [0], [1], [0, 0, 1, 1], [], []>} : vector<8x32xbf16>, vector<32x8xbf16>, vector<8x8xf32> -> vector<8x8xf32>
      %c2_178 = arith.constant 2 : index
      %c0_179 = arith.constant 0 : index
      %c0_180 = arith.constant 0 : index
      %282 = vector.load %arg12[%c2_178, %c0_179, %c0_180] : memref<4x1x8xf32, #tpu.memory_space<vmem>>, vector<1x1x8xf32>
      %283 = vector.shape_cast %282 : vector<1x1x8xf32> to vector<1x8xf32>
      %284 = vector.broadcast %283 : vector<1x8xf32> to vector<8x8xf32>
      %285 = arith.addf %281, %284 : vector<8x8xf32>
      %286 = arith.truncf %285 : vector<8x8xf32> to vector<8x8xbf16>
      %c2_181 = arith.constant 2 : index
      %c0_182 = arith.constant 0 : index
      %c0_183 = arith.constant 0 : index
      %287 = vector.load %arg23[%c2_181, %c0_182, %c0_183] : memref<4x8x8xbf16, #tpu.memory_space<vmem>>, vector<1x8x8xbf16>
      %288 = vector.shape_cast %287 : vector<1x8x8xbf16> to vector<8x8xbf16>
      %289 = vector.shape_cast %286 : vector<8x8xbf16> to vector<1x8x8xbf16>
      tpu.vector_store %arg23[%c2_181, %c0_182, %c0_183], %289 {strides = array<i32>} : memref<4x8x8xbf16, #tpu.memory_space<vmem>>, vector<1x8x8xbf16>,
      %c3_184 = arith.constant 3 : index
      %c0_185 = arith.constant 0 : index
      %c0_186 = arith.constant 0 : index
      %290 = vector.load %arg9[%c3_184, %c0_185, %c0_186] : memref<4x8x32xbf16, #tpu.memory_space<vmem>>, vector<1x8x32xbf16>
      %291 = vector.shape_cast %290 : vector<1x8x32xbf16> to vector<8x32xbf16>
      %cst_187 = arith.constant dense<0.000000e+00> : vector<8x8xf32>
      %292 = tpu.matmul %291, %223, %cst_187 {dimension_numbers = #tpu.dot_dimension_numbers<[1], [1], [0], [0], [0, 0, 1, 0], [], []>} : vector<8x32xbf16>, vector<8x32xbf16>, vector<8x8xf32> -> vector<8x8xf32>
      %c3_188 = arith.constant 3 : index
      %c0_189 = arith.constant 0 : index
      %c0_190 = arith.constant 0 : index
      %293 = vector.load %arg10[%c3_188, %c0_189, %c0_190] : memref<4x8x1xf32, #tpu.memory_space<vmem>>, vector<1x8x1xf32>
      %294 = vector.shape_cast %293 : vector<1x8x1xf32> to vector<8x1xf32>
      %295 = vector.broadcast %294 : vector<8x1xf32> to vector<8x8xf32>
      %296 = arith.addf %292, %295 : vector<8x8xf32>
      %297 = arith.truncf %296 : vector<8x8xf32> to vector<8x8xbf16>
      %c3_191 = arith.constant 3 : index
      %c0_192 = arith.constant 0 : index
      %c0_193 = arith.constant 0 : index
      %298 = vector.load %arg22[%c3_191, %c0_192, %c0_193] : memref<4x8x8xbf16, #tpu.memory_space<vmem>>, vector<1x8x8xbf16>
      %299 = vector.shape_cast %298 : vector<1x8x8xbf16> to vector<8x8xbf16>
      %300 = vector.shape_cast %297 : vector<8x8xbf16> to vector<1x8x8xbf16>
      tpu.vector_store %arg22[%c3_191, %c0_192, %c0_193], %300 {strides = array<i32>} : memref<4x8x8xbf16, #tpu.memory_space<vmem>>, vector<1x8x8xbf16>,
      %c3_194 = arith.constant 3 : index
      %c0_195 = arith.constant 0 : index
      %c0_196 = arith.constant 0 : index
      %301 = vector.load %arg11[%c3_194, %c0_195, %c0_196] : memref<4x32x8xbf16, #tpu.memory_space<vmem>>, vector<1x32x8xbf16>
      %302 = vector.shape_cast %301 : vector<1x32x8xbf16> to vector<32x8xbf16>
      %cst_197 = arith.constant dense<0.000000e+00> : vector<8x8xf32>
      %303 = tpu.matmul %223, %302, %cst_197 {dimension_numbers = #tpu.dot_dimension_numbers<[1], [0], [0], [1], [0, 0, 1, 1], [], []>} : vector<8x32xbf16>, vector<32x8xbf16>, vector<8x8xf32> -> vector<8x8xf32>
      %c3_198 = arith.constant 3 : index
      %c0_199 = arith.constant 0 : index
      %c0_200 = arith.constant 0 : index
      %304 = vector.load %arg12[%c3_198, %c0_199, %c0_200] : memref<4x1x8xf32, #tpu.memory_space<vmem>>, vector<1x1x8xf32>
      %305 = vector.shape_cast %304 : vector<1x1x8xf32> to vector<1x8xf32>
      %306 = vector.broadcast %305 : vector<1x8xf32> to vector<8x8xf32>
      %307 = arith.addf %303, %306 : vector<8x8xf32>
      %308 = arith.truncf %307 : vector<8x8xf32> to vector<8x8xbf16>
      %c3_201 = arith.constant 3 : index
      %c0_202 = arith.constant 0 : index
      %c0_203 = arith.constant 0 : index
      %309 = vector.load %arg23[%c3_201, %c0_202, %c0_203] : memref<4x8x8xbf16, #tpu.memory_space<vmem>>, vector<1x8x8xbf16>
      %310 = vector.shape_cast %309 : vector<1x8x8xbf16> to vector<8x8xbf16>
      %311 = vector.shape_cast %308 : vector<8x8xbf16> to vector<1x8x8xbf16>
      tpu.vector_store %arg23[%c3_201, %c0_202, %c0_203], %311 {strides = array<i32>} : memref<4x8x8xbf16, #tpu.memory_space<vmem>>, vector<1x8x8xbf16>,
    } else {
    }
    %c0 = arith.constant 0 : index
    %c0_1 = arith.constant 0 : index
    %c0_2 = arith.constant 0 : index
    %3 = vector.load %arg2[%c0, %c0_1, %c0_2] : memref<1x8x32xf32, #tpu.memory_space<vmem>>, vector<1x8x32xf32>
    %4 = vector.shape_cast %3 : vector<1x8x32xf32> to vector<8x32xf32>
    %c0_3 = arith.constant 0 : index
    %c0_4 = arith.constant 0 : index
    %c0_5 = arith.constant 0 : index
    %5 = vector.load %arg4[%c0_3, %c0_4, %c0_5] : memref<1x1x8xbf16, #tpu.memory_space<vmem>>, vector<1x1x8xbf16>
    %6 = vector.shape_cast %5 : vector<1x1x8xbf16> to vector<1x8xbf16>
    %7 = arith.extf %6 : vector<1x8xbf16> to vector<1x8xf32>
    %c0_6 = arith.constant 0 : index
    %c0_7 = arith.constant 0 : index
    %8 = vector.load %arg5[%c0_6, %c0_7] : memref<1x32xf32, #tpu.memory_space<vmem>>, vector<1x32xf32>
    %9 = vector.shape_cast %8 : vector<1x32xf32> to vector<32xf32>
    %c0_8 = arith.constant 0 : index
    %c0_9 = arith.constant 0 : index
    %10 = vector.load %arg6[%c0_8, %c0_9] : memref<1x32xf32, #tpu.memory_space<vmem>>, vector<1x32xf32>
    %11 = vector.shape_cast %10 : vector<1x32xf32> to vector<32xf32>
    %cst = arith.constant dense<0.000000e+00> : vector<8xf32>
    %12 = vector.multi_reduction <add>, %4, %cst [1] : vector<8x32xf32> to vector<8xf32>
    %13 = vector.shape_cast %12 : vector<8xf32> to vector<8x1xf32>
    %cst_10 = arith.constant 3.200000e+01 : f32
    %14 = vector.broadcast %cst_10 : f32 to vector<8x1xf32>
    %15 = arith.divf %13, %14 : vector<8x1xf32>
    %16 = arith.mulf %4, %4 : vector<8x32xf32>
    %cst_11 = arith.constant dense<0.000000e+00> : vector<8xf32>
    %17 = vector.multi_reduction <add>, %16, %cst_11 [1] : vector<8x32xf32> to vector<8xf32>
    %18 = vector.shape_cast %17 : vector<8xf32> to vector<8x1xf32>
    %cst_12 = arith.constant 3.200000e+01 : f32
    %19 = vector.broadcast %cst_12 : f32 to vector<8x1xf32>
    %20 = arith.divf %18, %19 : vector<8x1xf32>
    %21 = arith.mulf %15, %15 : vector<8x1xf32>
    %22 = arith.subf %20, %21 : vector<8x1xf32>
    %23 = vector.broadcast %15 : vector<8x1xf32> to vector<8x32xf32>
    %24 = arith.subf %4, %23 : vector<8x32xf32>
    %cst_13 = arith.constant 9.99999974E-6 : f32
    %25 = vector.broadcast %cst_13 : f32 to vector<8x1xf32>
    %26 = arith.addf %22, %25 : vector<8x1xf32>
    %27 = math.rsqrt %26 : vector<8x1xf32>
    %28 = vector.broadcast %27 : vector<8x1xf32> to vector<8x32xf32>
    %29 = arith.mulf %24, %28 : vector<8x32xf32>
    %30 = vector.shape_cast %9 : vector<32xf32> to vector<1x32xf32>
    %31 = vector.broadcast %30 : vector<1x32xf32> to vector<8x32xf32>
    %32 = arith.mulf %29, %31 : vector<8x32xf32>
    %33 = vector.shape_cast %11 : vector<32xf32> to vector<1x32xf32>
    %34 = vector.broadcast %33 : vector<1x32xf32> to vector<8x32xf32>
    %35 = arith.addf %32, %34 : vector<8x32xf32>
    %36 = arith.truncf %35 : vector<8x32xf32> to vector<8x32xbf16>
    %cst_14 = arith.constant 0.000000e+00 : f32
    %37 = vector.broadcast %cst_14 : f32 to vector<8x32xf32>
    %c0_15 = arith.constant 0 : index
    %c0_16 = arith.constant 0 : index
    %c0_17 = arith.constant 0 : index
    %38 = vector.load %arg7[%c0_15, %c0_16, %c0_17] : memref<4x32x8xbf16, #tpu.memory_space<vmem>>, vector<1x32x8xbf16>
    %39 = vector.shape_cast %38 : vector<1x32x8xbf16> to vector<32x8xbf16>
    %cst_18 = arith.constant dense<0.000000e+00> : vector<8x8xf32>
    %40 = tpu.matmul %36, %39, %cst_18 {dimension_numbers = #tpu.dot_dimension_numbers<[1], [0], [0], [1], [0, 0, 1, 1], [], []>} : vector<8x32xbf16>, vector<32x8xbf16>, vector<8x8xf32> -> vector<8x8xf32>
    %c0_19 = arith.constant 0 : index
    %c0_20 = arith.constant 0 : index
    %c0_21 = arith.constant 0 : index
    %41 = vector.load %arg8[%c0_19, %c0_20, %c0_21] : memref<4x1x8xf32, #tpu.memory_space<vmem>>, vector<1x1x8xf32>
    %42 = vector.shape_cast %41 : vector<1x1x8xf32> to vector<1x8xf32>
    %43 = vector.broadcast %42 : vector<1x8xf32> to vector<8x8xf32>
    %44 = arith.addf %40, %43 : vector<8x8xf32>
    %45 = arith.truncf %44 : vector<8x8xf32> to vector<8x8xbf16>
    %c0_22 = arith.constant 0 : index
    %c0_23 = arith.constant 0 : index
    %c0_24 = arith.constant 0 : index
    %46 = vector.load %arg22[%c0_22, %c0_23, %c0_24] : memref<4x8x8xbf16, #tpu.memory_space<vmem>>, vector<1x8x8xbf16>
    %47 = vector.shape_cast %46 : vector<1x8x8xbf16> to vector<8x8xbf16>
    %cst_25 = arith.constant dense<0.000000e+00> : vector<8x8xf32>
    %48 = tpu.matmul %45, %47, %cst_25 {dimension_numbers = #tpu.dot_dimension_numbers<[1], [0], [0], [1], [0, 0, 1, 1], [], []>} : vector<8x8xbf16>, vector<8x8xbf16>, vector<8x8xf32> -> vector<8x8xf32>
    %49 = vector.broadcast %7 : vector<1x8xf32> to vector<8x8xf32>
    %50 = arith.addf %48, %49 : vector<8x8xf32>
    %cst_26 = arith.constant dense<0xFF800000> : vector<8xf32>
    %51 = vector.multi_reduction <maximumf>, %50, %cst_26 [1] : vector<8x8xf32> to vector<8xf32>
    %52 = vector.shape_cast %51 : vector<8xf32> to vector<8x1xf32>
    %53 = vector.broadcast %52 : vector<8x1xf32> to vector<8x8xf32>
    %54 = arith.subf %50, %53 : vector<8x8xf32>
    %55 = math.exp %54 : vector<8x8xf32>
    %cst_27 = arith.constant dense<0.000000e+00> : vector<8xf32>
    %56 = vector.multi_reduction <add>, %55, %cst_27 [1] : vector<8x8xf32> to vector<8xf32>
    %57 = vector.shape_cast %56 : vector<8xf32> to vector<8x1xf32>
    %58 = tpu.reciprocal %57 {approx = true} : vector<8x1xf32> -> vector<8x1xf32>
    %59 = arith.truncf %55 : vector<8x8xf32> to vector<8x8xbf16>
    %c0_28 = arith.constant 0 : index
    %c0_29 = arith.constant 0 : index
    %c0_30 = arith.constant 0 : index
    %60 = vector.load %arg23[%c0_28, %c0_29, %c0_30] : memref<4x8x8xbf16, #tpu.memory_space<vmem>>, vector<1x8x8xbf16>
    %61 = vector.shape_cast %60 : vector<1x8x8xbf16> to vector<8x8xbf16>
    %cst_31 = arith.constant dense<0.000000e+00> : vector<8x8xf32>
    %62 = tpu.matmul %59, %61, %cst_31 {dimension_numbers = #tpu.dot_dimension_numbers<[1], [0], [0], [1], [0, 0, 1, 1], [], []>} : vector<8x8xbf16>, vector<8x8xbf16>, vector<8x8xf32> -> vector<8x8xf32>
    %63 = vector.broadcast %58 : vector<8x1xf32> to vector<8x8xf32>
    %64 = arith.mulf %62, %63 : vector<8x8xf32>
    %65 = arith.truncf %64 : vector<8x8xf32> to vector<8x8xbf16>
    %c0_32 = arith.constant 0 : index
    %c0_33 = arith.constant 0 : index
    %c0_34 = arith.constant 0 : index
    %66 = vector.load %arg13[%c0_32, %c0_33, %c0_34] : memref<4x8x32xbf16, #tpu.memory_space<vmem>>, vector<1x8x32xbf16>
    %67 = vector.shape_cast %66 : vector<1x8x32xbf16> to vector<8x32xbf16>
    %cst_35 = arith.constant dense<0.000000e+00> : vector<8x32xf32>
    %68 = tpu.matmul %65, %67, %cst_35 {dimension_numbers = #tpu.dot_dimension_numbers<[1], [0], [0], [1], [0, 0, 1, 1], [], []>} : vector<8x8xbf16>, vector<8x32xbf16>, vector<8x32xf32> -> vector<8x32xf32>
    %69 = arith.addf %37, %68 : vector<8x32xf32>
    %c1 = arith.constant 1 : index
    %c0_36 = arith.constant 0 : index
    %c0_37 = arith.constant 0 : index
    %70 = vector.load %arg7[%c1, %c0_36, %c0_37] : memref<4x32x8xbf16, #tpu.memory_space<vmem>>, vector<1x32x8xbf16>
    %71 = vector.shape_cast %70 : vector<1x32x8xbf16> to vector<32x8xbf16>
    %cst_38 = arith.constant dense<0.000000e+00> : vector<8x8xf32>
    %72 = tpu.matmul %36, %71, %cst_38 {dimension_numbers = #tpu.dot_dimension_numbers<[1], [0], [0], [1], [0, 0, 1, 1], [], []>} : vector<8x32xbf16>, vector<32x8xbf16>, vector<8x8xf32> -> vector<8x8xf32>
    %c1_39 = arith.constant 1 : index
    %c0_40 = arith.constant 0 : index
    %c0_41 = arith.constant 0 : index
    %73 = vector.load %arg8[%c1_39, %c0_40, %c0_41] : memref<4x1x8xf32, #tpu.memory_space<vmem>>, vector<1x1x8xf32>
    %74 = vector.shape_cast %73 : vector<1x1x8xf32> to vector<1x8xf32>
    %75 = vector.broadcast %74 : vector<1x8xf32> to vector<8x8xf32>
    %76 = arith.addf %72, %75 : vector<8x8xf32>
    %77 = arith.truncf %76 : vector<8x8xf32> to vector<8x8xbf16>
    %c1_42 = arith.constant 1 : index
    %c0_43 = arith.constant 0 : index
    %c0_44 = arith.constant 0 : index
    %78 = vector.load %arg22[%c1_42, %c0_43, %c0_44] : memref<4x8x8xbf16, #tpu.memory_space<vmem>>, vector<1x8x8xbf16>
    %79 = vector.shape_cast %78 : vector<1x8x8xbf16> to vector<8x8xbf16>
    %cst_45 = arith.constant dense<0.000000e+00> : vector<8x8xf32>
    %80 = tpu.matmul %77, %79, %cst_45 {dimension_numbers = #tpu.dot_dimension_numbers<[1], [0], [0], [1], [0, 0, 1, 1], [], []>} : vector<8x8xbf16>, vector<8x8xbf16>, vector<8x8xf32> -> vector<8x8xf32>
    %81 = vector.broadcast %7 : vector<1x8xf32> to vector<8x8xf32>
    %82 = arith.addf %80, %81 : vector<8x8xf32>
    %cst_46 = arith.constant dense<0xFF800000> : vector<8xf32>
    %83 = vector.multi_reduction <maximumf>, %82, %cst_46 [1] : vector<8x8xf32> to vector<8xf32>
    %84 = vector.shape_cast %83 : vector<8xf32> to vector<8x1xf32>
    %85 = vector.broadcast %84 : vector<8x1xf32> to vector<8x8xf32>
    %86 = arith.subf %82, %85 : vector<8x8xf32>
    %87 = math.exp %86 : vector<8x8xf32>
    %cst_47 = arith.constant dense<0.000000e+00> : vector<8xf32>
    %88 = vector.multi_reduction <add>, %87, %cst_47 [1] : vector<8x8xf32> to vector<8xf32>
    %89 = vector.shape_cast %88 : vector<8xf32> to vector<8x1xf32>
    %90 = tpu.reciprocal %89 {approx = true} : vector<8x1xf32> -> vector<8x1xf32>
    %91 = arith.truncf %87 : vector<8x8xf32> to vector<8x8xbf16>
    %c1_48 = arith.constant 1 : index
    %c0_49 = arith.constant 0 : index
    %c0_50 = arith.constant 0 : index
    %92 = vector.load %arg23[%c1_48, %c0_49, %c0_50] : memref<4x8x8xbf16, #tpu.memory_space<vmem>>, vector<1x8x8xbf16>
    %93 = vector.shape_cast %92 : vector<1x8x8xbf16> to vector<8x8xbf16>
    %cst_51 = arith.constant dense<0.000000e+00> : vector<8x8xf32>
    %94 = tpu.matmul %91, %93, %cst_51 {dimension_numbers = #tpu.dot_dimension_numbers<[1], [0], [0], [1], [0, 0, 1, 1], [], []>} : vector<8x8xbf16>, vector<8x8xbf16>, vector<8x8xf32> -> vector<8x8xf32>
    %95 = vector.broadcast %90 : vector<8x1xf32> to vector<8x8xf32>
    %96 = arith.mulf %94, %95 : vector<8x8xf32>
    %97 = arith.truncf %96 : vector<8x8xf32> to vector<8x8xbf16>
    %c1_52 = arith.constant 1 : index
    %c0_53 = arith.constant 0 : index
    %c0_54 = arith.constant 0 : index
    %98 = vector.load %arg13[%c1_52, %c0_53, %c0_54] : memref<4x8x32xbf16, #tpu.memory_space<vmem>>, vector<1x8x32xbf16>
    %99 = vector.shape_cast %98 : vector<1x8x32xbf16> to vector<8x32xbf16>
    %cst_55 = arith.constant dense<0.000000e+00> : vector<8x32xf32>
    %100 = tpu.matmul %97, %99, %cst_55 {dimension_numbers = #tpu.dot_dimension_numbers<[1], [0], [0], [1], [0, 0, 1, 1], [], []>} : vector<8x8xbf16>, vector<8x32xbf16>, vector<8x32xf32> -> vector<8x32xf32>
    %101 = arith.addf %69, %100 : vector<8x32xf32>
    %c2 = arith.constant 2 : index
    %c0_56 = arith.constant 0 : index
    %c0_57 = arith.constant 0 : index
    %102 = vector.load %arg7[%c2, %c0_56, %c0_57] : memref<4x32x8xbf16, #tpu.memory_space<vmem>>, vector<1x32x8xbf16>
    %103 = vector.shape_cast %102 : vector<1x32x8xbf16> to vector<32x8xbf16>
    %cst_58 = arith.constant dense<0.000000e+00> : vector<8x8xf32>
    %104 = tpu.matmul %36, %103, %cst_58 {dimension_numbers = #tpu.dot_dimension_numbers<[1], [0], [0], [1], [0, 0, 1, 1], [], []>} : vector<8x32xbf16>, vector<32x8xbf16>, vector<8x8xf32> -> vector<8x8xf32>
    %c2_59 = arith.constant 2 : index
    %c0_60 = arith.constant 0 : index
    %c0_61 = arith.constant 0 : index
    %105 = vector.load %arg8[%c2_59, %c0_60, %c0_61] : memref<4x1x8xf32, #tpu.memory_space<vmem>>, vector<1x1x8xf32>
    %106 = vector.shape_cast %105 : vector<1x1x8xf32> to vector<1x8xf32>
    %107 = vector.broadcast %106 : vector<1x8xf32> to vector<8x8xf32>
    %108 = arith.addf %104, %107 : vector<8x8xf32>
    %109 = arith.truncf %108 : vector<8x8xf32> to vector<8x8xbf16>
    %c2_62 = arith.constant 2 : index
    %c0_63 = arith.constant 0 : index
    %c0_64 = arith.constant 0 : index
    %110 = vector.load %arg22[%c2_62, %c0_63, %c0_64] : memref<4x8x8xbf16, #tpu.memory_space<vmem>>, vector<1x8x8xbf16>
    %111 = vector.shape_cast %110 : vector<1x8x8xbf16> to vector<8x8xbf16>
    %cst_65 = arith.constant dense<0.000000e+00> : vector<8x8xf32>
    %112 = tpu.matmul %109, %111, %cst_65 {dimension_numbers = #tpu.dot_dimension_numbers<[1], [0], [0], [1], [0, 0, 1, 1], [], []>} : vector<8x8xbf16>, vector<8x8xbf16>, vector<8x8xf32> -> vector<8x8xf32>
    %113 = vector.broadcast %7 : vector<1x8xf32> to vector<8x8xf32>
    %114 = arith.addf %112, %113 : vector<8x8xf32>
    %cst_66 = arith.constant dense<0xFF800000> : vector<8xf32>
    %115 = vector.multi_reduction <maximumf>, %114, %cst_66 [1] : vector<8x8xf32> to vector<8xf32>
    %116 = vector.shape_cast %115 : vector<8xf32> to vector<8x1xf32>
    %117 = vector.broadcast %116 : vector<8x1xf32> to vector<8x8xf32>
    %118 = arith.subf %114, %117 : vector<8x8xf32>
    %119 = math.exp %118 : vector<8x8xf32>
    %cst_67 = arith.constant dense<0.000000e+00> : vector<8xf32>
    %120 = vector.multi_reduction <add>, %119, %cst_67 [1] : vector<8x8xf32> to vector<8xf32>
    %121 = vector.shape_cast %120 : vector<8xf32> to vector<8x1xf32>
    %122 = tpu.reciprocal %121 {approx = true} : vector<8x1xf32> -> vector<8x1xf32>
    %123 = arith.truncf %119 : vector<8x8xf32> to vector<8x8xbf16>
    %c2_68 = arith.constant 2 : index
    %c0_69 = arith.constant 0 : index
    %c0_70 = arith.constant 0 : index
    %124 = vector.load %arg23[%c2_68, %c0_69, %c0_70] : memref<4x8x8xbf16, #tpu.memory_space<vmem>>, vector<1x8x8xbf16>
    %125 = vector.shape_cast %124 : vector<1x8x8xbf16> to vector<8x8xbf16>
    %cst_71 = arith.constant dense<0.000000e+00> : vector<8x8xf32>
    %126 = tpu.matmul %123, %125, %cst_71 {dimension_numbers = #tpu.dot_dimension_numbers<[1], [0], [0], [1], [0, 0, 1, 1], [], []>} : vector<8x8xbf16>, vector<8x8xbf16>, vector<8x8xf32> -> vector<8x8xf32>
    %127 = vector.broadcast %122 : vector<8x1xf32> to vector<8x8xf32>
    %128 = arith.mulf %126, %127 : vector<8x8xf32>
    %129 = arith.truncf %128 : vector<8x8xf32> to vector<8x8xbf16>
    %c2_72 = arith.constant 2 : index
    %c0_73 = arith.constant 0 : index
    %c0_74 = arith.constant 0 : index
    %130 = vector.load %arg13[%c2_72, %c0_73, %c0_74] : memref<4x8x32xbf16, #tpu.memory_space<vmem>>, vector<1x8x32xbf16>
    %131 = vector.shape_cast %130 : vector<1x8x32xbf16> to vector<8x32xbf16>
    %cst_75 = arith.constant dense<0.000000e+00> : vector<8x32xf32>
    %132 = tpu.matmul %129, %131, %cst_75 {dimension_numbers = #tpu.dot_dimension_numbers<[1], [0], [0], [1], [0, 0, 1, 1], [], []>} : vector<8x8xbf16>, vector<8x32xbf16>, vector<8x32xf32> -> vector<8x32xf32>
    %133 = arith.addf %101, %132 : vector<8x32xf32>
    %c3 = arith.constant 3 : index
    %c0_76 = arith.constant 0 : index
    %c0_77 = arith.constant 0 : index
    %134 = vector.load %arg7[%c3, %c0_76, %c0_77] : memref<4x32x8xbf16, #tpu.memory_space<vmem>>, vector<1x32x8xbf16>
    %135 = vector.shape_cast %134 : vector<1x32x8xbf16> to vector<32x8xbf16>
    %cst_78 = arith.constant dense<0.000000e+00> : vector<8x8xf32>
    %136 = tpu.matmul %36, %135, %cst_78 {dimension_numbers = #tpu.dot_dimension_numbers<[1], [0], [0], [1], [0, 0, 1, 1], [], []>} : vector<8x32xbf16>, vector<32x8xbf16>, vector<8x8xf32> -> vector<8x8xf32>
    %c3_79 = arith.constant 3 : index
    %c0_80 = arith.constant 0 : index
    %c0_81 = arith.constant 0 : index
    %137 = vector.load %arg8[%c3_79, %c0_80, %c0_81] : memref<4x1x8xf32, #tpu.memory_space<vmem>>, vector<1x1x8xf32>
    %138 = vector.shape_cast %137 : vector<1x1x8xf32> to vector<1x8xf32>
    %139 = vector.broadcast %138 : vector<1x8xf32> to vector<8x8xf32>
    %140 = arith.addf %136, %139 : vector<8x8xf32>
    %141 = arith.truncf %140 : vector<8x8xf32> to vector<8x8xbf16>
    %c3_82 = arith.constant 3 : index
    %c0_83 = arith.constant 0 : index
    %c0_84 = arith.constant 0 : index
    %142 = vector.load %arg22[%c3_82, %c0_83, %c0_84] : memref<4x8x8xbf16, #tpu.memory_space<vmem>>, vector<1x8x8xbf16>
    %143 = vector.shape_cast %142 : vector<1x8x8xbf16> to vector<8x8xbf16>
    %cst_85 = arith.constant dense<0.000000e+00> : vector<8x8xf32>
    %144 = tpu.matmul %141, %143, %cst_85 {dimension_numbers = #tpu.dot_dimension_numbers<[1], [0], [0], [1], [0, 0, 1, 1], [], []>} : vector<8x8xbf16>, vector<8x8xbf16>, vector<8x8xf32> -> vector<8x8xf32>
    %145 = vector.broadcast %7 : vector<1x8xf32> to vector<8x8xf32>
    %146 = arith.addf %144, %145 : vector<8x8xf32>
    %cst_86 = arith.constant dense<0xFF800000> : vector<8xf32>
    %147 = vector.multi_reduction <maximumf>, %146, %cst_86 [1] : vector<8x8xf32> to vector<8xf32>
    %148 = vector.shape_cast %147 : vector<8xf32> to vector<8x1xf32>
    %149 = vector.broadcast %148 : vector<8x1xf32> to vector<8x8xf32>
    %150 = arith.subf %146, %149 : vector<8x8xf32>
    %151 = math.exp %150 : vector<8x8xf32>
    %cst_87 = arith.constant dense<0.000000e+00> : vector<8xf32>
    %152 = vector.multi_reduction <add>, %151, %cst_87 [1] : vector<8x8xf32> to vector<8xf32>
    %153 = vector.shape_cast %152 : vector<8xf32> to vector<8x1xf32>
    %154 = tpu.reciprocal %153 {approx = true} : vector<8x1xf32> -> vector<8x1xf32>
    %155 = arith.truncf %151 : vector<8x8xf32> to vector<8x8xbf16>
    %c3_88 = arith.constant 3 : index
    %c0_89 = arith.constant 0 : index
    %c0_90 = arith.constant 0 : index
    %156 = vector.load %arg23[%c3_88, %c0_89, %c0_90] : memref<4x8x8xbf16, #tpu.memory_space<vmem>>, vector<1x8x8xbf16>
    %157 = vector.shape_cast %156 : vector<1x8x8xbf16> to vector<8x8xbf16>
    %cst_91 = arith.constant dense<0.000000e+00> : vector<8x8xf32>
    %158 = tpu.matmul %155, %157, %cst_91 {dimension_numbers = #tpu.dot_dimension_numbers<[1], [0], [0], [1], [0, 0, 1, 1], [], []>} : vector<8x8xbf16>, vector<8x8xbf16>, vector<8x8xf32> -> vector<8x8xf32>
    %159 = vector.broadcast %154 : vector<8x1xf32> to vector<8x8xf32>
    %160 = arith.mulf %158, %159 : vector<8x8xf32>
    %161 = arith.truncf %160 : vector<8x8xf32> to vector<8x8xbf16>
    %c3_92 = arith.constant 3 : index
    %c0_93 = arith.constant 0 : index
    %c0_94 = arith.constant 0 : index
    %162 = vector.load %arg13[%c3_92, %c0_93, %c0_94] : memref<4x8x32xbf16, #tpu.memory_space<vmem>>, vector<1x8x32xbf16>
    %163 = vector.shape_cast %162 : vector<1x8x32xbf16> to vector<8x32xbf16>
    %cst_95 = arith.constant dense<0.000000e+00> : vector<8x32xf32>
    %164 = tpu.matmul %161, %163, %cst_95 {dimension_numbers = #tpu.dot_dimension_numbers<[1], [0], [0], [1], [0, 0, 1, 1], [], []>} : vector<8x8xbf16>, vector<8x32xbf16>, vector<8x32xf32> -> vector<8x32xf32>
    %165 = arith.addf %133, %164 : vector<8x32xf32>
    %166 = arith.addf %4, %165 : vector<8x32xf32>
    %c0_96 = arith.constant 0 : index
    %c0_97 = arith.constant 0 : index
    %167 = vector.load %arg14[%c0_96, %c0_97] : memref<1x32xf32, #tpu.memory_space<vmem>>, vector<1x32xf32>
    %168 = vector.shape_cast %167 : vector<1x32xf32> to vector<32xf32>
    %169 = vector.shape_cast %168 : vector<32xf32> to vector<1x32xf32>
    %170 = vector.broadcast %169 : vector<1x32xf32> to vector<8x32xf32>
    %171 = arith.addf %166, %170 : vector<8x32xf32>
    %c0_98 = arith.constant 0 : index
    %c0_99 = arith.constant 0 : index
    %172 = vector.load %arg15[%c0_98, %c0_99] : memref<1x32xf32, #tpu.memory_space<vmem>>, vector<1x32xf32>
    %173 = vector.shape_cast %172 : vector<1x32xf32> to vector<32xf32>
    %c0_100 = arith.constant 0 : index
    %c0_101 = arith.constant 0 : index
    %174 = vector.load %arg16[%c0_100, %c0_101] : memref<1x32xf32, #tpu.memory_space<vmem>>, vector<1x32xf32>
    %175 = vector.shape_cast %174 : vector<1x32xf32> to vector<32xf32>
    %cst_102 = arith.constant dense<0.000000e+00> : vector<8xf32>
    %176 = vector.multi_reduction <add>, %171, %cst_102 [1] : vector<8x32xf32> to vector<8xf32>
    %177 = vector.shape_cast %176 : vector<8xf32> to vector<8x1xf32>
    %cst_103 = arith.constant 3.200000e+01 : f32
    %178 = vector.broadcast %cst_103 : f32 to vector<8x1xf32>
    %179 = arith.divf %177, %178 : vector<8x1xf32>
    %180 = arith.mulf %171, %171 : vector<8x32xf32>
    %cst_104 = arith.constant dense<0.000000e+00> : vector<8xf32>
    %181 = vector.multi_reduction <add>, %180, %cst_104 [1] : vector<8x32xf32> to vector<8xf32>
    %182 = vector.shape_cast %181 : vector<8xf32> to vector<8x1xf32>
    %cst_105 = arith.constant 3.200000e+01 : f32
    %183 = vector.broadcast %cst_105 : f32 to vector<8x1xf32>
    %184 = arith.divf %182, %183 : vector<8x1xf32>
    %185 = arith.mulf %179, %179 : vector<8x1xf32>
    %186 = arith.subf %184, %185 : vector<8x1xf32>
    %187 = vector.broadcast %179 : vector<8x1xf32> to vector<8x32xf32>
    %188 = arith.subf %171, %187 : vector<8x32xf32>
    %cst_106 = arith.constant 9.99999974E-6 : f32
    %189 = vector.broadcast %cst_106 : f32 to vector<8x1xf32>
    %190 = arith.addf %186, %189 : vector<8x1xf32>
    %191 = math.rsqrt %190 : vector<8x1xf32>
    %192 = vector.broadcast %191 : vector<8x1xf32> to vector<8x32xf32>
    %193 = arith.mulf %188, %192 : vector<8x32xf32>
    %194 = vector.shape_cast %173 : vector<32xf32> to vector<1x32xf32>
    %195 = vector.broadcast %194 : vector<1x32xf32> to vector<8x32xf32>
    %196 = arith.mulf %193, %195 : vector<8x32xf32>
    %197 = vector.shape_cast %175 : vector<32xf32> to vector<1x32xf32>
    %198 = vector.broadcast %197 : vector<1x32xf32> to vector<8x32xf32>
    %199 = arith.addf %196, %198 : vector<8x32xf32>
    %200 = arith.truncf %199 : vector<8x32xf32> to vector<8x32xbf16>
    %c0_107 = arith.constant 0 : index
    %c0_108 = arith.constant 0 : index
    %201 = vector.load %arg17[%c0_107, %c0_108] : memref<32x64xbf16, #tpu.memory_space<vmem>>, vector<32x64xbf16>
    %cst_109 = arith.constant dense<0.000000e+00> : vector<8x64xf32>
    %202 = tpu.matmul %200, %201, %cst_109 {dimension_numbers = #tpu.dot_dimension_numbers<[1], [0], [0], [1], [0, 0, 1, 1], [], []>} : vector<8x32xbf16>, vector<32x64xbf16>, vector<8x64xf32> -> vector<8x64xf32>
    %c0_110 = arith.constant 0 : index
    %c0_111 = arith.constant 0 : index
    %203 = vector.load %arg18[%c0_110, %c0_111] : memref<1x64xf32, #tpu.memory_space<vmem>>, vector<1x64xf32>
    %204 = vector.shape_cast %203 : vector<1x64xf32> to vector<64xf32>
    %205 = vector.shape_cast %204 : vector<64xf32> to vector<1x64xf32>
    %206 = vector.broadcast %205 : vector<1x64xf32> to vector<8x64xf32>
    %207 = arith.addf %202, %206 : vector<8x64xf32>
    %cst_112 = arith.constant 0.000000e+00 : f32
    %208 = vector.broadcast %cst_112 : f32 to vector<8x64xf32>
    %209 = arith.maximumf %207, %208 : vector<8x64xf32>
    %210 = arith.truncf %209 : vector<8x64xf32> to vector<8x64xbf16>
    %c0_113 = arith.constant 0 : index
    %c0_114 = arith.constant 0 : index
    %211 = vector.load %arg19[%c0_113, %c0_114] : memref<64x32xbf16, #tpu.memory_space<vmem>>, vector<64x32xbf16>
    %cst_115 = arith.constant dense<0.000000e+00> : vector<8x32xf32>
    %212 = tpu.matmul %210, %211, %cst_115 {dimension_numbers = #tpu.dot_dimension_numbers<[1], [0], [0], [1], [0, 0, 1, 1], [], []>} : vector<8x64xbf16>, vector<64x32xbf16>, vector<8x32xf32> -> vector<8x32xf32>
    %c0_116 = arith.constant 0 : index
    %c0_117 = arith.constant 0 : index
    %213 = vector.load %arg20[%c0_116, %c0_117] : memref<1x32xf32, #tpu.memory_space<vmem>>, vector<1x32xf32>
    %214 = vector.shape_cast %213 : vector<1x32xf32> to vector<32xf32>
    %215 = vector.shape_cast %214 : vector<32xf32> to vector<1x32xf32>
    %216 = vector.broadcast %215 : vector<1x32xf32> to vector<8x32xf32>
    %217 = arith.addf %212, %216 : vector<8x32xf32>
    %218 = arith.addf %171, %217 : vector<8x32xf32>
    %c0_118 = arith.constant 0 : index
    %c0_119 = arith.constant 0 : index
    %c0_120 = arith.constant 0 : index
    %219 = vector.load %arg21[%c0_118, %c0_119, %c0_120] : memref<1x8x32xf32, #tpu.memory_space<vmem>>, vector<1x8x32xf32>
    %220 = vector.shape_cast %219 : vector<1x8x32xf32> to vector<8x32xf32>
    %221 = vector.shape_cast %218 : vector<8x32xf32> to vector<1x8x32xf32>
    tpu.vector_store %arg21[%c0_118, %c0_119, %c0_120], %221 {strides = array<i32>} : memref<1x8x32xf32, #tpu.memory_space<vmem>>, vector<1x8x32xf32>,
    return
  }
  func.func @transform_0(%arg0: i32, %arg1: i32) -> (i32, i32, i32) {
    %c0_i32 = arith.constant 0 : i32
    %c0_i32_0 = arith.constant 0 : i32
    return %arg0, %arg1, %c0_i32 : i32, i32, i32
  }
  func.func @transform_1(%arg0: i32, %arg1: i32) -> (i32, i32, i32) {
    %c0_i32 = arith.constant 0 : i32
    %c0_i32_0 = arith.constant 0 : i32
    %c0_i32_1 = arith.constant 0 : i32
    return %arg0, %c0_i32, %c0_i32_0 : i32, i32, i32
  }
  func.func @transform_2(%arg0: i32, %arg1: i32) -> (i32, i32, i32) {
    %c0_i32 = arith.constant 0 : i32
    %c0_i32_0 = arith.constant 0 : i32
    %c0_i32_1 = arith.constant 0 : i32
    return %arg0, %c0_i32, %c0_i32_0 : i32, i32, i32
  }
  func.func @transform_3(%arg0: i32, %arg1: i32) -> (i32, i32) {
    %c0_i32 = arith.constant 0 : i32
    %c0_i32_0 = arith.constant 0 : i32
    %c0_i32_1 = arith.constant 0 : i32
    return %c0_i32, %c0_i32_0 : i32, i32
  }
  func.func @transform_4(%arg0: i32, %arg1: i32) -> (i32, i32) {
    %c0_i32 = arith.constant 0 : i32
    %c0_i32_0 = arith.constant 0 : i32
    %c0_i32_1 = arith.constant 0 : i32
    return %c0_i32, %c0_i32_0 : i32, i32
  }
  func.func @transform_5(%arg0: i32, %arg1: i32) -> (i32, i32, i32) {
    %c0_i32 = arith.constant 0 : i32
    %c0_i32_0 = arith.constant 0 : i32
    %c0_i32_1 = arith.constant 0 : i32
    %c0_i32_2 = arith.constant 0 : i32
    return %c0_i32, %c0_i32_0, %c0_i32_1 : i32, i32, i32
  }
  func.func @transform_6(%arg0: i32, %arg1: i32) -> (i32, i32, i32) {
    %c0_i32 = arith.constant 0 : i32
    %c0_i32_0 = arith.constant 0 : i32
    %c0_i32_1 = arith.constant 0 : i32
    %c0_i32_2 = arith.constant 0 : i32
    return %c0_i32, %c0_i32_0, %c0_i32_1 : i32, i32, i32
  }
  func.func @transform_7(%arg0: i32, %arg1: i32) -> (i32, i32, i32) {
    %c0_i32 = arith.constant 0 : i32
    %c0_i32_0 = arith.constant 0 : i32
    %c0_i32_1 = arith.constant 0 : i32
    %c0_i32_2 = arith.constant 0 : i32
    return %c0_i32, %c0_i32_0, %c0_i32_1 : i32, i32, i32
  }
  func.func @transform_8(%arg0: i32, %arg1: i32) -> (i32, i32, i32) {
    %c0_i32 = arith.constant 0 : i32
    %c0_i32_0 = arith.constant 0 : i32
    %c0_i32_1 = arith.constant 0 : i32
    %c0_i32_2 = arith.constant 0 : i32
    return %c0_i32, %c0_i32_0, %c0_i32_1 : i32, i32, i32
  }
  func.func @transform_9(%arg0: i32, %arg1: i32) -> (i32, i32, i32) {
    %c0_i32 = arith.constant 0 : i32
    %c0_i32_0 = arith.constant 0 : i32
    %c0_i32_1 = arith.constant 0 : i32
    %c0_i32_2 = arith.constant 0 : i32
    return %c0_i32, %c0_i32_0, %c0_i32_1 : i32, i32, i32
  }
  func.func @transform_10(%arg0: i32, %arg1: i32) -> (i32, i32, i32) {
    %c0_i32 = arith.constant 0 : i32
    %c0_i32_0 = arith.constant 0 : i32
    %c0_i32_1 = arith.constant 0 : i32
    %c0_i32_2 = arith.constant 0 : i32
    return %c0_i32, %c0_i32_0, %c0_i32_1 : i32, i32, i32
  }
  func.func @transform_11(%arg0: i32, %arg1: i32) -> (i32, i32, i32) {
    %c0_i32 = arith.constant 0 : i32
    %c0_i32_0 = arith.constant 0 : i32
    %c0_i32_1 = arith.constant 0 : i32
    %c0_i32_2 = arith.constant 0 : i32
    return %c0_i32, %c0_i32_0, %c0_i32_1 : i32, i32, i32
  }
  func.func @transform_12(%arg0: i32, %arg1: i32) -> (i32, i32) {
    %c0_i32 = arith.constant 0 : i32
    %c0_i32_0 = arith.constant 0 : i32
    %c0_i32_1 = arith.constant 0 : i32
    return %c0_i32, %c0_i32_0 : i32, i32
  }
  func.func @transform_13(%arg0: i32, %arg1: i32) -> (i32, i32) {
    %c0_i32 = arith.constant 0 : i32
    %c0_i32_0 = arith.constant 0 : i32
    %c0_i32_1 = arith.constant 0 : i32
    return %c0_i32, %c0_i32_0 : i32, i32
  }
  func.func @transform_14(%arg0: i32, %arg1: i32) -> (i32, i32) {
    %c0_i32 = arith.constant 0 : i32
    %c0_i32_0 = arith.constant 0 : i32
    %c0_i32_1 = arith.constant 0 : i32
    return %c0_i32, %c0_i32_0 : i32, i32
  }
  func.func @transform_15(%arg0: i32, %arg1: i32) -> (i32, i32) {
    %c0_i32 = arith.constant 0 : i32
    %c0_i32_0 = arith.constant 0 : i32
    %c0_i32_1 = arith.constant 0 : i32
    return %c0_i32, %c0_i32_0 : i32, i32
  }
  func.func @transform_16(%arg0: i32, %arg1: i32) -> (i32, i32) {
    %c0_i32 = arith.constant 0 : i32
    %c0_i32_0 = arith.constant 0 : i32
    %c0_i32_1 = arith.constant 0 : i32
    return %c0_i32, %c0_i32_0 : i32, i32
  }
  func.func @transform_17(%arg0: i32, %arg1: i32) -> (i32, i32) {
    %c0_i32 = arith.constant 0 : i32
    %c0_i32_0 = arith.constant 0 : i32
    %c0_i32_1 = arith.constant 0 : i32
    return %c0_i32, %c0_i32_0 : i32, i32
  }
  func.func @transform_18(%arg0: i32, %arg1: i32) -> (i32, i32) {
    %c0_i32 = arith.constant 0 : i32
    %c0_i32_0 = arith.constant 0 : i32
    %c0_i32_1 = arith.constant 0 : i32
    return %c0_i32, %c0_i32_0 : i32, i32
  }
  func.func @transform_19(%arg0: i32, %arg1: i32) -> (i32, i32, i32) {
    %c0_i32 = arith.constant 0 : i32
    %c0_i32_0 = arith.constant 0 : i32
    return %arg0, %arg1, %c0_i32 : i32, i32, i32
  }
}

</mosaic_0001>

<llo_original>
// kernel: tpu_custom_call.1
$region0: #{tpu_custom_call.1}
  #allocation0 [shape = 'u32[]', space=smem, size = 0x4, offset = 0x4, fixed_abs, tag = 'smem constant byte address 0x4 - core index']
  #allocation1 [shape = 'u32[144,128]{1,0:T(1,128)}', space=vmem, size = 0x12000, scoped, tag = 'internal scratch']
  %s0 = inlined_call_operand.hbm [shape: f32[8,128], index: 0, kind: input, shape index: {}]
  %s1 = inlined_call_operand.hbm [shape: f32[8,128], index: 1, kind: output, shape index: {}]
  %s2 = sld [smem:[#allocation0]]
  $region18: #{tpu_custom_call.1} parent=0
    _
  %s4 = ssub.s32 1, %s2
  %s5 = scalar_select 0, %s4, %s2
  $region1: #{tpu_custom_call.1} parent=0
    #allocation2 [shape = 'u8[4096]{0}', space=vmem, size = 0x1000, scoped, tag = 'input window, operand 0, single buffered']
    #allocation3 [shape = 's32[1]{0}', space=sflag, size = 0x4, scoped, tag = 'scoped memory for tpu_custom_call.1']
    #allocation4 [shape = 's32[1]{0}', space=sflag, size = 0x4, scoped, tag = 'scoped memory for tpu_custom_call.1']
    #allocation5 [shape = 'u8[4096]{0}', space=vmem, size = 0x1000, scoped, tag = 'output window, operand 0, single buffered']
    %6 = vsyncpa [#allocation3], 0
    %7 = vsyncpa [#allocation4], 0
    // Predicated region
    $region2: #{tpu_custom_call.1} parent=1 // pred_check
      _
    $region3: #{tpu_custom_call.1} parent=1 // pred_check_branch
      %9 = sbr.rel (0) target = $region5
    $region4: #{tpu_custom_call.1} parent=1 // pred_region
      %s11 = ssub.s32 128, 128
      %12 = vsyncadd [#allocation3], %s11
      %s14 = sshll.u32 [#allocation2], 4
      %s15 = int_to_ptr.vmem [resolvable:$true] %s14
      %17 = dma.hbm_to_vmem [thread:$0]  %s0, 128, %s15, [#allocation3]
    $region5: #{tpu_custom_call.1} parent=1 // pred_fallthru
      _
    // Predicated region
    $region6: #{tpu_custom_call.1} parent=1 // pred_check
      _
    $region7: #{tpu_custom_call.1} parent=1 // pred_check_branch
      %19 = sbr.rel (0) target = $region9
    $region8: #{tpu_custom_call.1} parent=1 // pred_region
      %20 = dma.done [#allocation3], 128
    $region9: #{tpu_custom_call.1} parent=1 // pred_fallthru
      _
    %v21 = vld [vmem:[#allocation2] sm:$0xff]
    %v22 = vadd.f32 %v21, 1.0
    %23 = vst [vmem:[#allocation5] sm:$0xff] %v22
    // Predicated region
    $region10: #{tpu_custom_call.1} parent=1 // pred_check
      _
    $region11: #{tpu_custom_call.1} parent=1 // pred_check_branch
      %25 = sbr.rel (0) target = $region13
    $region12: #{tpu_custom_call.1} parent=1 // pred_region
      %s27 = ssub.s32 128, 128
      %28 = vsyncadd [#allocation4], %s27
      %s30 = sshll.u32 [#allocation5], 4
      %s31 = int_to_ptr.vmem [resolvable:$true] %s30
      %33 = dma.vmem_to_hbm [thread:$0]  %s31, 128, %s1, [#allocation4]
    $region13: #{tpu_custom_call.1} parent=1 // pred_fallthru
      _
    // Predicated region
    $region14: #{tpu_custom_call.1} parent=1 // pred_check
      _
    $region15: #{tpu_custom_call.1} parent=1 // pred_check_branch
      %35 = sbr.rel (0) target = $region17
    $region16: #{tpu_custom_call.1} parent=1 // pred_region
      %36 = dma.done [#allocation4], 128
    $region17: #{tpu_custom_call.1} parent=1 // pred_fallthru
      _
    %37 = vsyncpa [#allocation3], 1
    %38 = vsyncpa [#allocation4], 1

// kernel: tpu_custom_call.1
$region0: #{tpu_custom_call.1}
  #allocation0 [shape = 'u32[]', space=smem, size = 0x4, offset = 0x4, fixed_abs, tag = 'smem constant byte address 0x4 - core index']
  #allocation1 [shape = 'u32[144,128]{1,0:T(1,128)}', space=vmem, size = 0x12000, scoped, tag = 'internal scratch']
  #allocation2 [shape = 'bf16[4,8,8]{2,1,0:T(8,128)(2,1)}', space=vmem, size = 0x2000, scoped, tag = 'scratch operand']
  #allocation3 [shape = 'bf16[4,8,8]{2,1,0:T(8,128)(2,1)}', space=vmem, size = 0x2000, scoped, tag = 'scratch operand']
  %s0 = inlined_call_operand.hbm [shape: f32[2,8,32], index: 0, kind: input, shape index: {}, may-alias: {0,19}]
  %s1 = inlined_call_operand.vmem [shape: bf16[2,8,32], index: 1, kind: input, shape index: {}]
  %s2 = inlined_call_operand.vmem [shape: bf16[2,1,8], index: 2, kind: input, shape index: {}]
  %s3 = inlined_call_operand.vmem [shape: f32[1,32], index: 3, kind: input, shape index: {}]
  %s4 = inlined_call_operand.vmem [shape: f32[1,32], index: 4, kind: input, shape index: {}]
  %s5 = inlined_call_operand.vmem [shape: bf16[4,32,8], index: 5, kind: input, shape index: {}]
  %s6 = inlined_call_operand.vmem [shape: f32[4,1,8], index: 6, kind: input, shape index: {}]
  %s7 = inlined_call_operand.vmem [shape: bf16[4,8,32], index: 7, kind: input, shape index: {}]
  %s8 = inlined_call_operand.vmem [shape: f32[4,8,1], index: 8, kind: input, shape index: {}]
  %s9 = inlined_call_operand.vmem [shape: bf16[4,32,8], index: 9, kind: input, shape index: {}]
  %s10 = inlined_call_operand.vmem [shape: f32[4,1,8], index: 10, kind: input, shape index: {}]
  %s11 = inlined_call_operand.vmem [shape: bf16[4,8,32], index: 11, kind: input, shape index: {}]
  %s12 = inlined_call_operand.vmem [shape: f32[1,32], index: 12, kind: input, shape index: {}]
  %s13 = inlined_call_operand.vmem [shape: f32[1,32], index: 13, kind: input, shape index: {}]
  %s14 = inlined_call_operand.vmem [shape: f32[1,32], index: 14, kind: input, shape index: {}]
  %s15 = inlined_call_operand.vmem [shape: bf16[32,64], index: 15, kind: input, shape index: {}]
  %s16 = inlined_call_operand.vmem [shape: f32[1,64], index: 16, kind: input, shape index: {}]
  %s17 = inlined_call_operand.vmem [shape: bf16[64,32], index: 17, kind: input, shape index: {}]
  %s18 = inlined_call_operand.vmem [shape: f32[1,32], index: 18, kind: input, shape index: {}]
  %s19 = inlined_call_operand.hbm [shape: f32[2,8,32], index: 19, kind: output, shape index: {}, may-alias: {0,19}]
  %s20 = sld [smem:[#allocation0]]
  $region117: #{tpu_custom_call.1} parent=0
    _
  %s22 = ssub.s32 1, %s20
  %s23 = scalar_select 0, %s22, %s20
  $region1: #{tpu_custom_call.1} parent=0
    #allocation4 [shape = 'u8[8192]{0}', space=vmem, size = 0x2000, scoped, tag = 'input window, operand 0']
    #allocation5 [shape = 's32[2]{0}', space=sflag, size = 0x8, scoped, tag = 'scoped memory for tpu_custom_call.1']
    #allocation6 [shape = 's32[2]{0}', space=sflag, size = 0x8, scoped, tag = 'scoped memory for tpu_custom_call.1']
    #allocation7 [shape = 'u8[8192]{0}', space=vmem, size = 0x2000, scoped, tag = 'output window, operand 0']
    %24 = vsyncpa [#allocation5], 0
    %s25 = scalar_lea.sflag [#allocation5], 1
    %26 = vsyncpa %s25, 0
    %27 = vsyncpa [#allocation6], 0
    %s28 = scalar_lea.sflag [#allocation6], 1
    %29 = vsyncpa %s28, 0
    loop: start=0, step=1, limit=4
    $region2: #{tpu_custom_call.1} parent=1 // loop_pre_header
      _
    $region3: #{tpu_custom_call.1} parent=1 // loop_header
      %s31 = sphi 0, %s35
      %p32 = scmp.ge.s32.totalorder %s31, 4
      %s38 = sphi 0, %s50
      %s39 = sphi 0, %s46
      %s40 = sphi 0, %s38
      %s41 = sphi 0, %s39
      %s42 = sphi 0, %s40
      %s43 = sphi 0, %s41
      %s55 = sphi 0, %s57
      %s58 = sphi 0, %s55
      %s59 = sphi 0, %s58
      %s75 = sphi 0, %s59
      %s81 = sphi 0, %s83
      %s84 = sphi 0, %s81
      %s85 = sphi 0, %s84
      %s101 = sphi 0, %s85
      %s107 = sphi 0, %s109
      %s110 = sphi 0, %s107
      %s111 = sphi 0, %s110
      %s127 = sphi 0, %s111
      %s131 = sphi 0, %s131
      %s133 = sphi 0, %s131
      %s134 = sphi 0, %s133
      %s148 = sphi 0, %s134
      %s152 = sphi 0, %s152
      %s154 = sphi 0, %s152
      %s155 = sphi 0, %s154
      %s169 = sphi 0, %s155
      %s173 = sphi 0, %s173
      %s175 = sphi 0, %s173
      %s176 = sphi 0, %s175
      %s190 = sphi 0, %s176
      %s194 = sphi 0, %s194
      %s196 = sphi 0, %s194
      %s197 = sphi 0, %s196
      %s211 = sphi 0, %s197
      %s215 = sphi 0, %s215
      %s217 = sphi 0, %s215
      %s218 = sphi 0, %s217
      %s232 = sphi 0, %s218
      %s236 = sphi 0, %s236
      %s238 = sphi 0, %s236
      %s239 = sphi 0, %s238
      %s253 = sphi 0, %s239
      %s257 = sphi 0, %s257
      %s259 = sphi 0, %s257
      %s260 = sphi 0, %s259
      %s274 = sphi 0, %s260
      %s278 = sphi 0, %s278
      %s280 = sphi 0, %s278
      %s281 = sphi 0, %s280
      %s295 = sphi 0, %s281
      %s299 = sphi 0, %s299
      %s301 = sphi 0, %s299
      %s302 = sphi 0, %s301
      %s316 = sphi 0, %s302
      %s320 = sphi 0, %s320
      %s322 = sphi 0, %s320
      %s323 = sphi 0, %s322
      %s337 = sphi 0, %s323
      %s341 = sphi 0, %s341
      %s343 = sphi 0, %s341
      %s344 = sphi 0, %s343
      %s358 = sphi 0, %s344
      %s362 = sphi 0, %s362
      %s364 = sphi 0, %s362
      %s365 = sphi 0, %s364
      %s379 = sphi 0, %s365
      %s383 = sphi 0, %s383
      %s385 = sphi 0, %s383
      %s386 = sphi 0, %s385
      %s400 = sphi 0, %s386
      %s404 = sphi 0, %s404
      %s406 = sphi 0, %s404
      %s407 = sphi 0, %s406
      %s421 = sphi 0, %s407
      %s425 = sphi 0, %s425
      %s427 = sphi 0, %s425
      %s428 = sphi 0, %s427
      %s442 = sphi 0, %s428
      %s446 = sphi 0, %s446
      %s448 = sphi 0, %s446
      %s449 = sphi 0, %s448
      %s463 = sphi 0, %s449
      %s471 = sphi 0, %s473
      %s474 = sphi 0, %s471
      %s475 = sphi 0, %s474
      %s491 = sphi 0, %s475
    $region4: #{tpu_custom_call.1} parent=1 // loop_header_branch
      %34 = sbr.rel (%p32) target = $region8
    $region5: #{tpu_custom_call.1} parent=1 // loop_body
      %s36 = ssub.s32 %s31, 1
      %s37 = ssub.s32 %s31, 2
      %s44 = sadd.s32 1, %s39
      %p45 = scmp.ge.s32.totalorder %s44, 1
      %s46 = scalar_select %p45, 0, %s44
      %s47 = sadd.s32 1, %s38
      %s48 = scalar_select %p45, %s47, %s38
      %p49 = scmp.ge.s32.totalorder %s48, 2
      %s50 = scalar_select %p49, 0, %s48
      %s51 = ssub.s32 %s38, %s50
      %s52 = ssub.s32 %s39, %s46
      %s53 = sor.u32 %s51, %s52
      %p54 = scmp.eq.s32.totalorder %s53, 0
      %s56 = sadd.s32 %s55, 1
      %s57 = scalar_select %p54, %s55, %s56
      %p60 = pneg %p54
      %p61 = scmp.eq.s32.totalorder %s31, 1
      %p62 = por %p60, %p61
      %p63 = scmp.ne.s32.totalorder %s55, %s58
      %p64 = scmp.eq.s32.totalorder %s31, 0
      %p65 = por %p63, %p64
      %p66 = scmp.ne.s32.totalorder %s55, %s58
      %p67 = scmp.eq.s32.totalorder %s36, 1
      %p68 = por %p66, %p67
      %p69 = scmp.ne.s32.totalorder %s58, %s59
      %p70 = scmp.eq.s32.totalorder %s36, 0
      %p71 = por %p69, %p70
      %p72 = scmp.ne.s32.totalorder %s58, %s59
      %p73 = scmp.eq.s32.totalorder %s37, 1
      %p74 = por %p72, %p73
      %p76 = scmp.ne.s32.totalorder %s59, %s75
      %p77 = scmp.eq.s32.totalorder %s37, 0
      %p78 = por %p76, %p77
      %s79 = ssub.s32 %s38, %s50
      %p80 = scmp.eq.s32.totalorder %s79, 0
      %s82 = sadd.s32 %s81, 1
      %s83 = scalar_select %p80, %s81, %s82
      %p86 = pneg %p80
      %p87 = scmp.eq.s32.totalorder %s31, 1
      %p88 = por %p86, %p87
      %p89 = scmp.ne.s32.totalorder %s81, %s84
      %p90 = scmp.eq.s32.totalorder %s31, 0
      %p91 = por %p89, %p90
      %p92 = scmp.ne.s32.totalorder %s81, %s84
      %p93 = scmp.eq.s32.totalorder %s36, 1
      %p94 = por %p92, %p93
      %p95 = scmp.ne.s32.totalorder %s84, %s85
      %p96 = scmp.eq.s32.totalorder %s36, 0
      %p97 = por %p95, %p96
      %p98 = scmp.ne.s32.totalorder %s84, %s85
      %p99 = scmp.eq.s32.totalorder %s37, 1
      %p100 = por %p98, %p99
      %p102 = scmp.ne.s32.totalorder %s85, %s101
      %p103 = scmp.eq.s32.totalorder %s37, 0
      %p104 = por %p102, %p103
      %s105 = ssub.s32 %s38, %s50
      %p106 = scmp.eq.s32.totalorder %s105, 0
      %s108 = sadd.s32 %s107, 1
      %s109 = scalar_select %p106, %s107, %s108
      %p112 = pneg %p106
      %p113 = scmp.eq.s32.totalorder %s31, 1
      %p114 = por %p112, %p113
      %p115 = scmp.ne.s32.totalorder %s107, %s110
      %p116 = scmp.eq.s32.totalorder %s31, 0
      %p117 = por %p115, %p116
      %p118 = scmp.ne.s32.totalorder %s107, %s110
      %p119 = scmp.eq.s32.totalorder %s36, 1
      %p120 = por %p118, %p119
      %p121 = scmp.ne.s32.totalorder %s110, %s111
      %p122 = scmp.eq.s32.totalorder %s36, 0
      %p123 = por %p121, %p122
      %p124 = scmp.ne.s32.totalorder %s110, %s111
      %p125 = scmp.eq.s32.totalorder %s37, 1
      %p126 = por %p124, %p125
      %p128 = scmp.ne.s32.totalorder %s111, %s127
      %p129 = scmp.eq.s32.totalorder %s37, 0
      %p130 = por %p128, %p129
      %s132 = sadd.s32 %s131, 1
      %p135 = scmp.eq.s32.totalorder %s31, 1
      %p136 = scmp.ne.s32.totalorder %s131, %s133
      %p137 = scmp.eq.s32.totalorder %s31, 0
      %p138 = por %p136, %p137
      %p139 = scmp.ne.s32.totalorder %s131, %s133
      %p140 = scmp.eq.s32.totalorder %s36, 1
      %p141 = por %p139, %p140
      %p142 = scmp.ne.s32.totalorder %s133, %s134
      %p143 = scmp.eq.s32.totalorder %s36, 0
      %p144 = por %p142, %p143
      %p145 = scmp.ne.s32.totalorder %s133, %s134
      %p146 = scmp.eq.s32.totalorder %s37, 1
      %p147 = por %p145, %p146
      %p149 = scmp.ne.s32.totalorder %s134, %s148
      %p150 = scmp.eq.s32.totalorder %s37, 0
      %p151 = por %p149, %p150
      %s153 = sadd.s32 %s152, 1
      %p156 = scmp.eq.s32.totalorder %s31, 1
      %p157 = scmp.ne.s32.totalorder %s152, %s154
      %p158 = scmp.eq.s32.totalorder %s31, 0
      %p159 = por %p157, %p158
      %p160 = scmp.ne.s32.totalorder %s152, %s154
      %p161 = scmp.eq.s32.totalorder %s36, 1
      %p162 = por %p160, %p161
      %p163 = scmp.ne.s32.totalorder %s154, %s155
      %p164 = scmp.eq.s32.totalorder %s36, 0
      %p165 = por %p163, %p164
      %p166 = scmp.ne.s32.totalorder %s154, %s155
      %p167 = scmp.eq.s32.totalorder %s37, 1
      %p168 = por %p166, %p167
      %p170 = scmp.ne.s32.totalorder %s155, %s169
      %p171 = scmp.eq.s32.totalorder %s37, 0
      %p172 = por %p170, %p171
      %s174 = sadd.s32 %s173, 1
      %p177 = scmp.eq.s32.totalorder %s31, 1
      %p178 = scmp.ne.s32.totalorder %s173, %s175
      %p179 = scmp.eq.s32.totalorder %s31, 0
      %p180 = por %p178, %p179
      %p181 = scmp.ne.s32.totalorder %s173, %s175
      %p182 = scmp.eq.s32.totalorder %s36, 1
      %p183 = por %p181, %p182
      %p184 = scmp.ne.s32.totalorder %s175, %s176
      %p185 = scmp.eq.s32.totalorder %s36, 0
      %p186 = por %p184, %p185
      %p187 = scmp.ne.s32.totalorder %s175, %s176
      %p188 = scmp.eq.s32.totalorder %s37, 1
      %p189 = por %p187, %p188
      %p191 = scmp.ne.s32.totalorder %s176, %s190
      %p192 = scmp.eq.s32.totalorder %s37, 0
      %p193 = por %p191, %p192
      %s195 = sadd.s32 %s194, 1
      %p198 = scmp.eq.s32.totalorder %s31, 1
      %p199 = scmp.ne.s32.totalorder %s194, %s196
      %p200 = scmp.eq.s32.totalorder %s31, 0
      %p201 = por %p199, %p200
      %p202 = scmp.ne.s32.totalorder %s194, %s196
      %p203 = scmp.eq.s32.totalorder %s36, 1
      %p204 = por %p202, %p203
      %p205 = scmp.ne.s32.totalorder %s196, %s197
      %p206 = scmp.eq.s32.totalorder %s36, 0
      %p207 = por %p205, %p206
      %p208 = scmp.ne.s32.totalorder %s196, %s197
      %p209 = scmp.eq.s32.totalorder %s37, 1
      %p210 = por %p208, %p209
      %p212 = scmp.ne.s32.totalorder %s197, %s211
      %p213 = scmp.eq.s32.totalorder %s37, 0
      %p214 = por %p212, %p213
      %s216 = sadd.s32 %s215, 1
      %p219 = scmp.eq.s32.totalorder %s31, 1
      %p220 = scmp.ne.s32.totalorder %s215, %s217
      %p221 = scmp.eq.s32.totalorder %s31, 0
      %p222 = por %p220, %p221
      %p223 = scmp.ne.s32.totalorder %s215, %s217
      %p224 = scmp.eq.s32.totalorder %s36, 1
      %p225 = por %p223, %p224
      %p226 = scmp.ne.s32.totalorder %s217, %s218
      %p227 = scmp.eq.s32.totalorder %s36, 0
      %p228 = por %p226, %p227
      %p229 = scmp.ne.s32.totalorder %s217, %s218
      %p230 = scmp.eq.s32.totalorder %s37, 1
      %p231 = por %p229, %p230
      %p233 = scmp.ne.s32.totalorder %s218, %s232
      %p234 = scmp.eq.s32.totalorder %s37, 0
      %p235 = por %p233, %p234
      %s237 = sadd.s32 %s236, 1
      %p240 = scmp.eq.s32.totalorder %s31, 1
      %p241 = scmp.ne.s32.totalorder %s236, %s238
      %p242 = scmp.eq.s32.totalorder %s31, 0
      %p243 = por %p241, %p242
      %p244 = scmp.ne.s32.totalorder %s236, %s238
      %p245 = scmp.eq.s32.totalorder %s36, 1
      %p246 = por %p244, %p245
      %p247 = scmp.ne.s32.totalorder %s238, %s239
      %p248 = scmp.eq.s32.totalorder %s36, 0
      %p249 = por %p247, %p248
      %p250 = scmp.ne.s32.totalorder %s238, %s239
      %p251 = scmp.eq.s32.totalorder %s37, 1
      %p252 = por %p250, %p251
      %p254 = scmp.ne.s32.totalorder %s239, %s253
      %p255 = scmp.eq.s32.totalorder %s37, 0
      %p256 = por %p254, %p255
      %s258 = sadd.s32 %s257, 1
      %p261 = scmp.eq.s32.totalorder %s31, 1
      %p262 = scmp.ne.s32.totalorder %s257, %s259
      %p263 = scmp.eq.s32.totalorder %s31, 0
      %p264 = por %p262, %p263
      %p265 = scmp.ne.s32.totalorder %s257, %s259
      %p266 = scmp.eq.s32.totalorder %s36, 1
      %p267 = por %p265, %p266
      %p268 = scmp.ne.s32.totalorder %s259, %s260
      %p269 = scmp.eq.s32.totalorder %s36, 0
      %p270 = por %p268, %p269
      %p271 = scmp.ne.s32.totalorder %s259, %s260
      %p272 = scmp.eq.s32.totalorder %s37, 1
      %p273 = por %p271, %p272
      %p275 = scmp.ne.s32.totalorder %s260, %s274
      %p276 = scmp.eq.s32.totalorder %s37, 0
      %p277 = por %p275, %p276
      %s279 = sadd.s32 %s278, 1
      %p282 = scmp.eq.s32.totalorder %s31, 1
      %p283 = scmp.ne.s32.totalorder %s278, %s280
      %p284 = scmp.eq.s32.totalorder %s31, 0
      %p285 = por %p283, %p284
      %p286 = scmp.ne.s32.totalorder %s278, %s280
      %p287 = scmp.eq.s32.totalorder %s36, 1
      %p288 = por %p286, %p287
      %p289 = scmp.ne.s32.totalorder %s280, %s281
      %p290 = scmp.eq.s32.totalorder %s36, 0
      %p291 = por %p289, %p290
      %p292 = scmp.ne.s32.totalorder %s280, %s281
      %p293 = scmp.eq.s32.totalorder %s37, 1
      %p294 = por %p292, %p293
      %p296 = scmp.ne.s32.totalorder %s281, %s295
      %p297 = scmp.eq.s32.totalorder %s37, 0
      %p298 = por %p296, %p297
      %s300 = sadd.s32 %s299, 1
      %p303 = scmp.eq.s32.totalorder %s31, 1
      %p304 = scmp.ne.s32.totalorder %s299, %s301
      %p305 = scmp.eq.s32.totalorder %s31, 0
      %p306 = por %p304, %p305
      %p307 = scmp.ne.s32.totalorder %s299, %s301
      %p308 = scmp.eq.s32.totalorder %s36, 1
      %p309 = por %p307, %p308
      %p310 = scmp.ne.s32.totalorder %s301, %s302
      %p311 = scmp.eq.s32.totalorder %s36, 0
      %p312 = por %p310, %p311
      %p313 = scmp.ne.s32.totalorder %s301, %s302
      %p314 = scmp.eq.s32.totalorder %s37, 1
      %p315 = por %p313, %p314
      %p317 = scmp.ne.s32.totalorder %s302, %s316
      %p318 = scmp.eq.s32.totalorder %s37, 0
      %p319 = por %p317, %p318
      %s321 = sadd.s32 %s320, 1
      %p324 = scmp.eq.s32.totalorder %s31, 1
      %p325 = scmp.ne.s32.totalorder %s320, %s322
      %p326 = scmp.eq.s32.totalorder %s31, 0
      %p327 = por %p325, %p326
      %p328 = scmp.ne.s32.totalorder %s320, %s322
      %p329 = scmp.eq.s32.totalorder %s36, 1
      %p330 = por %p328, %p329
      %p331 = scmp.ne.s32.totalorder %s322, %s323
      %p332 = scmp.eq.s32.totalorder %s36, 0
      %p333 = por %p331, %p332
      %p334 = scmp.ne.s32.totalorder %s322, %s323
      %p335 = scmp.eq.s32.totalorder %s37, 1
      %p336 = por %p334, %p335
      %p338 = scmp.ne.s32.totalorder %s323, %s337
      %p339 = scmp.eq.s32.totalorder %s37, 0
      %p340 = por %p338, %p339
      %s342 = sadd.s32 %s341, 1
      %p345 = scmp.eq.s32.totalorder %s31, 1
      %p346 = scmp.ne.s32.totalorder %s341, %s343
      %p347 = scmp.eq.s32.totalorder %s31, 0
      %p348 = por %p346, %p347
      %p349 = scmp.ne.s32.totalorder %s341, %s343
      %p350 = scmp.eq.s32.totalorder %s36, 1
      %p351 = por %p349, %p350
      %p352 = scmp.ne.s32.totalorder %s343, %s344
      %p353 = scmp.eq.s32.totalorder %s36, 0
      %p354 = por %p352, %p353
      %p355 = scmp.ne.s32.totalorder %s343, %s344
      %p356 = scmp.eq.s32.totalorder %s37, 1
      %p357 = por %p355, %p356
      %p359 = scmp.ne.s32.totalorder %s344, %s358
      %p360 = scmp.eq.s32.totalorder %s37, 0
      %p361 = por %p359, %p360
      %s363 = sadd.s32 %s362, 1
      %p366 = scmp.eq.s32.totalorder %s31, 1
      %p367 = scmp.ne.s32.totalorder %s362, %s364
      %p368 = scmp.eq.s32.totalorder %s31, 0
      %p369 = por %p367, %p368
      %p370 = scmp.ne.s32.totalorder %s362, %s364
      %p371 = scmp.eq.s32.totalorder %s36, 1
      %p372 = por %p370, %p371
      %p373 = scmp.ne.s32.totalorder %s364, %s365
      %p374 = scmp.eq.s32.totalorder %s36, 0
      %p375 = por %p373, %p374
      %p376 = scmp.ne.s32.totalorder %s364, %s365
      %p377 = scmp.eq.s32.totalorder %s37, 1
      %p378 = por %p376, %p377
      %p380 = scmp.ne.s32.totalorder %s365, %s379
      %p381 = scmp.eq.s32.totalorder %s37, 0
      %p382 = por %p380, %p381
      %s384 = sadd.s32 %s383, 1
      %p387 = scmp.eq.s32.totalorder %s31, 1
      %p388 = scmp.ne.s32.totalorder %s383, %s385
      %p389 = scmp.eq.s32.totalorder %s31, 0
      %p390 = por %p388, %p389
      %p391 = scmp.ne.s32.totalorder %s383, %s385
      %p392 = scmp.eq.s32.totalorder %s36, 1
      %p393 = por %p391, %p392
      %p394 = scmp.ne.s32.totalorder %s385, %s386
      %p395 = scmp.eq.s32.totalorder %s36, 0
      %p396 = por %p394, %p395
      %p397 = scmp.ne.s32.totalorder %s385, %s386
      %p398 = scmp.eq.s32.totalorder %s37, 1
      %p399 = por %p397, %p398
      %p401 = scmp.ne.s32.totalorder %s386, %s400
      %p402 = scmp.eq.s32.totalorder %s37, 0
      %p403 = por %p401, %p402
      %s405 = sadd.s32 %s404, 1
      %p408 = scmp.eq.s32.totalorder %s31, 1
      %p409 = scmp.ne.s32.totalorder %s404, %s406
      %p410 = scmp.eq.s32.totalorder %s31, 0
      %p411 = por %p409, %p410
      %p412 = scmp.ne.s32.totalorder %s404, %s406
      %p413 = scmp.eq.s32.totalorder %s36, 1
      %p414 = por %p412, %p413
      %p415 = scmp.ne.s32.totalorder %s406, %s407
      %p416 = scmp.eq.s32.totalorder %s36, 0
      %p417 = por %p415, %p416
      %p418 = scmp.ne.s32.totalorder %s406, %s407
      %p419 = scmp.eq.s32.totalorder %s37, 1
      %p420 = por %p418, %p419
      %p422 = scmp.ne.s32.totalorder %s407, %s421
      %p423 = scmp.eq.s32.totalorder %s37, 0
      %p424 = por %p422, %p423
      %s426 = sadd.s32 %s425, 1
      %p429 = scmp.eq.s32.totalorder %s31, 1
      %p430 = scmp.ne.s32.totalorder %s425, %s427
      %p431 = scmp.eq.s32.totalorder %s31, 0
      %p432 = por %p430, %p431
      %p433 = scmp.ne.s32.totalorder %s425, %s427
      %p434 = scmp.eq.s32.totalorder %s36, 1
      %p435 = por %p433, %p434
      %p436 = scmp.ne.s32.totalorder %s427, %s428
      %p437 = scmp.eq.s32.totalorder %s36, 0
      %p438 = por %p436, %p437
      %p439 = scmp.ne.s32.totalorder %s427, %s428
      %p440 = scmp.eq.s32.totalorder %s37, 1
      %p441 = por %p439, %p440
      %p443 = scmp.ne.s32.totalorder %s428, %s442
      %p444 = scmp.eq.s32.totalorder %s37, 0
      %p445 = por %p443, %p444
      %s447 = sadd.s32 %s446, 1
      %p450 = scmp.eq.s32.totalorder %s31, 1
      %p451 = scmp.ne.s32.totalorder %s446, %s448
      %p452 = scmp.eq.s32.totalorder %s31, 0
      %p453 = por %p451, %p452
      %p454 = scmp.ne.s32.totalorder %s446, %s448
      %p455 = scmp.eq.s32.totalorder %s36, 1
      %p456 = por %p454, %p455
      %p457 = scmp.ne.s32.totalorder %s448, %s449
      %p458 = scmp.eq.s32.totalorder %s36, 0
      %p459 = por %p457, %p458
      %p460 = scmp.ne.s32.totalorder %s448, %s449
      %p461 = scmp.eq.s32.totalorder %s37, 1
      %p462 = por %p460, %p461
      %p464 = scmp.ne.s32.totalorder %s449, %s463
      %p465 = scmp.eq.s32.totalorder %s37, 0
      %p466 = por %p464, %p465
      %s467 = ssub.s32 %s38, %s50
      %s468 = ssub.s32 %s39, %s46
      %s469 = sor.u32 %s467, %s468
      %p470 = scmp.eq.s32.totalorder %s469, 0
      %s472 = sadd.s32 %s471, 1
      %s473 = scalar_select %p470, %s471, %s472
      %p476 = pneg %p470
      %p477 = scmp.eq.s32.totalorder %s31, 1
      %p478 = por %p476, %p477
      %p479 = scmp.ne.s32.totalorder %s471, %s474
      %p480 = scmp.eq.s32.totalorder %s31, 0
      %p481 = por %p479, %p480
      %p482 = scmp.ne.s32.totalorder %s471, %s474
      %p483 = scmp.eq.s32.totalorder %s36, 1
      %p484 = por %p482, %p483
      %p485 = scmp.ne.s32.totalorder %s474, %s475
      %p486 = scmp.eq.s32.totalorder %s36, 0
      %p487 = por %p485, %p486
      %p488 = scmp.ne.s32.totalorder %s474, %s475
      %p489 = scmp.eq.s32.totalorder %s37, 1
      %p490 = por %p488, %p489
      %p492 = scmp.ne.s32.totalorder %s475, %s491
      %p493 = scmp.eq.s32.totalorder %s37, 0
      %p494 = por %p492, %p493
      %p495 = scmp.le.s32.totalorder 1, %s31
      %p496 = scmp.lt.s32.totalorder %s31, 3
      %p497 = pnand %p495, %p496
      %p498 = pneg %p497
      // Predicated region
      $region9: #{tpu_custom_call.1} parent=5 // pred_check
        _
      $region10: #{tpu_custom_call.1} parent=5 // pred_check_branch
        %500 = sbr.rel (%p497) target = $region12
      $region11: #{tpu_custom_call.1} parent=5 // pred_region
        %s501 = ssub.s32 %s31, 1
        // Predicated region
        $region13: #{tpu_custom_call.1} parent=11 // pred_check
          %p502 = pneg %p144
        $region14: #{tpu_custom_call.1} parent=11 // pred_check_branch
          %504 = sbr.rel (%p502) target = $region16
        $region15: #{tpu_custom_call.1} parent=11 // pred_region
          _
        $region16: #{tpu_custom_call.1} parent=11 // pred_fallthru
          _
        // Predicated region
        $region17: #{tpu_custom_call.1} parent=11 // pred_check
          %p505 = pneg %p165
        $region18: #{tpu_custom_call.1} parent=11 // pred_check_branch
          %507 = sbr.rel (%p505) target = $region20
        $region19: #{tpu_custom_call.1} parent=11 // pred_region
          _
        $region20: #{tpu_custom_call.1} parent=11 // pred_fallthru
          _
        // Predicated region
        $region21: #{tpu_custom_call.1} parent=11 // pred_check
          %p508 = pneg %p186
        $region22: #{tpu_custom_call.1} parent=11 // pred_check_branch
          %510 = sbr.rel (%p508) target = $region24
        $region23: #{tpu_custom_call.1} parent=11 // pred_region
          _
        $region24: #{tpu_custom_call.1} parent=11 // pred_fallthru
          _
        // Predicated region
        $region25: #{tpu_custom_call.1} parent=11 // pred_check
          %p511 = pneg %p207
        $region26: #{tpu_custom_call.1} parent=11 // pred_check_branch
          %513 = sbr.rel (%p511) target = $region28
        $region27: #{tpu_custom_call.1} parent=11 // pred_region
          _
        $region28: #{tpu_custom_call.1} parent=11 // pred_fallthru
          _
        // Predicated region
        $region29: #{tpu_custom_call.1} parent=11 // pred_check
          %p514 = pneg %p228
        $region30: #{tpu_custom_call.1} parent=11 // pred_check_branch
          %516 = sbr.rel (%p514) target = $region32
        $region31: #{tpu_custom_call.1} parent=11 // pred_region
          _
        $region32: #{tpu_custom_call.1} parent=11 // pred_fallthru
          _
        // Predicated region
        $region33: #{tpu_custom_call.1} parent=11 // pred_check
          %p517 = pneg %p249
        $region34: #{tpu_custom_call.1} parent=11 // pred_check_branch
          %519 = sbr.rel (%p517) target = $region36
        $region35: #{tpu_custom_call.1} parent=11 // pred_region
          _
        $region36: #{tpu_custom_call.1} parent=11 // pred_fallthru
          _
        // Predicated region
        $region37: #{tpu_custom_call.1} parent=11 // pred_check
          %p520 = pneg %p270
        $region38: #{tpu_custom_call.1} parent=11 // pred_check_branch
          %522 = sbr.rel (%p520) target = $region40
        $region39: #{tpu_custom_call.1} parent=11 // pred_region
          _
        $region40: #{tpu_custom_call.1} parent=11 // pred_fallthru
          _
        // Predicated region
        $region41: #{tpu_custom_call.1} parent=11 // pred_check
          %p523 = pneg %p291
        $region42: #{tpu_custom_call.1} parent=11 // pred_check_branch
          %525 = sbr.rel (%p523) target = $region44
        $region43: #{tpu_custom_call.1} parent=11 // pred_region
          _
        $region44: #{tpu_custom_call.1} parent=11 // pred_fallthru
          _
        // Predicated region
        $region45: #{tpu_custom_call.1} parent=11 // pred_check
          %p526 = pneg %p312
        $region46: #{tpu_custom_call.1} parent=11 // pred_check_branch
          %528 = sbr.rel (%p526) target = $region48
        $region47: #{tpu_custom_call.1} parent=11 // pred_region
          _
        $region48: #{tpu_custom_call.1} parent=11 // pred_fallthru
          _
        // Predicated region
        $region49: #{tpu_custom_call.1} parent=11 // pred_check
          %p529 = pneg %p333
        $region50: #{tpu_custom_call.1} parent=11 // pred_check_branch
          %531 = sbr.rel (%p529) target = $region52
        $region51: #{tpu_custom_call.1} parent=11 // pred_region
          _
        $region52: #{tpu_custom_call.1} parent=11 // pred_fallthru
          _
        // Predicated region
        $region53: #{tpu_custom_call.1} parent=11 // pred_check
          %p532 = pneg %p354
        $region54: #{tpu_custom_call.1} parent=11 // pred_check_branch
          %534 = sbr.rel (%p532) target = $region56
        $region55: #{tpu_custom_call.1} parent=11 // pred_region
          _
        $region56: #{tpu_custom_call.1} parent=11 // pred_fallthru
          _
        // Predicated region
        $region57: #{tpu_custom_call.1} parent=11 // pred_check
          %p535 = pneg %p375
        $region58: #{tpu_custom_call.1} parent=11 // pred_check_branch
          %537 = sbr.rel (%p535) target = $region60
        $region59: #{tpu_custom_call.1} parent=11 // pred_region
          _
        $region60: #{tpu_custom_call.1} parent=11 // pred_fallthru
          _
        // Predicated region
        $region61: #{tpu_custom_call.1} parent=11 // pred_check
          %p538 = pneg %p396
        $region62: #{tpu_custom_call.1} parent=11 // pred_check_branch
          %540 = sbr.rel (%p538) target = $region64
        $region63: #{tpu_custom_call.1} parent=11 // pred_region
          _
        $region64: #{tpu_custom_call.1} parent=11 // pred_fallthru
          _
        // Predicated region
        $region65: #{tpu_custom_call.1} parent=11 // pred_check
          %p541 = pneg %p417
        $region66: #{tpu_custom_call.1} parent=11 // pred_check_branch
          %543 = sbr.rel (%p541) target = $region68
        $region67: #{tpu_custom_call.1} parent=11 // pred_region
          _
        $region68: #{tpu_custom_call.1} parent=11 // pred_fallthru
          _
        // Predicated region
        $region69: #{tpu_custom_call.1} parent=11 // pred_check
          %p544 = pneg %p438
        $region70: #{tpu_custom_call.1} parent=11 // pred_check_branch
          %546 = sbr.rel (%p544) target = $region72
        $region71: #{tpu_custom_call.1} parent=11 // pred_region
          _
        $region72: #{tpu_custom_call.1} parent=11 // pred_fallthru
          _
        // Predicated region
        $region73: #{tpu_custom_call.1} parent=11 // pred_check
          %p547 = pneg %p459
        $region74: #{tpu_custom_call.1} parent=11 // pred_check_branch
          %549 = sbr.rel (%p547) target = $region76
        $region75: #{tpu_custom_call.1} parent=11 // pred_region
          _
        $region76: #{tpu_custom_call.1} parent=11 // pred_fallthru
          _
      $region12: #{tpu_custom_call.1} parent=5 // pred_fallthru
        _
      %p550 = scmp.lt.s32.totalorder %s31, 2
      // Predicated region
      $region77: #{tpu_custom_call.1} parent=5 // pred_check
        %p551 = pneg %p550
      $region78: #{tpu_custom_call.1} parent=5 // pred_check_branch
        %553 = sbr.rel (%p551) target = $region80
      $region79: #{tpu_custom_call.1} parent=5 // pred_region
        // Predicated region
        $region81: #{tpu_custom_call.1} parent=79 // pred_check
          %p554 = pneg %p65
        $region82: #{tpu_custom_call.1} parent=79 // pred_check_branch
          %556 = sbr.rel (%p554) target = $region84
        $region83: #{tpu_custom_call.1} parent=79 // pred_region
          %s557 = sand.u32 %s55, 1
          %s558 = scalar_lea.sflag [#allocation5], %s557
          %s559 = sand.u32 %s55, 1
          %s560 = smul.addr %s559, 8
          %s561 = scalar_lea.vmem [#allocation4], %s560
          %s563 = ssub.s32 128, 128
          %564 = vsyncadd %s558, %s563
          %s565 = sadd.s32 %s39, %s38
          %s566 = smul.addr %s565, 128
          %s567 = scalar_lea.hbm %s0, %s566
          %s569 = sshll.u32 %s561, 4
          %s570 = int_to_ptr.vmem [resolvable:$true] %s569
          %572 = dma.hbm_to_vmem [thread:$0]  %s567, 128, %s570, %s558
        $region84: #{tpu_custom_call.1} parent=79 // pred_fallthru
          _
        // Predicated region
        $region85: #{tpu_custom_call.1} parent=79 // pred_check
          %p573 = pneg %p91
        $region86: #{tpu_custom_call.1} parent=79 // pred_check_branch
          %575 = sbr.rel (%p573) target = $region88
        $region87: #{tpu_custom_call.1} parent=79 // pred_region
          %p576 = scmp.lt.s32.totalorder %s38, 1
          %s577 = scalar_select %p576, %s38, 1
          %s578 = smul.addr %s577, 4
          %s579 = scalar_lea.vmem %s1, %s578
        $region88: #{tpu_custom_call.1} parent=79 // pred_fallthru
          _
        // Predicated region
        $region89: #{tpu_custom_call.1} parent=79 // pred_check
          %p580 = pneg %p117
        $region90: #{tpu_custom_call.1} parent=79 // pred_check_branch
          %582 = sbr.rel (%p580) target = $region92
        $region91: #{tpu_custom_call.1} parent=79 // pred_region
          %p583 = scmp.lt.s32.totalorder %s38, 1
          %s584 = scalar_select %p583, %s38, 1
          %s585 = scalar_lea.vmem %s2, %s584
        $region92: #{tpu_custom_call.1} parent=79 // pred_fallthru
          _
      $region80: #{tpu_custom_call.1} parent=5 // pred_fallthru
        _
      %p586 = scmp.le.s32.totalorder 1, %s31
      %p587 = scmp.lt.s32.totalorder %s31, 3
      %p588 = pnand %p586, %p587
      %p589 = pneg %p588
      // Predicated region
      $region93: #{tpu_custom_call.1} parent=5 // pred_check
        _
      $region94: #{tpu_custom_call.1} parent=5 // pred_check_branch
        %591 = sbr.rel (%p588) target = $region96
      $region95: #{tpu_custom_call.1} parent=5 // pred_region
        %s592 = ssub.s32 %s31, 1
        %s593 = sand.u32 %s58, 1
        %s594 = scalar_lea.sflag [#allocation5], %s593
        %s595 = sand.u32 %s58, 1
        %s596 = smul.addr %s595, 8
        %s597 = scalar_lea.vmem [#allocation4], %s596
        // Predicated region
        $region97: #{tpu_custom_call.1} parent=95 // pred_check
          %p598 = pneg %p71
        $region98: #{tpu_custom_call.1} parent=95 // pred_check_branch
          %600 = sbr.rel (%p598) target = $region100
        $region99: #{tpu_custom_call.1} parent=95 // pred_region
          %601 = dma.done %s594, 128
        $region100: #{tpu_custom_call.1} parent=95 // pred_fallthru
          _
        %s602 = sand.u32 %s58, 1
        %s603 = scalar_lea.sflag [#allocation5], %s602
        %s604 = sand.u32 %s58, 1
        %s605 = smul.addr %s604, 8
        %s606 = scalar_lea.vmem [#allocation4], %s605
        %p607 = pneg %p71
        %p608 = pneg %p68
        %p609 = scmp.lt.s32.totalorder %s40, 1
        %s610 = scalar_select %p609, %s40, 1
        %s611 = smul.addr %s610, 4
        %s612 = scalar_lea.vmem %s1, %s611
        %p613 = pneg %p97
        %p614 = pneg %p94
        %p615 = scmp.lt.s32.totalorder %s40, 1
        %s616 = scalar_select %p615, %s40, 1
        %s617 = scalar_lea.vmem %s2, %s616
        %p618 = pneg %p123
        %p619 = pneg %p120
        %p620 = pneg %p144
        %p621 = pneg %p141
        %p622 = pneg %p165
        %p623 = pneg %p162
        %p624 = pneg %p186
        %p625 = pneg %p183
        %p626 = pneg %p207
        %p627 = pneg %p204
        %p628 = pneg %p228
        %p629 = pneg %p225
        %p630 = pneg %p249
        %p631 = pneg %p246
        %p632 = pneg %p270
        %p633 = pneg %p267
        %p634 = pneg %p291
        %p635 = pneg %p288
        %p636 = pneg %p312
        %p637 = pneg %p309
        %p638 = pneg %p333
        %p639 = pneg %p330
        %p640 = pneg %p354
        %p641 = pneg %p351
        %p642 = pneg %p375
        %p643 = pneg %p372
        %p644 = pneg %p396
        %p645 = pneg %p393
        %p646 = pneg %p417
        %p647 = pneg %p414
        %p648 = pneg %p438
        %p649 = pneg %p435
        %p650 = pneg %p459
        %p651 = pneg %p456
        %p652 = pneg %p487
        %p653 = pneg %p484
        %s654 = sand.u32 %s474, 1
        %s655 = scalar_lea.sflag [#allocation6], %s654
        %s656 = sand.u32 %s474, 1
        %s657 = smul.addr %s656, 8
        %s658 = scalar_lea.vmem [#allocation7], %s657
        %p659 = scmp.lt.s32.totalorder %s40, 1
        %s660 = scalar_select %p659, %s40, 1
        %s661 = smul.addr %s660, 4
        %s662 = scalar_lea.vmem %s1, %s661
        %p663 = scmp.lt.s32.totalorder %s40, 1
        %s664 = scalar_select %p663, %s40, 1
        %s665 = scalar_lea.vmem %s2, %s664
        %p667 = scmp.eq.s32.totalorder %s41, 0
        // Predicated region
        $region101: #{tpu_custom_call.1} parent=95 // pred_check
          %p668 = pneg %p667
        $region102: #{tpu_custom_call.1} parent=95 // pred_check_branch
          %670 = sbr.rel (%p668) target = $region104
        $region103: #{tpu_custom_call.1} parent=95 // pred_region
          %v671 = vld [vmem:[%s662] sm:$0xf]
          %v672 = vld [vmem:[%s7] sm:$0xf]
          %v673 = vld [vmem:[%s8] sm:$0xff]
          %675 = vset.pattern.permute.xlu0 0
          %676 = vperm.xlu0 %675, %v673
          %v677 = vpop.permute.xlu0 %676
          %vm679 = vcmask 261120
          %v681 = vsel %vm679, %v672, 0
          %v684 = vsel %vm679, %v671, 0
          %686 = vmatprep.subr.bf16.mxu0 0
          %687 = vmatpush1.bf16.xpose.msra.mxu0 0
          %688 = vmatprep.subr.bf16.mxu0 0
          %689 = vmatpush1.bf16.xpose.msra.mxu0 0
          %690 = vmatprep.subr.bf16.mxu0 0
          %691 = vmatpush1.bf16.xpose.msra.mxu0 0
          %692 = vmatprep.subr.bf16.mxu0 0
          %693 = vmatpush1.bf16.xpose.msra.mxu0 0
          %694 = vmatprep.subr.bf16.mxu0 0
          %695 = vmatpush1.bf16.xpose.msra.mxu0 0
          %696 = vmatprep.subr.bf16.mxu0 0
          %697 = vmatpush1.bf16.xpose.msra.mxu0 0
          %698 = vmatprep.subr.bf16.mxu0 0
          %699 = vmatpush1.bf16.xpose.msra.mxu0 0
          %700 = vmatprep.subr.bf16.mxu0 0
          %701 = vmatpush1.bf16.xpose.msra.mxu0 %v684
          %702 = vmatprep.subr.bf16.mxu0 0
          %703 = vmatpush2.bf16.xpose.msra.mxu0 0
          %704 = vmatprep.subr.bf16.mxu0 0
          %705 = vmatpush2.bf16.xpose.msra.mxu0 0
          %706 = vmatprep.subr.bf16.mxu0 0
          %707 = vmatpush2.bf16.xpose.msra.mxu0 0
          %708 = vmatprep.subr.bf16.mxu0 0
          %709 = vmatpush2.bf16.xpose.msra.mxu0 0
          %710 = vmatprep.subr.bf16.mxu0 0
          %711 = vmatpush2.bf16.xpose.msra.mxu0 0
          %712 = vmatprep.subr.bf16.mxu0 0
          %713 = vmatpush2.bf16.xpose.msra.mxu0 0
          %714 = vmatprep.subr.bf16.mxu0 0
          %715 = vmatpush2.bf16.xpose.msra.mxu0 0
          %716 = vmatprep.subr.bf16.mxu0 0
          %717 = vmatpush2.bf16.xpose.msra.mxu0 0
          %718 = vmatprep.mubr.bf16.mxu0 0
          %719 = vmatmul.mubr.bf16.gmra.mxu0 %v681
          %v720 = vpop.f32.mrf.mxu0
          %v721 = vadd.f32 %v677, %v720
          %v722 = vpop.f32.mrf.mxu0
          %v723 = vpop.f32.mrf.mxu0
          %v724 = vpop.f32.mrf.mxu0
          %725 = vdwg.mxu0
          %v726 = vpack.c.bf16 %v721, %v721
          %vm727 = vcmask 60416
          %728 = vst.msk [vmem:[#allocation2] sm:$0xf] %vm727, %v726
          %v729 = vld [vmem:[%s9] sm:$0xf]
          %v730 = vld [vmem:[%s9 + $0x4] sm:$0xf]
          %v731 = vld [vmem:[%s9 + $0x8] sm:$0xf]
          %v732 = vld [vmem:[%s9 + $0xc] sm:$0xf]
          %v733 = vld [vmem:[%s10] sm:$0x1]
          %v735 = vlaneseq
          %v736 = vshrl.u32 %v735, 7
          %v737 = vsub.s32 0, %v736
          %v738 = vrot.slane %v733, %v737
          %v744 = vunpack.c.l.b16 %v729
          %v745 = vunpack.c.l.b16 %v730
          %v746 = vunpack.c.l.b16 %v731
          %v747 = vunpack.c.l.b16 %v732
          %v748 = vpack.c.b16 %v745, %v744
          %v749 = vpack.c.b16 %v747, %v746
          %752 = vmatprep.subr.bf16.mxu0 0
          %753 = vmatpush1.bf16.msra.mxu0 0
          %754 = vmatprep.subr.bf16.mxu0 0
          %755 = vmatpush1.bf16.msra.mxu0 0
          %756 = vmatprep.subr.bf16.mxu0 0
          %757 = vmatpush1.bf16.msra.mxu0 0
          %758 = vmatprep.subr.bf16.mxu0 0
          %759 = vmatpush1.bf16.msra.mxu0 0
          %760 = vmatprep.subr.bf16.mxu0 0
          %761 = vmatpush1.bf16.msra.mxu0 0
          %762 = vmatprep.subr.bf16.mxu0 0
          %763 = vmatpush1.bf16.msra.mxu0 0
          %764 = vmatprep.subr.bf16.mxu0 0
          %765 = vmatpush1.bf16.msra.mxu0 %v749
          %766 = vmatprep.subr.bf16.mxu0 0
          %767 = vmatpush1.bf16.msra.mxu0 %v748
          %768 = vmatprep.subr.bf16.mxu0 0
          %769 = vmatpush2.bf16.msra.mxu0 0
          %770 = vmatprep.subr.bf16.mxu0 0
          %771 = vmatpush2.bf16.msra.mxu0 0
          %772 = vmatprep.subr.bf16.mxu0 0
          %773 = vmatpush2.bf16.msra.mxu0 0
          %774 = vmatprep.subr.bf16.mxu0 0
          %775 = vmatpush2.bf16.msra.mxu0 0
          %776 = vmatprep.subr.bf16.mxu0 0
          %777 = vmatpush2.bf16.msra.mxu0 0
          %778 = vmatprep.subr.bf16.mxu0 0
          %779 = vmatpush2.bf16.msra.mxu0 0
          %780 = vmatprep.subr.bf16.mxu0 0
          %781 = vmatpush2.bf16.msra.mxu0 0
          %782 = vmatprep.subr.bf16.mxu0 0
          %783 = vmatpush2.bf16.msra.mxu0 0
          %784 = vmatprep.mubr.bf16.mxu0 0
          %785 = vmatmul.mubr.bf16.gmra.mxu0 %v684
          %v786 = vpop.f32.mrf.mxu0
          %v787 = vadd.f32 %v738, %v786
          %v788 = vpop.f32.mrf.mxu0
          %v789 = vpop.f32.mrf.mxu0
          %v790 = vpop.f32.mrf.mxu0
          %791 = vdwg.mxu0
          %v792 = vpack.c.bf16 %v787, %v787
          %793 = vst.msk [vmem:[#allocation3] sm:$0xf] %vm727, %v792
          %s794 = scalar_lea.vmem %s7, 4
          %v795 = vld [vmem:[%s794] sm:$0xf]
          %s796 = scalar_lea.vmem %s8, 8
          %v797 = vld [vmem:[%s796] sm:$0xff]
          %799 = vset.pattern.permute.xlu0 0
          %800 = vperm.xlu0 %799, %v797
          %v801 = vpop.permute.xlu0 %800
          %v804 = vsel %vm679, %v795, 0
          %806 = vmatprep.subr.bf16.mxu0 0
          %807 = vmatpush1.bf16.xpose.msra.mxu0 0
          %808 = vmatprep.subr.bf16.mxu0 0
          %809 = vmatpush1.bf16.xpose.msra.mxu0 0
          %810 = vmatprep.subr.bf16.mxu0 0
          %811 = vmatpush1.bf16.xpose.msra.mxu0 0
          %812 = vmatprep.subr.bf16.mxu0 0
          %813 = vmatpush1.bf16.xpose.msra.mxu0 0
          %814 = vmatprep.subr.bf16.mxu0 0
          %815 = vmatpush1.bf16.xpose.msra.mxu0 0
          %816 = vmatprep.subr.bf16.mxu0 0
          %817 = vmatpush1.bf16.xpose.msra.mxu0 0
          %818 = vmatprep.subr.bf16.mxu0 0
          %819 = vmatpush1.bf16.xpose.msra.mxu0 0
          %820 = vmatprep.subr.bf16.mxu0 0
          %821 = vmatpush1.bf16.xpose.msra.mxu0 %v684
          %822 = vmatprep.subr.bf16.mxu0 0
          %823 = vmatpush2.bf16.xpose.msra.mxu0 0
          %824 = vmatprep.subr.bf16.mxu0 0
          %825 = vmatpush2.bf16.xpose.msra.mxu0 0
          %826 = vmatprep.subr.bf16.mxu0 0
          %827 = vmatpush2.bf16.xpose.msra.mxu0 0
          %828 = vmatprep.subr.bf16.mxu0 0
          %829 = vmatpush2.bf16.xpose.msra.mxu0 0
          %830 = vmatprep.subr.bf16.mxu0 0
          %831 = vmatpush2.bf16.xpose.msra.mxu0 0
          %832 = vmatprep.subr.bf16.mxu0 0
          %833 = vmatpush2.bf16.xpose.msra.mxu0 0
          %834 = vmatprep.subr.bf16.mxu0 0
          %835 = vmatpush2.bf16.xpose.msra.mxu0 0
          %836 = vmatprep.subr.bf16.mxu0 0
          %837 = vmatpush2.bf16.xpose.msra.mxu0 0
          %838 = vmatprep.mubr.bf16.mxu0 0
          %839 = vmatmul.mubr.bf16.gmra.mxu0 %v804
          %v840 = vpop.f32.mrf.mxu0
          %v841 = vadd.f32 %v801, %v840
          %v842 = vpop.f32.mrf.mxu0
          %v843 = vpop.f32.mrf.mxu0
          %v844 = vpop.f32.mrf.mxu0
          %845 = vdwg.mxu0
          %v846 = vpack.c.bf16 %v841, %v841
          %s847 = scalar_lea.vmem [#allocation2], 4
          %848 = vst.msk [vmem:[%s847] sm:$0xf] %vm727, %v846
          %s849 = scalar_lea.vmem %s9, 16
          %v850 = vld [vmem:[%s849] sm:$0xf]
          %v851 = vld [vmem:[%s849 + $0x4] sm:$0xf]
          %v852 = vld [vmem:[%s849 + $0x8] sm:$0xf]
          %v853 = vld [vmem:[%s849 + $0xc] sm:$0xf]
          %s854 = scalar_lea.vmem %s10, 1
          %v855 = vld [vmem:[%s854] sm:$0x1]
          %v857 = vlaneseq
          %v858 = vshrl.u32 %v857, 7
          %v859 = vsub.s32 0, %v858
          %v860 = vrot.slane %v855, %v859
          %v866 = vunpack.c.l.b16 %v850
          %v867 = vunpack.c.l.b16 %v851
          %v868 = vunpack.c.l.b16 %v852
          %v869 = vunpack.c.l.b16 %v853
          %v870 = vpack.c.b16 %v867, %v866
          %v871 = vpack.c.b16 %v869, %v868
          %874 = vmatprep.subr.bf16.mxu0 0
          %875 = vmatpush1.bf16.msra.mxu0 0
          %876 = vmatprep.subr.bf16.mxu0 0
          %877 = vmatpush1.bf16.msra.mxu0 0
          %878 = vmatprep.subr.bf16.mxu0 0
          %879 = vmatpush1.bf16.msra.mxu0 0
          %880 = vmatprep.subr.bf16.mxu0 0
          %881 = vmatpush1.bf16.msra.mxu0 0
          %882 = vmatprep.subr.bf16.mxu0 0
          %883 = vmatpush1.bf16.msra.mxu0 0
          %884 = vmatprep.subr.bf16.mxu0 0
          %885 = vmatpush1.bf16.msra.mxu0 0
          %886 = vmatprep.subr.bf16.mxu0 0
          %887 = vmatpush1.bf16.msra.mxu0 %v871
          %888 = vmatprep.subr.bf16.mxu0 0
          %889 = vmatpush1.bf16.msra.mxu0 %v870
          %890 = vmatprep.subr.bf16.mxu0 0
          %891 = vmatpush2.bf16.msra.mxu0 0
          %892 = vmatprep.subr.bf16.mxu0 0
          %893 = vmatpush2.bf16.msra.mxu0 0
          %894 = vmatprep.subr.bf16.mxu0 0
          %895 = vmatpush2.bf16.msra.mxu0 0
          %896 = vmatprep.subr.bf16.mxu0 0
          %897 = vmatpush2.bf16.msra.mxu0 0
          %898 = vmatprep.subr.bf16.mxu0 0
          %899 = vmatpush2.bf16.msra.mxu0 0
          %900 = vmatprep.subr.bf16.mxu0 0
          %901 = vmatpush2.bf16.msra.mxu0 0
          %902 = vmatprep.subr.bf16.mxu0 0
          %903 = vmatpush2.bf16.msra.mxu0 0
          %904 = vmatprep.subr.bf16.mxu0 0
          %905 = vmatpush2.bf16.msra.mxu0 0
          %906 = vmatprep.mubr.bf16.mxu0 0
          %907 = vmatmul.mubr.bf16.gmra.mxu0 %v684
          %v908 = vpop.f32.mrf.mxu0
          %v909 = vadd.f32 %v860, %v908
          %v910 = vpop.f32.mrf.mxu0
          %v911 = vpop.f32.mrf.mxu0
          %v912 = vpop.f32.mrf.mxu0
          %913 = vdwg.mxu0
          %v914 = vpack.c.bf16 %v909, %v909
          %s915 = scalar_lea.vmem [#allocation3], 4
          %916 = vst.msk [vmem:[%s915] sm:$0xf] %vm727, %v914
          %s917 = scalar_lea.vmem %s7, 8
          %v918 = vld [vmem:[%s917] sm:$0xf]
          %s919 = scalar_lea.vmem %s8, 16
          %v920 = vld [vmem:[%s919] sm:$0xff]
          %922 = vset.pattern.permute.xlu0 0
          %923 = vperm.xlu0 %922, %v920
          %v924 = vpop.permute.xlu0 %923
          %v927 = vsel %vm679, %v918, 0
          %929 = vmatprep.subr.bf16.mxu0 0
          %930 = vmatpush1.bf16.xpose.msra.mxu0 0
          %931 = vmatprep.subr.bf16.mxu0 0
          %932 = vmatpush1.bf16.xpose.msra.mxu0 0
          %933 = vmatprep.subr.bf16.mxu0 0
          %934 = vmatpush1.bf16.xpose.msra.mxu0 0
          %935 = vmatprep.subr.bf16.mxu0 0
          %936 = vmatpush1.bf16.xpose.msra.mxu0 0
          %937 = vmatprep.subr.bf16.mxu0 0
          %938 = vmatpush1.bf16.xpose.msra.mxu0 0
          %939 = vmatprep.subr.bf16.mxu0 0
          %940 = vmatpush1.bf16.xpose.msra.mxu0 0
          %941 = vmatprep.subr.bf16.mxu0 0
          %942 = vmatpush1.bf16.xpose.msra.mxu0 0
          %943 = vmatprep.subr.bf16.mxu0 0
          %944 = vmatpush1.bf16.xpose.msra.mxu0 %v684
          %945 = vmatprep.subr.bf16.mxu0 0
          %946 = vmatpush2.bf16.xpose.msra.mxu0 0
          %947 = vmatprep.subr.bf16.mxu0 0
          %948 = vmatpush2.bf16.xpose.msra.mxu0 0
          %949 = vmatprep.subr.bf16.mxu0 0
          %950 = vmatpush2.bf16.xpose.msra.mxu0 0
          %951 = vmatprep.subr.bf16.mxu0 0
          %952 = vmatpush2.bf16.xpose.msra.mxu0 0
          %953 = vmatprep.subr.bf16.mxu0 0
          %954 = vmatpush2.bf16.xpose.msra.mxu0 0
          %955 = vmatprep.subr.bf16.mxu0 0
          %956 = vmatpush2.bf16.xpose.msra.mxu0 0
          %957 = vmatprep.subr.bf16.mxu0 0
          %958 = vmatpush2.bf16.xpose.msra.mxu0 0
          %959 = vmatprep.subr.bf16.mxu0 0
          %960 = vmatpush2.bf16.xpose.msra.mxu0 0
          %961 = vmatprep.mubr.bf16.mxu0 0
          %962 = vmatmul.mubr.bf16.gmra.mxu0 %v927
          %v963 = vpop.f32.mrf.mxu0
          %v964 = vadd.f32 %v924, %v963
          %v965 = vpop.f32.mrf.mxu0
          %v966 = vpop.f32.mrf.mxu0
          %v967 = vpop.f32.mrf.mxu0
          %968 = vdwg.mxu0
          %v969 = vpack.c.bf16 %v964, %v964
          %s970 = scalar_lea.vmem [#allocation2], 8
          %971 = vst.msk [vmem:[%s970] sm:$0xf] %vm727, %v969
          %s972 = scalar_lea.vmem %s9, 32
          %v973 = vld [vmem:[%s972] sm:$0xf]
          %v974 = vld [vmem:[%s972 + $0x4] sm:$0xf]
          %v975 = vld [vmem:[%s972 + $0x8] sm:$0xf]
          %v976 = vld [vmem:[%s972 + $0xc] sm:$0xf]
          %s977 = scalar_lea.vmem %s10, 2
          %v978 = vld [vmem:[%s977] sm:$0x1]
          %v980 = vlaneseq
          %v981 = vshrl.u32 %v980, 7
          %v982 = vsub.s32 0, %v981
          %v983 = vrot.slane %v978, %v982
          %v989 = vunpack.c.l.b16 %v973
          %v990 = vunpack.c.l.b16 %v974
          %v991 = vunpack.c.l.b16 %v975
          %v992 = vunpack.c.l.b16 %v976
          %v993 = vpack.c.b16 %v990, %v989
          %v994 = vpack.c.b16 %v992, %v991
          %997 = vmatprep.subr.bf16.mxu0 0
          %998 = vmatpush1.bf16.msra.mxu0 0
          %999 = vmatprep.subr.bf16.mxu0 0
          %1000 = vmatpush1.bf16.msra.mxu0 0
          %1001 = vmatprep.subr.bf16.mxu0 0
          %1002 = vmatpush1.bf16.msra.mxu0 0
          %1003 = vmatprep.subr.bf16.mxu0 0
          %1004 = vmatpush1.bf16.msra.mxu0 0
          %1005 = vmatprep.subr.bf16.mxu0 0
          %1006 = vmatpush1.bf16.msra.mxu0 0
          %1007 = vmatprep.subr.bf16.mxu0 0
          %1008 = vmatpush1.bf16.msra.mxu0 0
          %1009 = vmatprep.subr.bf16.mxu0 0
          %1010 = vmatpush1.bf16.msra.mxu0 %v994
          %1011 = vmatprep.subr.bf16.mxu0 0
          %1012 = vmatpush1.bf16.msra.mxu0 %v993
          %1013 = vmatprep.subr.bf16.mxu0 0
          %1014 = vmatpush2.bf16.msra.mxu0 0
          %1015 = vmatprep.subr.bf16.mxu0 0
          %1016 = vmatpush2.bf16.msra.mxu0 0
          %1017 = vmatprep.subr.bf16.mxu0 0
          %1018 = vmatpush2.bf16.msra.mxu0 0
          %1019 = vmatprep.subr.bf16.mxu0 0
          %1020 = vmatpush2.bf16.msra.mxu0 0
          %1021 = vmatprep.subr.bf16.mxu0 0
          %1022 = vmatpush2.bf16.msra.mxu0 0
          %1023 = vmatprep.subr.bf16.mxu0 0
          %1024 = vmatpush2.bf16.msra.mxu0 0
          %1025 = vmatprep.subr.bf16.mxu0 0
          %1026 = vmatpush2.bf16.msra.mxu0 0
          %1027 = vmatprep.subr.bf16.mxu0 0
          %1028 = vmatpush2.bf16.msra.mxu0 0
          %1029 = vmatprep.mubr.bf16.mxu0 0
          %1030 = vmatmul.mubr.bf16.gmra.mxu0 %v684
          %v1031 = vpop.f32.mrf.mxu0
          %v1032 = vadd.f32 %v983, %v1031
          %v1033 = vpop.f32.mrf.mxu0
          %v1034 = vpop.f32.mrf.mxu0
          %v1035 = vpop.f32.mrf.mxu0
          %1036 = vdwg.mxu0
          %v1037 = vpack.c.bf16 %v1032, %v1032
          %s1038 = scalar_lea.vmem [#allocation3], 8
          %1039 = vst.msk [vmem:[%s1038] sm:$0xf] %vm727, %v1037
          %s1040 = scalar_lea.vmem %s7, 12
          %v1041 = vld [vmem:[%s1040] sm:$0xf]
          %s1042 = scalar_lea.vmem %s8, 24
          %v1043 = vld [vmem:[%s1042] sm:$0xff]
          %1045 = vset.pattern.permute.xlu0 0
          %1046 = vperm.xlu0 %1045, %v1043
          %v1047 = vpop.permute.xlu0 %1046
          %v1050 = vsel %vm679, %v1041, 0
          %1052 = vmatprep.subr.bf16.mxu0 0
          %1053 = vmatpush1.bf16.xpose.msra.mxu0 0
          %1054 = vmatprep.subr.bf16.mxu0 0
          %1055 = vmatpush1.bf16.xpose.msra.mxu0 0
          %1056 = vmatprep.subr.bf16.mxu0 0
          %1057 = vmatpush1.bf16.xpose.msra.mxu0 0
          %1058 = vmatprep.subr.bf16.mxu0 0
          %1059 = vmatpush1.bf16.xpose.msra.mxu0 0
          %1060 = vmatprep.subr.bf16.mxu0 0
          %1061 = vmatpush1.bf16.xpose.msra.mxu0 0
          %1062 = vmatprep.subr.bf16.mxu0 0
          %1063 = vmatpush1.bf16.xpose.msra.mxu0 0
          %1064 = vmatprep.subr.bf16.mxu0 0
          %1065 = vmatpush1.bf16.xpose.msra.mxu0 0
          %1066 = vmatprep.subr.bf16.mxu0 0
          %1067 = vmatpush1.bf16.xpose.msra.mxu0 %v684
          %1068 = vmatprep.subr.bf16.mxu0 0
          %1069 = vmatpush2.bf16.xpose.msra.mxu0 0
          %1070 = vmatprep.subr.bf16.mxu0 0
          %1071 = vmatpush2.bf16.xpose.msra.mxu0 0
          %1072 = vmatprep.subr.bf16.mxu0 0
          %1073 = vmatpush2.bf16.xpose.msra.mxu0 0
          %1074 = vmatprep.subr.bf16.mxu0 0
          %1075 = vmatpush2.bf16.xpose.msra.mxu0 0
          %1076 = vmatprep.subr.bf16.mxu0 0
          %1077 = vmatpush2.bf16.xpose.msra.mxu0 0
          %1078 = vmatprep.subr.bf16.mxu0 0
          %1079 = vmatpush2.bf16.xpose.msra.mxu0 0
          %1080 = vmatprep.subr.bf16.mxu0 0
          %1081 = vmatpush2.bf16.xpose.msra.mxu0 0
          %1082 = vmatprep.subr.bf16.mxu0 0
          %1083 = vmatpush2.bf16.xpose.msra.mxu0 0
          %1084 = vmatprep.mubr.bf16.mxu0 0
          %1085 = vmatmul.mubr.bf16.gmra.mxu0 %v1050
          %v1086 = vpop.f32.mrf.mxu0
          %v1087 = vadd.f32 %v1047, %v1086
          %v1088 = vpop.f32.mrf.mxu0
          %v1089 = vpop.f32.mrf.mxu0
          %v1090 = vpop.f32.mrf.mxu0
          %1091 = vdwg.mxu0
          %v1092 = vpack.c.bf16 %v1087, %v1087
          %s1093 = scalar_lea.vmem [#allocation2], 12
          %1094 = vst.msk [vmem:[%s1093] sm:$0xf] %vm727, %v1092
          %s1095 = scalar_lea.vmem %s9, 48
          %v1096 = vld [vmem:[%s1095] sm:$0xf]
          %v1097 = vld [vmem:[%s1095 + $0x4] sm:$0xf]
          %v1098 = vld [vmem:[%s1095 + $0x8] sm:$0xf]
          %v1099 = vld [vmem:[%s1095 + $0xc] sm:$0xf]
          %s1100 = scalar_lea.vmem %s10, 3
          %v1101 = vld [vmem:[%s1100] sm:$0x1]
          %v1103 = vlaneseq
          %v1104 = vshrl.u32 %v1103, 7
          %v1105 = vsub.s32 0, %v1104
          %v1106 = vrot.slane %v1101, %v1105
          %v1112 = vunpack.c.l.b16 %v1096
          %v1113 = vunpack.c.l.b16 %v1097
          %v1114 = vunpack.c.l.b16 %v1098
          %v1115 = vunpack.c.l.b16 %v1099
          %v1116 = vpack.c.b16 %v1113, %v1112
          %v1117 = vpack.c.b16 %v1115, %v1114
          %1120 = vmatprep.subr.bf16.mxu0 0
          %1121 = vmatpush1.bf16.msra.mxu0 0
          %1122 = vmatprep.subr.bf16.mxu0 0
          %1123 = vmatpush1.bf16.msra.mxu0 0
          %1124 = vmatprep.subr.bf16.mxu0 0
          %1125 = vmatpush1.bf16.msra.mxu0 0
          %1126 = vmatprep.subr.bf16.mxu0 0
          %1127 = vmatpush1.bf16.msra.mxu0 0
          %1128 = vmatprep.subr.bf16.mxu0 0
          %1129 = vmatpush1.bf16.msra.mxu0 0
          %1130 = vmatprep.subr.bf16.mxu0 0
          %1131 = vmatpush1.bf16.msra.mxu0 0
          %1132 = vmatprep.subr.bf16.mxu0 0
          %1133 = vmatpush1.bf16.msra.mxu0 %v1117
          %1134 = vmatprep.subr.bf16.mxu0 0
          %1135 = vmatpush1.bf16.msra.mxu0 %v1116
          %1136 = vmatprep.subr.bf16.mxu0 0
          %1137 = vmatpush2.bf16.msra.mxu0 0
          %1138 = vmatprep.subr.bf16.mxu0 0
          %1139 = vmatpush2.bf16.msra.mxu0 0
          %1140 = vmatprep.subr.bf16.mxu0 0
          %1141 = vmatpush2.bf16.msra.mxu0 0
          %1142 = vmatprep.subr.bf16.mxu0 0
          %1143 = vmatpush2.bf16.msra.mxu0 0
          %1144 = vmatprep.subr.bf16.mxu0 0
          %1145 = vmatpush2.bf16.msra.mxu0 0
          %1146 = vmatprep.subr.bf16.mxu0 0
          %1147 = vmatpush2.bf16.msra.mxu0 0
          %1148 = vmatprep.subr.bf16.mxu0 0
          %1149 = vmatpush2.bf16.msra.mxu0 0
          %1150 = vmatprep.subr.bf16.mxu0 0
          %1151 = vmatpush2.bf16.msra.mxu0 0
          %1152 = vmatprep.mubr.bf16.mxu0 0
          %1153 = vmatmul.mubr.bf16.gmra.mxu0 %v684
          %v1154 = vpop.f32.mrf.mxu0
          %v1155 = vadd.f32 %v1106, %v1154
          %v1156 = vpop.f32.mrf.mxu0
          %v1157 = vpop.f32.mrf.mxu0
          %v1158 = vpop.f32.mrf.mxu0
          %1159 = vdwg.mxu0
          %v1160 = vpack.c.bf16 %v1155, %v1155
          %s1161 = scalar_lea.vmem [#allocation3], 12
          %1162 = vst.msk [vmem:[%s1161] sm:$0xf] %vm727, %v1160
        $region104: #{tpu_custom_call.1} parent=95 // pred_fallthru
          _
        %v1163 = vld [vmem:[%s597] sm:$0xff]
        %v1164 = vld [vmem:[%s665] sm:$0x1]
        %v1165 = vunpack.c.l.bf16 %v1164
        %v1166 = vld [vmem:[%s3] sm:$0x1]
        %v1167 = vld [vmem:[%s4] sm:$0x1]
        %vm1168 = vcmask 261120
        %v1169 = vsel %vm1168, %v1163, 0.0
        %1170 = vadd.xlane.f32.xlu0 %v1169
        %v1171 = vpop.xlane.xlu0 %1170
        %v1172 = vrcp.pop 32.0
        %v1173 = vmul.f32 %v1171, %v1172
        %v1174 = vmul.f32 %v1163, %v1163
        %v1175 = vsel %vm1168, %v1174, 0.0
        %1176 = vadd.xlane.f32.xlu0 %v1175
        %v1177 = vpop.xlane.xlu0 %1176
        %v1178 = vmul.f32 %v1177, %v1172
        %v1179 = vmul.f32 %v1173, %v1173
        %v1180 = vsub.f32 %v1178, %v1179
        %v1181 = vsub.f32 %v1163, %v1173
        %v1182 = vadd.f32 %v1180, 1e-05
        %v1183 = vrsqrt.pop %v1182
        %v1184 = vmul.f32 %v1181, %v1183
        %v1186 = vlaneseq
        %v1187 = vshrl.u32 %v1186, 7
        %v1188 = vsub.s32 0, %v1187
        %v1189 = vrot.slane %v1166, %v1188
        %v1191 = vmul.f32 %v1184, %v1189
        %v1193 = vlaneseq
        %v1194 = vshrl.u32 %v1193, 7
        %v1195 = vsub.s32 0, %v1194
        %v1196 = vrot.slane %v1167, %v1195
        %v1198 = vadd.f32 %v1191, %v1196
        %v1199 = vpack.c.bf16 %v1198, %v1198
        %v1200 = vld [vmem:[%s5] sm:$0xf]
        %v1201 = vld [vmem:[%s5 + $0x4] sm:$0xf]
        %v1202 = vld [vmem:[%s5 + $0x8] sm:$0xf]
        %v1203 = vld [vmem:[%s5 + $0xc] sm:$0xf]
        %v1204 = vld [vmem:[%s6] sm:$0x1]
        %v1206 = vlaneseq
        %v1207 = vshrl.u32 %v1206, 7
        %v1208 = vsub.s32 0, %v1207
        %v1209 = vrot.slane %v1204, %v1208
        %v1215 = vunpack.c.l.b16 %v1200
        %v1216 = vunpack.c.l.b16 %v1201
        %v1217 = vunpack.c.l.b16 %v1202
        %v1218 = vunpack.c.l.b16 %v1203
        %v1219 = vpack.c.b16 %v1216, %v1215
        %v1220 = vpack.c.b16 %v1218, %v1217
        %v1224 = vsel %vm1168, %v1199, 0
        %1226 = vmatprep.subr.bf16.mxu0 0
        %1227 = vmatpush1.bf16.msra.mxu0 0
        %1228 = vmatprep.subr.bf16.mxu0 0
        %1229 = vmatpush1.bf16.msra.mxu0 0
        %1230 = vmatprep.subr.bf16.mxu0 0
        %1231 = vmatpush1.bf16.msra.mxu0 0
        %1232 = vmatprep.subr.bf16.mxu0 0
        %1233 = vmatpush1.bf16.msra.mxu0 0
        %1234 = vmatprep.subr.bf16.mxu0 0
        %1235 = vmatpush1.bf16.msra.mxu0 0
        %1236 = vmatprep.subr.bf16.mxu0 0
        %1237 = vmatpush1.bf16.msra.mxu0 0
        %1238 = vmatprep.subr.bf16.mxu0 0
        %1239 = vmatpush1.bf16.msra.mxu0 %v1220
        %1240 = vmatprep.subr.bf16.mxu0 0
        %1241 = vmatpush1.bf16.msra.mxu0 %v1219
        %1242 = vmatprep.subr.bf16.mxu0 0
        %1243 = vmatpush2.bf16.msra.mxu0 0
        %1244 = vmatprep.subr.bf16.mxu0 0
        %1245 = vmatpush2.bf16.msra.mxu0 0
        %1246 = vmatprep.subr.bf16.mxu0 0
        %1247 = vmatpush2.bf16.msra.mxu0 0
        %1248 = vmatprep.subr.bf16.mxu0 0
        %1249 = vmatpush2.bf16.msra.mxu0 0
        %1250 = vmatprep.subr.bf16.mxu0 0
        %1251 = vmatpush2.bf16.msra.mxu0 0
        %1252 = vmatprep.subr.bf16.mxu0 0
        %1253 = vmatpush2.bf16.msra.mxu0 0
        %1254 = vmatprep.subr.bf16.mxu0 0
        %1255 = vmatpush2.bf16.msra.mxu0 0
        %1256 = vmatprep.subr.bf16.mxu0 0
        %1257 = vmatpush2.bf16.msra.mxu0 0
        %1258 = vmatprep.mubr.bf16.mxu0 0
        %1259 = vmatmul.mubr.bf16.gmra.mxu0 %v1224
        %v1260 = vpop.f32.mrf.mxu0
        %v1261 = vadd.f32 %v1209, %v1260
        %v1262 = vpop.f32.mrf.mxu0
        %v1263 = vpop.f32.mrf.mxu0
        %v1264 = vpop.f32.mrf.mxu0
        %1265 = vdwg.mxu0
        %v1266 = vpack.c.bf16 %v1261, %v1261
        %v1267 = vld [vmem:[#allocation2] sm:$0xf]
        %v1268 = vlaneseq
        %v1269 = vshrl.u32 %v1268, 7
        %v1270 = vsub.s32 0, %v1269
        %v1271 = vrot.slane %v1165, %v1270
        %vm1272 = vcmask 64512
        %v1274 = vsel %vm1272, %v1266, 0
        %vm1276 = vcmask 1043456
        %v1278 = vsel %vm1276, %v1267, 0
        %1280 = vmatprep.subr.bf16.mxu0 0
        %1281 = vmatpush1.bf16.msra.mxu0 0
        %1282 = vmatprep.subr.bf16.mxu0 0
        %1283 = vmatpush1.bf16.msra.mxu0 0
        %1284 = vmatprep.subr.bf16.mxu0 0
        %1285 = vmatpush1.bf16.msra.mxu0 0
        %1286 = vmatprep.subr.bf16.mxu0 0
        %1287 = vmatpush1.bf16.msra.mxu0 0
        %1288 = vmatprep.subr.bf16.mxu0 0
        %1289 = vmatpush1.bf16.msra.mxu0 0
        %1290 = vmatprep.subr.bf16.mxu0 0
        %1291 = vmatpush1.bf16.msra.mxu0 0
        %1292 = vmatprep.subr.bf16.mxu0 0
        %1293 = vmatpush1.bf16.msra.mxu0 0
        %1294 = vmatprep.subr.bf16.mxu0 0
        %1295 = vmatpush1.bf16.msra.mxu0 %v1278
        %1296 = vmatprep.subr.bf16.mxu0 0
        %1297 = vmatpush2.bf16.msra.mxu0 0
        %1298 = vmatprep.subr.bf16.mxu0 0
        %1299 = vmatpush2.bf16.msra.mxu0 0
        %1300 = vmatprep.subr.bf16.mxu0 0
        %1301 = vmatpush2.bf16.msra.mxu0 0
        %1302 = vmatprep.subr.bf16.mxu0 0
        %1303 = vmatpush2.bf16.msra.mxu0 0
        %1304 = vmatprep.subr.bf16.mxu0 0
        %1305 = vmatpush2.bf16.msra.mxu0 0
        %1306 = vmatprep.subr.bf16.mxu0 0
        %1307 = vmatpush2.bf16.msra.mxu0 0
        %1308 = vmatprep.subr.bf16.mxu0 0
        %1309 = vmatpush2.bf16.msra.mxu0 0
        %1310 = vmatprep.subr.bf16.mxu0 0
        %1311 = vmatpush2.bf16.msra.mxu0 0
        %1312 = vmatprep.mubr.bf16.mxu0 0
        %1313 = vmatmul.mubr.bf16.gmra.mxu0 %v1274
        %v1314 = vpop.f32.mrf.mxu0
        %v1315 = vadd.f32 %v1271, %v1314
        %v1316 = vpop.f32.mrf.mxu0
        %v1317 = vpop.f32.mrf.mxu0
        %v1318 = vpop.f32.mrf.mxu0
        %1319 = vdwg.mxu0
        %v1320 = vsel %vm1272, %v1315, -inf
        %1321 = vmax.xlane.f32.xlu0 %v1320
        %v1322 = vpop.xlane.xlu0 %1321
        %v1323 = vsub.f32 %v1315, %v1322
        %v1324 = vmul.f32 %v1323, 1.442695
        %v1325 = vpow.pop %v1324
        %v1326 = vsel %vm1272, %v1325, 0.0
        %1327 = vadd.xlane.f32.xlu0 %v1326
        %v1328 = vpop.xlane.xlu0 %1327
        %v1329 = vrcp.pop %v1328
        %v1330 = vpack.c.bf16 %v1325, %v1325
        %v1331 = vld [vmem:[#allocation3] sm:$0xf]
        %v1333 = vsel %vm1272, %v1330, 0
        %v1336 = vsel %vm1276, %v1331, 0
        %1338 = vmatprep.subr.bf16.mxu0 0
        %1339 = vmatpush1.bf16.msra.mxu0 0
        %1340 = vmatprep.subr.bf16.mxu0 0
        %1341 = vmatpush1.bf16.msra.mxu0 0
        %1342 = vmatprep.subr.bf16.mxu0 0
        %1343 = vmatpush1.bf16.msra.mxu0 0
        %1344 = vmatprep.subr.bf16.mxu0 0
        %1345 = vmatpush1.bf16.msra.mxu0 0
        %1346 = vmatprep.subr.bf16.mxu0 0
        %1347 = vmatpush1.bf16.msra.mxu0 0
        %1348 = vmatprep.subr.bf16.mxu0 0
        %1349 = vmatpush1.bf16.msra.mxu0 0
        %1350 = vmatprep.subr.bf16.mxu0 0
        %1351 = vmatpush1.bf16.msra.mxu0 0
        %1352 = vmatprep.subr.bf16.mxu0 0
        %1353 = vmatpush1.bf16.msra.mxu0 %v1336
        %1354 = vmatprep.subr.bf16.mxu0 0
        %1355 = vmatpush2.bf16.msra.mxu0 0
        %1356 = vmatprep.subr.bf16.mxu0 0
        %1357 = vmatpush2.bf16.msra.mxu0 0
        %1358 = vmatprep.subr.bf16.mxu0 0
        %1359 = vmatpush2.bf16.msra.mxu0 0
        %1360 = vmatprep.subr.bf16.mxu0 0
        %1361 = vmatpush2.bf16.msra.mxu0 0
        %1362 = vmatprep.subr.bf16.mxu0 0
        %1363 = vmatpush2.bf16.msra.mxu0 0
        %1364 = vmatprep.subr.bf16.mxu0 0
        %1365 = vmatpush2.bf16.msra.mxu0 0
        %1366 = vmatprep.subr.bf16.mxu0 0
        %1367 = vmatpush2.bf16.msra.mxu0 0
        %1368 = vmatprep.subr.bf16.mxu0 0
        %1369 = vmatpush2.bf16.msra.mxu0 0
        %1370 = vmatprep.mubr.bf16.mxu0 0
        %1371 = vmatmul.mubr.bf16.gmra.mxu0 %v1333
        %v1372 = vpop.f32.mrf.mxu0
        %v1373 = vadd.f32 0.0, %v1372
        %v1374 = vpop.f32.mrf.mxu0
        %v1375 = vpop.f32.mrf.mxu0
        %v1376 = vpop.f32.mrf.mxu0
        %1377 = vdwg.mxu0
        %v1378 = vmul.f32 %v1373, %v1329
        %v1379 = vpack.c.bf16 %v1378, %v1378
        %v1380 = vld [vmem:[%s11] sm:$0xf]
        %s1381 = scalar_lea.vmem %s5, 16
        %v1382 = vld [vmem:[%s1381] sm:$0xf]
        %v1383 = vld [vmem:[%s1381 + $0x4] sm:$0xf]
        %v1384 = vld [vmem:[%s1381 + $0x8] sm:$0xf]
        %v1385 = vld [vmem:[%s1381 + $0xc] sm:$0xf]
        %s1386 = scalar_lea.vmem %s6, 1
        %v1387 = vld [vmem:[%s1386] sm:$0x1]
        %v1389 = vlaneseq
        %v1390 = vshrl.u32 %v1389, 7
        %v1391 = vsub.s32 0, %v1390
        %v1392 = vrot.slane %v1387, %v1391
        %v1398 = vunpack.c.l.b16 %v1382
        %v1399 = vunpack.c.l.b16 %v1383
        %v1400 = vunpack.c.l.b16 %v1384
        %v1401 = vunpack.c.l.b16 %v1385
        %v1402 = vpack.c.b16 %v1399, %v1398
        %v1403 = vpack.c.b16 %v1401, %v1400
        %1406 = vmatprep.subr.bf16.mxu0 0
        %1407 = vmatpush1.bf16.msra.mxu0 0
        %1408 = vmatprep.subr.bf16.mxu0 0
        %1409 = vmatpush1.bf16.msra.mxu0 0
        %1410 = vmatprep.subr.bf16.mxu0 0
        %1411 = vmatpush1.bf16.msra.mxu0 0
        %1412 = vmatprep.subr.bf16.mxu0 0
        %1413 = vmatpush1.bf16.msra.mxu0 0
        %1414 = vmatprep.subr.bf16.mxu0 0
        %1415 = vmatpush1.bf16.msra.mxu0 0
        %1416 = vmatprep.subr.bf16.mxu0 0
        %1417 = vmatpush1.bf16.msra.mxu0 0
        %1418 = vmatprep.subr.bf16.mxu0 0
        %1419 = vmatpush1.bf16.msra.mxu0 %v1403
        %1420 = vmatprep.subr.bf16.mxu0 0
        %1421 = vmatpush1.bf16.msra.mxu0 %v1402
        %1422 = vmatprep.subr.bf16.mxu0 0
        %1423 = vmatpush2.bf16.msra.mxu0 0
        %1424 = vmatprep.subr.bf16.mxu0 0
        %1425 = vmatpush2.bf16.msra.mxu0 0
        %1426 = vmatprep.subr.bf16.mxu0 0
        %1427 = vmatpush2.bf16.msra.mxu0 0
        %1428 = vmatprep.subr.bf16.mxu0 0
        %1429 = vmatpush2.bf16.msra.mxu0 0
        %1430 = vmatprep.subr.bf16.mxu0 0
        %1431 = vmatpush2.bf16.msra.mxu0 0
        %1432 = vmatprep.subr.bf16.mxu0 0
        %1433 = vmatpush2.bf16.msra.mxu0 0
        %1434 = vmatprep.subr.bf16.mxu0 0
        %1435 = vmatpush2.bf16.msra.mxu0 0
        %1436 = vmatprep.subr.bf16.mxu0 0
        %1437 = vmatpush2.bf16.msra.mxu0 0
        %1438 = vmatprep.mubr.bf16.mxu0 0
        %1439 = vmatmul.mubr.bf16.gmra.mxu0 %v1224
        %v1440 = vpop.f32.mrf.mxu0
        %v1441 = vadd.f32 %v1392, %v1440
        %v1442 = vpop.f32.mrf.mxu0
        %v1443 = vpop.f32.mrf.mxu0
        %v1444 = vpop.f32.mrf.mxu0
        %1445 = vdwg.mxu0
        %v1446 = vpack.c.bf16 %v1441, %v1441
        %s1447 = scalar_lea.vmem [#allocation2], 4
        %v1448 = vld [vmem:[%s1447] sm:$0xf]
        %v1450 = vsel %vm1272, %v1446, 0
        %v1453 = vsel %vm1276, %v1448, 0
        %1455 = vmatprep.subr.bf16.mxu0 0
        %1456 = vmatpush1.bf16.msra.mxu0 0
        %1457 = vmatprep.subr.bf16.mxu0 0
        %1458 = vmatpush1.bf16.msra.mxu0 0
        %1459 = vmatprep.subr.bf16.mxu0 0
        %1460 = vmatpush1.bf16.msra.mxu0 0
        %1461 = vmatprep.subr.bf16.mxu0 0
        %1462 = vmatpush1.bf16.msra.mxu0 0
        %1463 = vmatprep.subr.bf16.mxu0 0
        %1464 = vmatpush1.bf16.msra.mxu0 0
        %1465 = vmatprep.subr.bf16.mxu0 0
        %1466 = vmatpush1.bf16.msra.mxu0 0
        %1467 = vmatprep.subr.bf16.mxu0 0
        %1468 = vmatpush1.bf16.msra.mxu0 0
        %1469 = vmatprep.subr.bf16.mxu0 0
        %1470 = vmatpush1.bf16.msra.mxu0 %v1453
        %1471 = vmatprep.subr.bf16.mxu0 0
        %1472 = vmatpush2.bf16.msra.mxu0 0
        %1473 = vmatprep.subr.bf16.mxu0 0
        %1474 = vmatpush2.bf16.msra.mxu0 0
        %1475 = vmatprep.subr.bf16.mxu0 0
        %1476 = vmatpush2.bf16.msra.mxu0 0
        %1477 = vmatprep.subr.bf16.mxu0 0
        %1478 = vmatpush2.bf16.msra.mxu0 0
        %1479 = vmatprep.subr.bf16.mxu0 0
        %1480 = vmatpush2.bf16.msra.mxu0 0
        %1481 = vmatprep.subr.bf16.mxu0 0
        %1482 = vmatpush2.bf16.msra.mxu0 0
        %1483 = vmatprep.subr.bf16.mxu0 0
        %1484 = vmatpush2.bf16.msra.mxu0 0
        %1485 = vmatprep.subr.bf16.mxu0 0
        %1486 = vmatpush2.bf16.msra.mxu0 0
        %1487 = vmatprep.mubr.bf16.mxu0 0
        %1488 = vmatmul.mubr.bf16.gmra.mxu0 %v1450
        %v1489 = vpop.f32.mrf.mxu0
        %v1490 = vadd.f32 %v1271, %v1489
        %v1491 = vpop.f32.mrf.mxu0
        %v1492 = vpop.f32.mrf.mxu0
        %v1493 = vpop.f32.mrf.mxu0
        %1494 = vdwg.mxu0
        %v1495 = vsel %vm1272, %v1490, -inf
        %1496 = vmax.xlane.f32.xlu0 %v1495
        %v1497 = vpop.xlane.xlu0 %1496
        %v1498 = vsub.f32 %v1490, %v1497
        %v1499 = vmul.f32 %v1498, 1.442695
        %v1500 = vpow.pop %v1499
        %v1501 = vsel %vm1272, %v1500, 0.0
        %1502 = vadd.xlane.f32.xlu0 %v1501
        %v1503 = vpop.xlane.xlu0 %1502
        %v1504 = vrcp.pop %v1503
        %v1505 = vpack.c.bf16 %v1500, %v1500
        %s1506 = scalar_lea.vmem [#allocation3], 4
        %v1507 = vld [vmem:[%s1506] sm:$0xf]
        %v1509 = vsel %vm1272, %v1505, 0
        %v1512 = vsel %vm1276, %v1507, 0
        %1514 = vmatprep.subr.bf16.mxu0 0
        %1515 = vmatpush1.bf16.msra.mxu0 0
        %1516 = vmatprep.subr.bf16.mxu0 0
        %1517 = vmatpush1.bf16.msra.mxu0 0
        %1518 = vmatprep.subr.bf16.mxu0 0
        %1519 = vmatpush1.bf16.msra.mxu0 0
        %1520 = vmatprep.subr.bf16.mxu0 0
        %1521 = vmatpush1.bf16.msra.mxu0 0
        %1522 = vmatprep.subr.bf16.mxu0 0
        %1523 = vmatpush1.bf16.msra.mxu0 0
        %1524 = vmatprep.subr.bf16.mxu0 0
        %1525 = vmatpush1.bf16.msra.mxu0 0
        %1526 = vmatprep.subr.bf16.mxu0 0
        %1527 = vmatpush1.bf16.msra.mxu0 0
        %1528 = vmatprep.subr.bf16.mxu0 0
        %1529 = vmatpush1.bf16.msra.mxu0 %v1512
        %1530 = vmatprep.subr.bf16.mxu0 0
        %1531 = vmatpush2.bf16.msra.mxu0 0
        %1532 = vmatprep.subr.bf16.mxu0 0
        %1533 = vmatpush2.bf16.msra.mxu0 0
        %1534 = vmatprep.subr.bf16.mxu0 0
        %1535 = vmatpush2.bf16.msra.mxu0 0
        %1536 = vmatprep.subr.bf16.mxu0 0
        %1537 = vmatpush2.bf16.msra.mxu0 0
        %1538 = vmatprep.subr.bf16.mxu0 0
        %1539 = vmatpush2.bf16.msra.mxu0 0
        %1540 = vmatprep.subr.bf16.mxu0 0
        %1541 = vmatpush2.bf16.msra.mxu0 0
        %1542 = vmatprep.subr.bf16.mxu0 0
        %1543 = vmatpush2.bf16.msra.mxu0 0
        %1544 = vmatprep.subr.bf16.mxu0 0
        %1545 = vmatpush2.bf16.msra.mxu0 0
        %1546 = vmatprep.mubr.bf16.mxu0 0
        %1547 = vmatmul.mubr.bf16.gmra.mxu0 %v1509
        %v1548 = vpop.f32.mrf.mxu0
        %v1549 = vadd.f32 0.0, %v1548
        %v1550 = vpop.f32.mrf.mxu0
        %v1551 = vpop.f32.mrf.mxu0
        %v1552 = vpop.f32.mrf.mxu0
        %1553 = vdwg.mxu0
        %v1554 = vmul.f32 %v1549, %v1504
        %v1555 = vpack.c.bf16 %v1554, %v1554
        %s1556 = scalar_lea.vmem %s11, 4
        %v1557 = vld [vmem:[%s1556] sm:$0xf]
        %v1559 = vsel %vm1272, %v1555, 0
        %v1562 = vsel %vm1276, %v1557, 0
        %1564 = vmatprep.subr.bf16.mxu0 0
        %1565 = vmatpush1.bf16.msra.mxu0 0
        %1566 = vmatprep.subr.bf16.mxu0 0
        %1567 = vmatpush1.bf16.msra.mxu0 0
        %1568 = vmatprep.subr.bf16.mxu0 0
        %1569 = vmatpush1.bf16.msra.mxu0 0
        %1570 = vmatprep.subr.bf16.mxu0 0
        %1571 = vmatpush1.bf16.msra.mxu0 0
        %1572 = vmatprep.subr.bf16.mxu0 0
        %1573 = vmatpush1.bf16.msra.mxu0 0
        %1574 = vmatprep.subr.bf16.mxu0 0
        %1575 = vmatpush1.bf16.msra.mxu0 0
        %1576 = vmatprep.subr.bf16.mxu0 0
        %1577 = vmatpush1.bf16.msra.mxu0 0
        %1578 = vmatprep.subr.bf16.mxu0 0
        %1579 = vmatpush1.bf16.msra.mxu0 %v1562
        %1580 = vmatprep.subr.bf16.mxu0 0
        %1581 = vmatpush2.bf16.msra.mxu0 0
        %1582 = vmatprep.subr.bf16.mxu0 0
        %1583 = vmatpush2.bf16.msra.mxu0 0
        %1584 = vmatprep.subr.bf16.mxu0 0
        %1585 = vmatpush2.bf16.msra.mxu0 0
        %1586 = vmatprep.subr.bf16.mxu0 0
        %1587 = vmatpush2.bf16.msra.mxu0 0
        %1588 = vmatprep.subr.bf16.mxu0 0
        %1589 = vmatpush2.bf16.msra.mxu0 0
        %1590 = vmatprep.subr.bf16.mxu0 0
        %1591 = vmatpush2.bf16.msra.mxu0 0
        %1592 = vmatprep.subr.bf16.mxu0 0
        %1593 = vmatpush2.bf16.msra.mxu0 0
        %1594 = vmatprep.subr.bf16.mxu0 0
        %1595 = vmatpush2.bf16.msra.mxu0 0
        %1596 = vmatprep.mubr.bf16.mxu0 0
        %1597 = vmatmul.mubr.bf16.gmra.mxu0 %v1559
        %v1598 = vpop.f32.mrf.mxu0
        %v1599 = vadd.f32 0.0, %v1598
        %v1600 = vpop.f32.mrf.mxu0
        %v1601 = vpop.f32.mrf.mxu0
        %v1602 = vpop.f32.mrf.mxu0
        %1603 = vdwg.mxu0
        %v1605 = vsel %vm1272, %v1379, 0
        %v1608 = vsel %vm1276, %v1380, 0
        %1610 = vmatprep.subr.bf16.mxu0 0
        %1611 = vmatpush1.bf16.msra.mxu0 0
        %1612 = vmatprep.subr.bf16.mxu0 0
        %1613 = vmatpush1.bf16.msra.mxu0 0
        %1614 = vmatprep.subr.bf16.mxu0 0
        %1615 = vmatpush1.bf16.msra.mxu0 0
        %1616 = vmatprep.subr.bf16.mxu0 0
        %1617 = vmatpush1.bf16.msra.mxu0 0
        %1618 = vmatprep.subr.bf16.mxu0 0
        %1619 = vmatpush1.bf16.msra.mxu0 0
        %1620 = vmatprep.subr.bf16.mxu0 0
        %1621 = vmatpush1.bf16.msra.mxu0 0
        %1622 = vmatprep.subr.bf16.mxu0 0
        %1623 = vmatpush1.bf16.msra.mxu0 0
        %1624 = vmatprep.subr.bf16.mxu0 0
        %1625 = vmatpush1.bf16.msra.mxu0 %v1608
        %1626 = vmatprep.subr.bf16.mxu0 0
        %1627 = vmatpush2.bf16.msra.mxu0 0
        %1628 = vmatprep.subr.bf16.mxu0 0
        %1629 = vmatpush2.bf16.msra.mxu0 0
        %1630 = vmatprep.subr.bf16.mxu0 0
        %1631 = vmatpush2.bf16.msra.mxu0 0
        %1632 = vmatprep.subr.bf16.mxu0 0
        %1633 = vmatpush2.bf16.msra.mxu0 0
        %1634 = vmatprep.subr.bf16.mxu0 0
        %1635 = vmatpush2.bf16.msra.mxu0 0
        %1636 = vmatprep.subr.bf16.mxu0 0
        %1637 = vmatpush2.bf16.msra.mxu0 0
        %1638 = vmatprep.subr.bf16.mxu0 0
        %1639 = vmatpush2.bf16.msra.mxu0 0
        %1640 = vmatprep.subr.bf16.mxu0 0
        %1641 = vmatpush2.bf16.msra.mxu0 0
        %1642 = vmatprep.mubr.bf16.mxu0 0
        %1643 = vmatmul.mubr.bf16.gmra.mxu0 %v1605
        %v1644 = vpop.f32.mrf.mxu0
        %v1645 = vadd.f32 %v1599, %v1644
        %v1646 = vpop.f32.mrf.mxu0
        %v1647 = vpop.f32.mrf.mxu0
        %v1648 = vpop.f32.mrf.mxu0
        %1649 = vdwg.mxu0
        %s1650 = scalar_lea.vmem %s5, 32
        %v1651 = vld [vmem:[%s1650] sm:$0xf]
        %v1652 = vld [vmem:[%s1650 + $0x4] sm:$0xf]
        %v1653 = vld [vmem:[%s1650 + $0x8] sm:$0xf]
        %v1654 = vld [vmem:[%s1650 + $0xc] sm:$0xf]
        %s1655 = scalar_lea.vmem %s6, 2
        %v1656 = vld [vmem:[%s1655] sm:$0x1]
        %v1658 = vlaneseq
        %v1659 = vshrl.u32 %v1658, 7
        %v1660 = vsub.s32 0, %v1659
        %v1661 = vrot.slane %v1656, %v1660
        %v1667 = vunpack.c.l.b16 %v1651
        %v1668 = vunpack.c.l.b16 %v1652
        %v1669 = vunpack.c.l.b16 %v1653
        %v1670 = vunpack.c.l.b16 %v1654
        %v1671 = vpack.c.b16 %v1668, %v1667
        %v1672 = vpack.c.b16 %v1670, %v1669
        %1675 = vmatprep.subr.bf16.mxu0 0
        %1676 = vmatpush1.bf16.msra.mxu0 0
        %1677 = vmatprep.subr.bf16.mxu0 0
        %1678 = vmatpush1.bf16.msra.mxu0 0
        %1679 = vmatprep.subr.bf16.mxu0 0
        %1680 = vmatpush1.bf16.msra.mxu0 0
        %1681 = vmatprep.subr.bf16.mxu0 0
        %1682 = vmatpush1.bf16.msra.mxu0 0
        %1683 = vmatprep.subr.bf16.mxu0 0
        %1684 = vmatpush1.bf16.msra.mxu0 0
        %1685 = vmatprep.subr.bf16.mxu0 0
        %1686 = vmatpush1.bf16.msra.mxu0 0
        %1687 = vmatprep.subr.bf16.mxu0 0
        %1688 = vmatpush1.bf16.msra.mxu0 %v1672
        %1689 = vmatprep.subr.bf16.mxu0 0
        %1690 = vmatpush1.bf16.msra.mxu0 %v1671
        %1691 = vmatprep.subr.bf16.mxu0 0
        %1692 = vmatpush2.bf16.msra.mxu0 0
        %1693 = vmatprep.subr.bf16.mxu0 0
        %1694 = vmatpush2.bf16.msra.mxu0 0
        %1695 = vmatprep.subr.bf16.mxu0 0
        %1696 = vmatpush2.bf16.msra.mxu0 0
        %1697 = vmatprep.subr.bf16.mxu0 0
        %1698 = vmatpush2.bf16.msra.mxu0 0
        %1699 = vmatprep.subr.bf16.mxu0 0
        %1700 = vmatpush2.bf16.msra.mxu0 0
        %1701 = vmatprep.subr.bf16.mxu0 0
        %1702 = vmatpush2.bf16.msra.mxu0 0
        %1703 = vmatprep.subr.bf16.mxu0 0
        %1704 = vmatpush2.bf16.msra.mxu0 0
        %1705 = vmatprep.subr.bf16.mxu0 0
        %1706 = vmatpush2.bf16.msra.mxu0 0
        %1707 = vmatprep.mubr.bf16.mxu0 0
        %1708 = vmatmul.mubr.bf16.gmra.mxu0 %v1224
        %v1709 = vpop.f32.mrf.mxu0
        %v1710 = vadd.f32 %v1661, %v1709
        %v1711 = vpop.f32.mrf.mxu0
        %v1712 = vpop.f32.mrf.mxu0
        %v1713 = vpop.f32.mrf.mxu0
        %1714 = vdwg.mxu0
        %v1715 = vpack.c.bf16 %v1710, %v1710
        %s1716 = scalar_lea.vmem [#allocation2], 8
        %v1717 = vld [vmem:[%s1716] sm:$0xf]
        %v1719 = vsel %vm1272, %v1715, 0
        %v1722 = vsel %vm1276, %v1717, 0
        %1724 = vmatprep.subr.bf16.mxu0 0
        %1725 = vmatpush1.bf16.msra.mxu0 0
        %1726 = vmatprep.subr.bf16.mxu0 0
        %1727 = vmatpush1.bf16.msra.mxu0 0
        %1728 = vmatprep.subr.bf16.mxu0 0
        %1729 = vmatpush1.bf16.msra.mxu0 0
        %1730 = vmatprep.subr.bf16.mxu0 0
        %1731 = vmatpush1.bf16.msra.mxu0 0
        %1732 = vmatprep.subr.bf16.mxu0 0
        %1733 = vmatpush1.bf16.msra.mxu0 0
        %1734 = vmatprep.subr.bf16.mxu0 0
        %1735 = vmatpush1.bf16.msra.mxu0 0
        %1736 = vmatprep.subr.bf16.mxu0 0
        %1737 = vmatpush1.bf16.msra.mxu0 0
        %1738 = vmatprep.subr.bf16.mxu0 0
        %1739 = vmatpush1.bf16.msra.mxu0 %v1722
        %1740 = vmatprep.subr.bf16.mxu0 0
        %1741 = vmatpush2.bf16.msra.mxu0 0
        %1742 = vmatprep.subr.bf16.mxu0 0
        %1743 = vmatpush2.bf16.msra.mxu0 0
        %1744 = vmatprep.subr.bf16.mxu0 0
        %1745 = vmatpush2.bf16.msra.mxu0 0
        %1746 = vmatprep.subr.bf16.mxu0 0
        %1747 = vmatpush2.bf16.msra.mxu0 0
        %1748 = vmatprep.subr.bf16.mxu0 0
        %1749 = vmatpush2.bf16.msra.mxu0 0
        %1750 = vmatprep.subr.bf16.mxu0 0
        %1751 = vmatpush2.bf16.msra.mxu0 0
        %1752 = vmatprep.subr.bf16.mxu0 0
        %1753 = vmatpush2.bf16.msra.mxu0 0
        %1754 = vmatprep.subr.bf16.mxu0 0
        %1755 = vmatpush2.bf16.msra.mxu0 0
        %1756 = vmatprep.mubr.bf16.mxu0 0
        %1757 = vmatmul.mubr.bf16.gmra.mxu0 %v1719
        %v1758 = vpop.f32.mrf.mxu0
        %v1759 = vadd.f32 %v1271, %v1758
        %v1760 = vpop.f32.mrf.mxu0
        %v1761 = vpop.f32.mrf.mxu0
        %v1762 = vpop.f32.mrf.mxu0
        %1763 = vdwg.mxu0
        %v1764 = vsel %vm1272, %v1759, -inf
        %1765 = vmax.xlane.f32.xlu0 %v1764
        %v1766 = vpop.xlane.xlu0 %1765
        %v1767 = vsub.f32 %v1759, %v1766
        %v1768 = vmul.f32 %v1767, 1.442695
        %v1769 = vpow.pop %v1768
        %v1770 = vsel %vm1272, %v1769, 0.0
        %1771 = vadd.xlane.f32.xlu0 %v1770
        %v1772 = vpop.xlane.xlu0 %1771
        %v1773 = vrcp.pop %v1772
        %v1774 = vpack.c.bf16 %v1769, %v1769
        %s1775 = scalar_lea.vmem [#allocation3], 8
        %v1776 = vld [vmem:[%s1775] sm:$0xf]
        %v1778 = vsel %vm1272, %v1774, 0
        %v1781 = vsel %vm1276, %v1776, 0
        %1783 = vmatprep.subr.bf16.mxu0 0
        %1784 = vmatpush1.bf16.msra.mxu0 0
        %1785 = vmatprep.subr.bf16.mxu0 0
        %1786 = vmatpush1.bf16.msra.mxu0 0
        %1787 = vmatprep.subr.bf16.mxu0 0
        %1788 = vmatpush1.bf16.msra.mxu0 0
        %1789 = vmatprep.subr.bf16.mxu0 0
        %1790 = vmatpush1.bf16.msra.mxu0 0
        %1791 = vmatprep.subr.bf16.mxu0 0
        %1792 = vmatpush1.bf16.msra.mxu0 0
        %1793 = vmatprep.subr.bf16.mxu0 0
        %1794 = vmatpush1.bf16.msra.mxu0 0
        %1795 = vmatprep.subr.bf16.mxu0 0
        %1796 = vmatpush1.bf16.msra.mxu0 0
        %1797 = vmatprep.subr.bf16.mxu0 0
        %1798 = vmatpush1.bf16.msra.mxu0 %v1781
        %1799 = vmatprep.subr.bf16.mxu0 0
        %1800 = vmatpush2.bf16.msra.mxu0 0
        %1801 = vmatprep.subr.bf16.mxu0 0
        %1802 = vmatpush2.bf16.msra.mxu0 0
        %1803 = vmatprep.subr.bf16.mxu0 0
        %1804 = vmatpush2.bf16.msra.mxu0 0
        %1805 = vmatprep.subr.bf16.mxu0 0
        %1806 = vmatpush2.bf16.msra.mxu0 0
        %1807 = vmatprep.subr.bf16.mxu0 0
        %1808 = vmatpush2.bf16.msra.mxu0 0
        %1809 = vmatprep.subr.bf16.mxu0 0
        %1810 = vmatpush2.bf16.msra.mxu0 0
        %1811 = vmatprep.subr.bf16.mxu0 0
        %1812 = vmatpush2.bf16.msra.mxu0 0
        %1813 = vmatprep.subr.bf16.mxu0 0
        %1814 = vmatpush2.bf16.msra.mxu0 0
        %1815 = vmatprep.mubr.bf16.mxu0 0
        %1816 = vmatmul.mubr.bf16.gmra.mxu0 %v1778
        %v1817 = vpop.f32.mrf.mxu0
        %v1818 = vadd.f32 0.0, %v1817
        %v1819 = vpop.f32.mrf.mxu0
        %v1820 = vpop.f32.mrf.mxu0
        %v1821 = vpop.f32.mrf.mxu0
        %1822 = vdwg.mxu0
        %v1823 = vmul.f32 %v1818, %v1773
        %v1824 = vpack.c.bf16 %v1823, %v1823
        %s1825 = scalar_lea.vmem %s11, 8
        %v1826 = vld [vmem:[%s1825] sm:$0xf]
        %v1828 = vsel %vm1272, %v1824, 0
        %v1831 = vsel %vm1276, %v1826, 0
        %1833 = vmatprep.subr.bf16.mxu0 0
        %1834 = vmatpush1.bf16.msra.mxu0 0
        %1835 = vmatprep.subr.bf16.mxu0 0
        %1836 = vmatpush1.bf16.msra.mxu0 0
        %1837 = vmatprep.subr.bf16.mxu0 0
        %1838 = vmatpush1.bf16.msra.mxu0 0
        %1839 = vmatprep.subr.bf16.mxu0 0
        %1840 = vmatpush1.bf16.msra.mxu0 0
        %1841 = vmatprep.subr.bf16.mxu0 0
        %1842 = vmatpush1.bf16.msra.mxu0 0
        %1843 = vmatprep.subr.bf16.mxu0 0
        %1844 = vmatpush1.bf16.msra.mxu0 0
        %1845 = vmatprep.subr.bf16.mxu0 0
        %1846 = vmatpush1.bf16.msra.mxu0 0
        %1847 = vmatprep.subr.bf16.mxu0 0
        %1848 = vmatpush1.bf16.msra.mxu0 %v1831
        %1849 = vmatprep.subr.bf16.mxu0 0
        %1850 = vmatpush2.bf16.msra.mxu0 0
        %1851 = vmatprep.subr.bf16.mxu0 0
        %1852 = vmatpush2.bf16.msra.mxu0 0
        %1853 = vmatprep.subr.bf16.mxu0 0
        %1854 = vmatpush2.bf16.msra.mxu0 0
        %1855 = vmatprep.subr.bf16.mxu0 0
        %1856 = vmatpush2.bf16.msra.mxu0 0
        %1857 = vmatprep.subr.bf16.mxu0 0
        %1858 = vmatpush2.bf16.msra.mxu0 0
        %1859 = vmatprep.subr.bf16.mxu0 0
        %1860 = vmatpush2.bf16.msra.mxu0 0
        %1861 = vmatprep.subr.bf16.mxu0 0
        %1862 = vmatpush2.bf16.msra.mxu0 0
        %1863 = vmatprep.subr.bf16.mxu0 0
        %1864 = vmatpush2.bf16.msra.mxu0 0
        %1865 = vmatprep.mubr.bf16.mxu0 0
        %1866 = vmatmul.mubr.bf16.gmra.mxu0 %v1828
        %v1867 = vpop.f32.mrf.mxu0
        %v1868 = vadd.f32 0.0, %v1867
        %v1869 = vpop.f32.mrf.mxu0
        %v1870 = vpop.f32.mrf.mxu0
        %v1871 = vpop.f32.mrf.mxu0
        %1872 = vdwg.mxu0
        %v1873 = vadd.f32 %v1645, %v1868
        %s1874 = scalar_lea.vmem %s5, 48
        %v1875 = vld [vmem:[%s1874] sm:$0xf]
        %v1876 = vld [vmem:[%s1874 + $0x4] sm:$0xf]
        %v1877 = vld [vmem:[%s1874 + $0x8] sm:$0xf]
        %v1878 = vld [vmem:[%s1874 + $0xc] sm:$0xf]
        %s1879 = scalar_lea.vmem %s6, 3
        %v1880 = vld [vmem:[%s1879] sm:$0x1]
        %v1882 = vlaneseq
        %v1883 = vshrl.u32 %v1882, 7
        %v1884 = vsub.s32 0, %v1883
        %v1885 = vrot.slane %v1880, %v1884
        %v1891 = vunpack.c.l.b16 %v1875
        %v1892 = vunpack.c.l.b16 %v1876
        %v1893 = vunpack.c.l.b16 %v1877
        %v1894 = vunpack.c.l.b16 %v1878
        %v1895 = vpack.c.b16 %v1892, %v1891
        %v1896 = vpack.c.b16 %v1894, %v1893
        %1899 = vmatprep.subr.bf16.mxu0 0
        %1900 = vmatpush1.bf16.msra.mxu0 0
        %1901 = vmatprep.subr.bf16.mxu0 0
        %1902 = vmatpush1.bf16.msra.mxu0 0
        %1903 = vmatprep.subr.bf16.mxu0 0
        %1904 = vmatpush1.bf16.msra.mxu0 0
        %1905 = vmatprep.subr.bf16.mxu0 0
        %1906 = vmatpush1.bf16.msra.mxu0 0
        %1907 = vmatprep.subr.bf16.mxu0 0
        %1908 = vmatpush1.bf16.msra.mxu0 0
        %1909 = vmatprep.subr.bf16.mxu0 0
        %1910 = vmatpush1.bf16.msra.mxu0 0
        %1911 = vmatprep.subr.bf16.mxu0 0
        %1912 = vmatpush1.bf16.msra.mxu0 %v1896
        %1913 = vmatprep.subr.bf16.mxu0 0
        %1914 = vmatpush1.bf16.msra.mxu0 %v1895
        %1915 = vmatprep.subr.bf16.mxu0 0
        %1916 = vmatpush2.bf16.msra.mxu0 0
        %1917 = vmatprep.subr.bf16.mxu0 0
        %1918 = vmatpush2.bf16.msra.mxu0 0
        %1919 = vmatprep.subr.bf16.mxu0 0
        %1920 = vmatpush2.bf16.msra.mxu0 0
        %1921 = vmatprep.subr.bf16.mxu0 0
        %1922 = vmatpush2.bf16.msra.mxu0 0
        %1923 = vmatprep.subr.bf16.mxu0 0
        %1924 = vmatpush2.bf16.msra.mxu0 0
        %1925 = vmatprep.subr.bf16.mxu0 0
        %1926 = vmatpush2.bf16.msra.mxu0 0
        %1927 = vmatprep.subr.bf16.mxu0 0
        %1928 = vmatpush2.bf16.msra.mxu0 0
        %1929 = vmatprep.subr.bf16.mxu0 0
        %1930 = vmatpush2.bf16.msra.mxu0 0
        %1931 = vmatprep.mubr.bf16.mxu0 0
        %1932 = vmatmul.mubr.bf16.gmra.mxu0 %v1224
        %v1933 = vpop.f32.mrf.mxu0
        %v1934 = vadd.f32 %v1885, %v1933
        %v1935 = vpop.f32.mrf.mxu0
        %v1936 = vpop.f32.mrf.mxu0
        %v1937 = vpop.f32.mrf.mxu0
        %1938 = vdwg.mxu0
        %v1939 = vpack.c.bf16 %v1934, %v1934
        %s1940 = scalar_lea.vmem [#allocation2], 12
        %v1941 = vld [vmem:[%s1940] sm:$0xf]
        %v1943 = vsel %vm1272, %v1939, 0
        %v1946 = vsel %vm1276, %v1941, 0
        %1948 = vmatprep.subr.bf16.mxu0 0
        %1949 = vmatpush1.bf16.msra.mxu0 0
        %1950 = vmatprep.subr.bf16.mxu0 0
        %1951 = vmatpush1.bf16.msra.mxu0 0
        %1952 = vmatprep.subr.bf16.mxu0 0
        %1953 = vmatpush1.bf16.msra.mxu0 0
        %1954 = vmatprep.subr.bf16.mxu0 0
        %1955 = vmatpush1.bf16.msra.mxu0 0
        %1956 = vmatprep.subr.bf16.mxu0 0
        %1957 = vmatpush1.bf16.msra.mxu0 0
        %1958 = vmatprep.subr.bf16.mxu0 0
        %1959 = vmatpush1.bf16.msra.mxu0 0
        %1960 = vmatprep.subr.bf16.mxu0 0
        %1961 = vmatpush1.bf16.msra.mxu0 0
        %1962 = vmatprep.subr.bf16.mxu0 0
        %1963 = vmatpush1.bf16.msra.mxu0 %v1946
        %1964 = vmatprep.subr.bf16.mxu0 0
        %1965 = vmatpush2.bf16.msra.mxu0 0
        %1966 = vmatprep.subr.bf16.mxu0 0
        %1967 = vmatpush2.bf16.msra.mxu0 0
        %1968 = vmatprep.subr.bf16.mxu0 0
        %1969 = vmatpush2.bf16.msra.mxu0 0
        %1970 = vmatprep.subr.bf16.mxu0 0
        %1971 = vmatpush2.bf16.msra.mxu0 0
        %1972 = vmatprep.subr.bf16.mxu0 0
        %1973 = vmatpush2.bf16.msra.mxu0 0
        %1974 = vmatprep.subr.bf16.mxu0 0
        %1975 = vmatpush2.bf16.msra.mxu0 0
        %1976 = vmatprep.subr.bf16.mxu0 0
        %1977 = vmatpush2.bf16.msra.mxu0 0
        %1978 = vmatprep.subr.bf16.mxu0 0
        %1979 = vmatpush2.bf16.msra.mxu0 0
        %1980 = vmatprep.mubr.bf16.mxu0 0
        %1981 = vmatmul.mubr.bf16.gmra.mxu0 %v1943
        %v1982 = vpop.f32.mrf.mxu0
        %v1983 = vadd.f32 %v1271, %v1982
        %v1984 = vpop.f32.mrf.mxu0
        %v1985 = vpop.f32.mrf.mxu0
        %v1986 = vpop.f32.mrf.mxu0
        %1987 = vdwg.mxu0
        %v1988 = vsel %vm1272, %v1983, -inf
        %1989 = vmax.xlane.f32.xlu0 %v1988
        %v1990 = vpop.xlane.xlu0 %1989
        %v1991 = vsub.f32 %v1983, %v1990
        %v1992 = vmul.f32 %v1991, 1.442695
        %v1993 = vpow.pop %v1992
        %v1994 = vsel %vm1272, %v1993, 0.0
        %1995 = vadd.xlane.f32.xlu0 %v1994
        %v1996 = vpop.xlane.xlu0 %1995
        %v1997 = vrcp.pop %v1996
        %v1998 = vpack.c.bf16 %v1993, %v1993
        %s1999 = scalar_lea.vmem [#allocation3], 12
        %v2000 = vld [vmem:[%s1999] sm:$0xf]
        %v2002 = vsel %vm1272, %v1998, 0
        %v2005 = vsel %vm1276, %v2000, 0
        %2007 = vmatprep.subr.bf16.mxu0 0
        %2008 = vmatpush1.bf16.msra.mxu0 0
        %2009 = vmatprep.subr.bf16.mxu0 0
        %2010 = vmatpush1.bf16.msra.mxu0 0
        %2011 = vmatprep.subr.bf16.mxu0 0
        %2012 = vmatpush1.bf16.msra.mxu0 0
        %2013 = vmatprep.subr.bf16.mxu0 0
        %2014 = vmatpush1.bf16.msra.mxu0 0
        %2015 = vmatprep.subr.bf16.mxu0 0
        %2016 = vmatpush1.bf16.msra.mxu0 0
        %2017 = vmatprep.subr.bf16.mxu0 0
        %2018 = vmatpush1.bf16.msra.mxu0 0
        %2019 = vmatprep.subr.bf16.mxu0 0
        %2020 = vmatpush1.bf16.msra.mxu0 0
        %2021 = vmatprep.subr.bf16.mxu0 0
        %2022 = vmatpush1.bf16.msra.mxu0 %v2005
        %2023 = vmatprep.subr.bf16.mxu0 0
        %2024 = vmatpush2.bf16.msra.mxu0 0
        %2025 = vmatprep.subr.bf16.mxu0 0
        %2026 = vmatpush2.bf16.msra.mxu0 0
        %2027 = vmatprep.subr.bf16.mxu0 0
        %2028 = vmatpush2.bf16.msra.mxu0 0
        %2029 = vmatprep.subr.bf16.mxu0 0
        %2030 = vmatpush2.bf16.msra.mxu0 0
        %2031 = vmatprep.subr.bf16.mxu0 0
        %2032 = vmatpush2.bf16.msra.mxu0 0
        %2033 = vmatprep.subr.bf16.mxu0 0
        %2034 = vmatpush2.bf16.msra.mxu0 0
        %2035 = vmatprep.subr.bf16.mxu0 0
        %2036 = vmatpush2.bf16.msra.mxu0 0
        %2037 = vmatprep.subr.bf16.mxu0 0
        %2038 = vmatpush2.bf16.msra.mxu0 0
        %2039 = vmatprep.mubr.bf16.mxu0 0
        %2040 = vmatmul.mubr.bf16.gmra.mxu0 %v2002
        %v2041 = vpop.f32.mrf.mxu0
        %v2042 = vadd.f32 0.0, %v2041
        %v2043 = vpop.f32.mrf.mxu0
        %v2044 = vpop.f32.mrf.mxu0
        %v2045 = vpop.f32.mrf.mxu0
        %2046 = vdwg.mxu0
        %v2047 = vmul.f32 %v2042, %v1997
        %v2048 = vpack.c.bf16 %v2047, %v2047
        %s2049 = scalar_lea.vmem %s11, 12
        %v2050 = vld [vmem:[%s2049] sm:$0xf]
        %v2052 = vsel %vm1272, %v2048, 0
        %v2055 = vsel %vm1276, %v2050, 0
        %2057 = vmatprep.subr.bf16.mxu0 0
        %2058 = vmatpush1.bf16.msra.mxu0 0
        %2059 = vmatprep.subr.bf16.mxu0 0
        %2060 = vmatpush1.bf16.msra.mxu0 0
        %2061 = vmatprep.subr.bf16.mxu0 0
        %2062 = vmatpush1.bf16.msra.mxu0 0
        %2063 = vmatprep.subr.bf16.mxu0 0
        %2064 = vmatpush1.bf16.msra.mxu0 0
        %2065 = vmatprep.subr.bf16.mxu0 0
        %2066 = vmatpush1.bf16.msra.mxu0 0
        %2067 = vmatprep.subr.bf16.mxu0 0
        %2068 = vmatpush1.bf16.msra.mxu0 0
        %2069 = vmatprep.subr.bf16.mxu0 0
        %2070 = vmatpush1.bf16.msra.mxu0 0
        %2071 = vmatprep.subr.bf16.mxu0 0
        %2072 = vmatpush1.bf16.msra.mxu0 %v2055
        %2073 = vmatprep.subr.bf16.mxu0 0
        %2074 = vmatpush2.bf16.msra.mxu0 0
        %2075 = vmatprep.subr.bf16.mxu0 0
        %2076 = vmatpush2.bf16.msra.mxu0 0
        %2077 = vmatprep.subr.bf16.mxu0 0
        %2078 = vmatpush2.bf16.msra.mxu0 0
        %2079 = vmatprep.subr.bf16.mxu0 0
        %2080 = vmatpush2.bf16.msra.mxu0 0
        %2081 = vmatprep.subr.bf16.mxu0 0
        %2082 = vmatpush2.bf16.msra.mxu0 0
        %2083 = vmatprep.subr.bf16.mxu0 0
        %2084 = vmatpush2.bf16.msra.mxu0 0
        %2085 = vmatprep.subr.bf16.mxu0 0
        %2086 = vmatpush2.bf16.msra.mxu0 0
        %2087 = vmatprep.subr.bf16.mxu0 0
        %2088 = vmatpush2.bf16.msra.mxu0 0
        %2089 = vmatprep.mubr.bf16.mxu0 0
        %2090 = vmatmul.mubr.bf16.gmra.mxu0 %v2052
        %v2091 = vpop.f32.mrf.mxu0
        %v2092 = vadd.f32 0.0, %v2091
        %v2093 = vpop.f32.mrf.mxu0
        %v2094 = vpop.f32.mrf.mxu0
        %v2095 = vpop.f32.mrf.mxu0
        %2096 = vdwg.mxu0
        %v2097 = vadd.f32 %v1873, %v2092
        %v2098 = vadd.f32 %v1163, %v2097
        %v2099 = vld [vmem:[%s12] sm:$0x1]
        %v2101 = vlaneseq
        %v2102 = vshrl.u32 %v2101, 7
        %v2103 = vsub.s32 0, %v2102
        %v2104 = vrot.slane %v2099, %v2103
        %v2106 = vadd.f32 %v2098, %v2104
        %v2107 = vld [vmem:[%s13] sm:$0x1]
        %v2108 = vld [vmem:[%s14] sm:$0x1]
        %v2109 = vsel %vm1168, %v2106, 0.0
        %2110 = vadd.xlane.f32.xlu0 %v2109
        %v2111 = vpop.xlane.xlu0 %2110
        %v2112 = vmul.f32 %v2111, %v1172
        %v2113 = vmul.f32 %v2106, %v2106
        %v2114 = vsel %vm1168, %v2113, 0.0
        %2115 = vadd.xlane.f32.xlu0 %v2114
        %v2116 = vpop.xlane.xlu0 %2115
        %v2117 = vmul.f32 %v2116, %v1172
        %v2118 = vmul.f32 %v2112, %v2112
        %v2119 = vsub.f32 %v2117, %v2118
        %v2120 = vsub.f32 %v2106, %v2112
        %v2121 = vadd.f32 %v2119, 1e-05
        %v2122 = vrsqrt.pop %v2121
        %v2123 = vmul.f32 %v2120, %v2122
        %v2125 = vlaneseq
        %v2126 = vshrl.u32 %v2125, 7
        %v2127 = vsub.s32 0, %v2126
        %v2128 = vrot.slane %v2107, %v2127
        %v2130 = vmul.f32 %v2123, %v2128
        %v2132 = vlaneseq
        %v2133 = vshrl.u32 %v2132, 7
        %v2134 = vsub.s32 0, %v2133
        %v2135 = vrot.slane %v2108, %v2134
        %v2137 = vadd.f32 %v2130, %v2135
        %v2138 = vpack.c.bf16 %v2137, %v2137
        %v2139 = vld [vmem:[%s15] sm:$0xf]
        %v2140 = vld [vmem:[%s15 + $0x4] sm:$0xf]
        %v2141 = vld [vmem:[%s15 + $0x8] sm:$0xf]
        %v2142 = vld [vmem:[%s15 + $0xc] sm:$0xf]
        %v2143 = vld [vmem:[%s16] sm:$0x1]
        %v2145 = vlaneseq
        %v2146 = vshrl.u32 %v2145, 7
        %v2147 = vsub.s32 0, %v2146
        %v2148 = vrot.slane %v2143, %v2147
        %v2154 = vunpack.c.l.b16 %v2139
        %v2155 = vunpack.c.l.b16 %v2140
        %v2156 = vunpack.c.l.b16 %v2141
        %v2157 = vunpack.c.l.b16 %v2142
        %v2158 = vpack.c.b16 %v2155, %v2154
        %v2159 = vpack.c.b16 %v2157, %v2156
        %v2163 = vsel %vm1168, %v2138, 0
        %2165 = vmatprep.subr.bf16.mxu0 0
        %2166 = vmatpush1.bf16.msra.mxu0 0
        %2167 = vmatprep.subr.bf16.mxu0 0
        %2168 = vmatpush1.bf16.msra.mxu0 0
        %2169 = vmatprep.subr.bf16.mxu0 0
        %2170 = vmatpush1.bf16.msra.mxu0 0
        %2171 = vmatprep.subr.bf16.mxu0 0
        %2172 = vmatpush1.bf16.msra.mxu0 0
        %2173 = vmatprep.subr.bf16.mxu0 0
        %2174 = vmatpush1.bf16.msra.mxu0 0
        %2175 = vmatprep.subr.bf16.mxu0 0
        %2176 = vmatpush1.bf16.msra.mxu0 0
        %2177 = vmatprep.subr.bf16.mxu0 0
        %2178 = vmatpush1.bf16.msra.mxu0 %v2159
        %2179 = vmatprep.subr.bf16.mxu0 0
        %2180 = vmatpush1.bf16.msra.mxu0 %v2158
        %2181 = vmatprep.subr.bf16.mxu0 0
        %2182 = vmatpush2.bf16.msra.mxu0 0
        %2183 = vmatprep.subr.bf16.mxu0 0
        %2184 = vmatpush2.bf16.msra.mxu0 0
        %2185 = vmatprep.subr.bf16.mxu0 0
        %2186 = vmatpush2.bf16.msra.mxu0 0
        %2187 = vmatprep.subr.bf16.mxu0 0
        %2188 = vmatpush2.bf16.msra.mxu0 0
        %2189 = vmatprep.subr.bf16.mxu0 0
        %2190 = vmatpush2.bf16.msra.mxu0 0
        %2191 = vmatprep.subr.bf16.mxu0 0
        %2192 = vmatpush2.bf16.msra.mxu0 0
        %2193 = vmatprep.subr.bf16.mxu0 0
        %2194 = vmatpush2.bf16.msra.mxu0 0
        %2195 = vmatprep.subr.bf16.mxu0 0
        %2196 = vmatpush2.bf16.msra.mxu0 0
        %2197 = vmatprep.mubr.bf16.mxu0 0
        %2198 = vmatmul.mubr.bf16.gmra.mxu0 %v2163
        %v2199 = vpop.f32.mrf.mxu0
        %v2200 = vadd.f32 %v2148, %v2199
        %v2201 = vpop.f32.mrf.mxu0
        %v2202 = vpop.f32.mrf.mxu0
        %v2203 = vpop.f32.mrf.mxu0
        %2204 = vdwg.mxu0
        %v2205 = vmax.f32 %v2200, 0.0
        %v2206 = vpack.c.bf16 %v2205, %v2205
        %v2207 = vld [vmem:[%s17] sm:$0xf]
        %v2208 = vld [vmem:[%s17 + $0x4] sm:$0xf]
        %v2209 = vld [vmem:[%s17 + $0x8] sm:$0xf]
        %v2210 = vld [vmem:[%s17 + $0xc] sm:$0xf]
        %v2211 = vld [vmem:[%s17 + $0x10] sm:$0xf]
        %v2212 = vld [vmem:[%s17 + $0x14] sm:$0xf]
        %v2213 = vld [vmem:[%s17 + $0x18] sm:$0xf]
        %v2214 = vld [vmem:[%s17 + $0x1c] sm:$0xf]
        %v2215 = vld [vmem:[%s18] sm:$0x1]
        %v2217 = vlaneseq
        %v2218 = vshrl.u32 %v2217, 7
        %v2219 = vsub.s32 0, %v2218
        %v2220 = vrot.slane %v2215, %v2219
        %v2230 = vunpack.c.l.b16 %v2207
        %v2231 = vunpack.c.l.b16 %v2208
        %v2232 = vunpack.c.l.b16 %v2209
        %v2233 = vunpack.c.l.b16 %v2210
        %v2234 = vunpack.c.l.b16 %v2211
        %v2235 = vunpack.c.l.b16 %v2212
        %v2236 = vunpack.c.l.b16 %v2213
        %v2237 = vunpack.c.l.b16 %v2214
        %v2238 = vpack.c.b16 %v2231, %v2230
        %v2239 = vpack.c.b16 %v2233, %v2232
        %v2240 = vpack.c.b16 %v2235, %v2234
        %v2241 = vpack.c.b16 %v2237, %v2236
        %vm2246 = vcmask 523264
        %v2248 = vsel %vm2246, %v2206, 0
        %2250 = vmatprep.subr.bf16.mxu0 0
        %2251 = vmatpush1.bf16.msra.mxu0 0
        %2252 = vmatprep.subr.bf16.mxu0 0
        %2253 = vmatpush1.bf16.msra.mxu0 0
        %2254 = vmatprep.subr.bf16.mxu0 0
        %2255 = vmatpush1.bf16.msra.mxu0 0
        %2256 = vmatprep.subr.bf16.mxu0 0
        %2257 = vmatpush1.bf16.msra.mxu0 0
        %2258 = vmatprep.subr.bf16.mxu0 0
        %2259 = vmatpush1.bf16.msra.mxu0 %v2241
        %2260 = vmatprep.subr.bf16.mxu0 0
        %2261 = vmatpush1.bf16.msra.mxu0 %v2240
        %2262 = vmatprep.subr.bf16.mxu0 0
        %2263 = vmatpush1.bf16.msra.mxu0 %v2239
        %2264 = vmatprep.subr.bf16.mxu0 0
        %2265 = vmatpush1.bf16.msra.mxu0 %v2238
        %2266 = vmatprep.subr.bf16.mxu0 0
        %2267 = vmatpush2.bf16.msra.mxu0 0
        %2268 = vmatprep.subr.bf16.mxu0 0
        %2269 = vmatpush2.bf16.msra.mxu0 0
        %2270 = vmatprep.subr.bf16.mxu0 0
        %2271 = vmatpush2.bf16.msra.mxu0 0
        %2272 = vmatprep.subr.bf16.mxu0 0
        %2273 = vmatpush2.bf16.msra.mxu0 0
        %2274 = vmatprep.subr.bf16.mxu0 0
        %2275 = vmatpush2.bf16.msra.mxu0 0
        %2276 = vmatprep.subr.bf16.mxu0 0
        %2277 = vmatpush2.bf16.msra.mxu0 0
        %2278 = vmatprep.subr.bf16.mxu0 0
        %2279 = vmatpush2.bf16.msra.mxu0 0
        %2280 = vmatprep.subr.bf16.mxu0 0
        %2281 = vmatpush2.bf16.msra.mxu0 0
        %2282 = vmatprep.mubr.bf16.mxu0 0
        %2283 = vmatmul.mubr.bf16.gmra.mxu0 %v2248
        %v2284 = vpop.f32.mrf.mxu0
        %v2285 = vadd.f32 %v2220, %v2284
        %v2286 = vpop.f32.mrf.mxu0
        %v2287 = vpop.f32.mrf.mxu0
        %v2288 = vpop.f32.mrf.mxu0
        %2289 = vdwg.mxu0
        %v2290 = vadd.f32 %v2106, %v2285
        %2291 = vst.msk [vmem:[%s658] sm:$0xff] %vm1168, %v2290
        %s2292 = sand.u32 %s474, 1
        %s2293 = scalar_lea.sflag [#allocation6], %s2292
        %s2294 = sand.u32 %s474, 1
        %s2295 = smul.addr %s2294, 8
        %s2296 = scalar_lea.vmem [#allocation7], %s2295
        // Predicated region
        $region105: #{tpu_custom_call.1} parent=95 // pred_check
          %p2297 = pneg %p484
        $region106: #{tpu_custom_call.1} parent=95 // pred_check_branch
          %2299 = sbr.rel (%p2297) target = $region108
        $region107: #{tpu_custom_call.1} parent=95 // pred_region
          %s2301 = ssub.s32 128, 128
          %2302 = vsyncadd %s2293, %s2301
          %s2303 = sadd.s32 %s41, %s40
          %s2304 = smul.addr %s2303, 128
          %s2305 = scalar_lea.hbm %s19, %s2304
          %s2307 = sshll.u32 %s2296, 4
          %s2308 = int_to_ptr.vmem [resolvable:$true] %s2307
          %2310 = dma.vmem_to_hbm [thread:$0]  %s2308, 128, %s2305, %s2293
        $region108: #{tpu_custom_call.1} parent=95 // pred_fallthru
          _
      $region96: #{tpu_custom_call.1} parent=5 // pred_fallthru
        _
      %p2311 = scmp.le.s32.totalorder 2, %s31
      // Predicated region
      $region109: #{tpu_custom_call.1} parent=5 // pred_check
        %p2312 = pneg %p2311
      $region110: #{tpu_custom_call.1} parent=5 // pred_check_branch
        %2314 = sbr.rel (%p2312) target = $region112
      $region111: #{tpu_custom_call.1} parent=5 // pred_region
        %s2315 = ssub.s32 %s31, 2
        // Predicated region
        $region113: #{tpu_custom_call.1} parent=111 // pred_check
          %p2316 = pneg %p490
        $region114: #{tpu_custom_call.1} parent=111 // pred_check_branch
          %2318 = sbr.rel (%p2316) target = $region116
        $region115: #{tpu_custom_call.1} parent=111 // pred_region
          %s2319 = sand.u32 %s475, 1
          %s2320 = scalar_lea.sflag [#allocation6], %s2319
          %s2321 = sand.u32 %s475, 1
          %s2322 = smul.addr %s2321, 8
          %s2323 = scalar_lea.vmem [#allocation7], %s2322
          %2324 = dma.done %s2320, 128
        $region116: #{tpu_custom_call.1} parent=111 // pred_fallthru
          _
      $region112: #{tpu_custom_call.1} parent=5 // pred_fallthru
        _
    $region6: #{tpu_custom_call.1} parent=1 // loop_footer
      %s35 = sadd.s32 1, %s31
    $region7: #{tpu_custom_call.1} parent=1 // loop_footer_branch
      %30 = sbr.rel target = $region3
    $region8: #{tpu_custom_call.1} parent=1 // loop_exit
      _
    %2325 = vsyncpa [#allocation5], 1
    %s2326 = scalar_lea.sflag [#allocation5], 1
    %2327 = vsyncpa %s2326, 1
    %2328 = vsyncpa [#allocation6], 1
    %s2329 = scalar_lea.sflag [#allocation6], 1
    %2330 = vsyncpa %s2329, 1

</llo_original>
